<compile_context>
chip_gen: v6e
topology: v6e:2x2x1
jax: 0.10.0
libtpu: 0.0.40
codegen_flags: <defaults>
</compile_context>

<pallas_src>
import functools
import math

import jax
import jax.numpy as jnp
from jax.experimental import pallas as pl
from jax.experimental.pallas import tpu as pltpu

# True layer sizes of Model500GELU(parameter_count=2, output_count=2)
TRUE_DIMS = [2, 200, 300, 500, 500, 300, 200, 2]
# Lane-aligned (128-multiple) padded sizes. Input width 2 is kept (layer 0 runs
# on the VPU); output padded to 128 for a lane-dense store and sliced later.
PAD_DIMS = [2, 256, 384, 512, 512, 384, 256, 128]
N_LAYERS = len(TRUE_DIMS) - 1  # 7 Linear layers


def _round_up(x, m):
    return (x + m - 1) // m * m


def _device_kind():
    try:
        return jax.devices()[0].device_kind.lower()
    except Exception:
        return ""


def _num_tensorcores(kind):
    # v4 / v5p / v7x have 2 TensorCores worth sharding the batch grid across.
    return 2 if any(t in kind for t in ("v4", "v5p", "v7")) else 1


def _use_bf16_elementwise(kind):
    # v6e / v7x have bf16 VALUs; keep f32 elementwise math on v5e / unknown.
    return any(t in kind for t in ("v6", "v7"))


def mlp_kernel(x_ref, *refs, elementwise_bf16):
    """refs = (w0, b0, w1, b1, ..., w6, b6, out_ref).

    w0/b0 are f32 (tiny, accuracy-critical); w1..w6 bf16; b1..b6 f32.
    """
    out_ref = refs[-1]
    p = refs[:-1]

    x = x_ref[...]                                   # (TB, 2) f32
    w0 = p[0][...]                                   # (2, 256) f32
    b0 = p[1][...]                                   # (1, 256) f32

    # Layer 0: K=2 degenerate matmul done on the VPU as broadcast multiply-adds
    # (keeps one MXU latency hop off the serial chain), all in f32.
    h = x[:, 0:1] * w0[0:1, :] + x[:, 1:2] * w0[1:2, :] + b0
    h = jnp.maximum(h, 0.0)

    # Layers 1..6: bf16 MXU matmuls (f32 accumulation inside the MXU).
    for i in range(1, N_LAYERS):
        w = p[2 * i][...]                            # (K_pad, N_pad) bf16
        b = p[2 * i + 1][...]                        # (1, N_pad) f32
        hb = h.astype(jnp.bfloat16)
        last = i == N_LAYERS - 1
        if last:
            # Final layer: keep f32 result for the output store; no ReLU.
            h = jnp.dot(hb, w, preferred_element_type=jnp.float32) + b
        elif elementwise_bf16:
            # v6e/v7x: bias + ReLU in bf16 (activation is re-cast to bf16
            # before the next matmul anyway -> no extra rounding step).
            h = jnp.dot(hb, w, preferred_element_type=jnp.bfloat16)
            h = jnp.maximum(h + b.astype(jnp.bfloat16), 0)
        else:
            # v5e (no bf16 VPU): f32 elementwise path.
            h = jnp.dot(hb, w, preferred_element_type=jnp.float32) + b
            h = jnp.maximum(h, 0.0)

    out_ref[...] = h.astype(out_ref.dtype)           # (TB, 128) lane-dense store


@functools.partial(jax.jit, static_argnames=("tb", "elementwise_bf16"))
def _forward_padded(x, padded_params, *, tb, elementwise_bf16):
    B = x.shape[0]
    B_pad = _round_up(max(B, 1), tb)
    x_pad = jnp.zeros((B_pad, TRUE_DIMS[0]), jnp.float32).at[:B, :].set(x)

    grid = (B_pad // tb,)

    in_specs = [pl.BlockSpec((tb, TRUE_DIMS[0]), lambda i: (i, 0))]
    for li in range(N_LAYERS):
        kp, npad = PAD_DIMS[li], PAD_DIMS[li + 1]
        # Constant index_map -> weights/biases stay VMEM-resident across tiles.
        in_specs.append(pl.BlockSpec((kp, npad), lambda i: (0, 0)))
        in_specs.append(pl.BlockSpec((1, npad), lambda i: (0, 0)))
    out_spec = pl.BlockSpec((tb, PAD_DIMS[-1]), lambda i: (i, 0))

    flops = 2 * B_pad * sum(PAD_DIMS[i] * PAD_DIMS[i + 1] for i in range(N_LAYERS))
    bytes_accessed = (x_pad.size * 4
                      + sum(int(p.size) * p.dtype.itemsize for p in padded_params)
                      + B_pad * PAD_DIMS[-1] * 4)

    kernel = functools.partial(mlp_kernel, elementwise_bf16=elementwise_bf16)

    out_pad = pl.pallas_call(
        kernel,
        out_shape=jax.ShapeDtypeStruct((B_pad, PAD_DIMS[-1]), jnp.float32),
        grid=grid,
        in_specs=in_specs,
        out_specs=out_spec,
        compiler_params=pltpu.CompilerParams(
            dimension_semantics=("parallel",)),
        cost_estimate=pl.CostEstimate(
            flops=flops, transcendentals=0, bytes_accessed=bytes_accessed),
    )(x_pad, *padded_params)

    return out_pad[:B, :TRUE_DIMS[-1]]


def model500_forward(x, padded_params, *, block_b=512):
    """x: (B, 2) f32. padded_params: flat list [w0, b0, ..., w6, b6] (padded)."""
    kind = _device_kind()
    num_cores = _num_tensorcores(kind)
    elementwise_bf16 = _use_bf16_elementwise(kind)

    B = x.shape[0]
    B8 = _round_up(max(B, 1), 8)
    if B8 <= block_b:
        if num_cores >= 2 and B8 >= 16:
            # Split a moderate batch into 2 grid steps so both TCs run.
            tb = _round_up(-(-B8 // 2), 8)
        else:
            tb = B8                       # small batch: no padding waste
    else:
        tb = block_b                      # large batch: big tile, amortize overhead

    return _forward_padded(x, padded_params, tb=tb,
                           elementwise_bf16=elementwise_bf16)


def init_params(key):
    """Deterministic init mirroring PyTorch Linear default (U(+-1/sqrt(fan_in))).

    Weights stored transposed vs. PyTorch ((in, out)) so the kernel computes
    y = x @ W + b, numerically identical to torch's x @ W_t.T + b.
    """
    params = []
    for i in range(N_LAYERS):
        fan_in, fan_out = TRUE_DIMS[i], TRUE_DIMS[i + 1]
        key, kw, kb = jax.random.split(key, 3)
        bound = 1.0 / math.sqrt(fan_in)
        w = jax.random.uniform(kw, (fan_in, fan_out), jnp.float32, -bound, bound)
        b = jax.random.uniform(kb, (1, fan_out), jnp.float32, -bound, bound)
        params += [w, b]
    return params


def pad_params(params):
    """Zero-pad each layer to PAD_DIMS (inert through ReLU).

    Layer 0 weights stay f32 (K=2, accuracy-critical, ~1 KB); layers 1..6
    weights go to bf16 for the MXU; all biases stay f32.
    """
    padded = []
    for i in range(N_LAYERS):
        w, b = params[2 * i], params[2 * i + 1]
        kp, npad = PAD_DIMS[i], PAD_DIMS[i + 1]
        wp = jnp.zeros((kp, npad), jnp.float32).at[: w.shape[0], : w.shape[1]].set(w)
        bp = jnp.zeros((1, npad), jnp.float32).at[:, : b.shape[1]].set(b)
        if i > 0:
            wp = wp.astype(jnp.bfloat16)
        padded += [wp, bp]
    return padded


def reference_forward(x, padded_params, *, elementwise_bf16):
    """Pure-JAX reference mirroring the kernel's numeric flow exactly."""
    w0, b0 = padded_params[0], padded_params[1]
    h = x[:, 0:1] * w0[0:1, :] + x[:, 1:2] * w0[1:2, :] + b0
    h = jnp.maximum(h, 0.0)
    for i in range(1, N_LAYERS):
        w = padded_params[2 * i]
        b = padded_params[2 * i + 1]
        hb = h.astype(jnp.bfloat16)
        last = i == N_LAYERS - 1
        if last:
            h = jnp.dot(hb, w, preferred_element_type=jnp.float32) + b
        elif elementwise_bf16:
            h = jnp.dot(hb, w, preferred_element_type=jnp.bfloat16)
            h = jnp.maximum(h + b.astype(jnp.bfloat16), 0)
        else:
            h = jnp.dot(hb, w, preferred_element_type=jnp.float32) + b
            h = jnp.maximum(h, 0.0)
    return h[:, :TRUE_DIMS[-1]]


if __name__ == "__main__":
    key = jax.random.PRNGKey(0)
    key, kx = jax.random.split(key)

    B = 8  # small demo batch (adaptive tile -> single 8-row grid step)
    x = jax.random.normal(kx, (B, TRUE_DIMS[0]), jnp.float32)

    params = init_params(key)
    padded_params = pad_params(params)

    out = model500_forward(x, padded_params)
    out = jax.block_until_ready(out)

    ref = reference_forward(
        x, padded_params,
        elementwise_bf16=_use_bf16_elementwise(_device_kind()))
    assert out.shape == (B, TRUE_DIMS[-1]), out.shape
    # Tolerance accounts for MXU-vs-XLA accumulation-order differences under
    # the bf16 activation casts; real bugs would be orders of magnitude larger.
    assert jnp.allclose(out, ref, atol=1e-2, rtol=1e-2), "mismatch vs reference"

    print("KERNEL_OK")
</pallas_src>

<mosaic_0001>
module attributes {stable_mosaic.version = 11 : i64} {
  func.func @mlp_kernel(%arg0: i32, %arg1: memref<8x2xf32, #tpu.memory_space<vmem>>, %arg2: memref<2x256xf32, #tpu.memory_space<vmem>>, %arg3: memref<1x256xf32, #tpu.memory_space<vmem>>, %arg4: memref<256x384xbf16, #tpu.memory_space<vmem>>, %arg5: memref<1x384xf32, #tpu.memory_space<vmem>>, %arg6: memref<384x512xbf16, #tpu.memory_space<vmem>>, %arg7: memref<1x512xf32, #tpu.memory_space<vmem>>, %arg8: memref<512x512xbf16, #tpu.memory_space<vmem>>, %arg9: memref<1x512xf32, #tpu.memory_space<vmem>>, %arg10: memref<512x384xbf16, #tpu.memory_space<vmem>>, %arg11: memref<1x384xf32, #tpu.memory_space<vmem>>, %arg12: memref<384x256xbf16, #tpu.memory_space<vmem>>, %arg13: memref<1x256xf32, #tpu.memory_space<vmem>>, %arg14: memref<256x128xbf16, #tpu.memory_space<vmem>>, %arg15: memref<1x128xf32, #tpu.memory_space<vmem>>, %arg16: memref<8x128xf32, #tpu.memory_space<vmem>>) attributes {dimension_semantics = [#tpu.dimension_semantics<parallel>], iteration_bounds = array<i64: 1>, scalar_prefetch = 0 : i64, scratch_operands = 0 : i64, tpu.core_type = #tpu.core_type<tc>, window_params = [{transform_indices = @transform_0, window_bounds = array<i64: 8, 2>}, {pipeline_mode = #tpu.pipeline_mode<synchronous>, transform_indices = @transform_1, window_bounds = array<i64: 2, 256>}, {pipeline_mode = #tpu.pipeline_mode<synchronous>, transform_indices = @transform_2, window_bounds = array<i64: 1, 256>}, {pipeline_mode = #tpu.pipeline_mode<synchronous>, transform_indices = @transform_3, window_bounds = array<i64: 256, 384>}, {pipeline_mode = #tpu.pipeline_mode<synchronous>, transform_indices = @transform_4, window_bounds = array<i64: 1, 384>}, {pipeline_mode = #tpu.pipeline_mode<synchronous>, transform_indices = @transform_5, window_bounds = array<i64: 384, 512>}, {pipeline_mode = #tpu.pipeline_mode<synchronous>, transform_indices = @transform_6, window_bounds = array<i64: 1, 512>}, {pipeline_mode = #tpu.pipeline_mode<synchronous>, transform_indices = @transform_7, window_bounds = array<i64: 512, 512>}, {pipeline_mode = #tpu.pipeline_mode<synchronous>, transform_indices = @transform_8, window_bounds = array<i64: 1, 512>}, {pipeline_mode = #tpu.pipeline_mode<synchronous>, transform_indices = @transform_9, window_bounds = array<i64: 512, 384>}, {pipeline_mode = #tpu.pipeline_mode<synchronous>, transform_indices = @transform_10, window_bounds = array<i64: 1, 384>}, {pipeline_mode = #tpu.pipeline_mode<synchronous>, transform_indices = @transform_11, window_bounds = array<i64: 384, 256>}, {pipeline_mode = #tpu.pipeline_mode<synchronous>, transform_indices = @transform_12, window_bounds = array<i64: 1, 256>}, {pipeline_mode = #tpu.pipeline_mode<synchronous>, transform_indices = @transform_13, window_bounds = array<i64: 256, 128>}, {pipeline_mode = #tpu.pipeline_mode<synchronous>, transform_indices = @transform_14, window_bounds = array<i64: 1, 128>}, {transform_indices = @transform_15, window_bounds = array<i64: 8, 128>}]} {
    %c0 = arith.constant 0 : index
    %c0_0 = arith.constant 0 : index
    %0 = vector.load %arg1[%c0, %c0_0] : memref<8x2xf32, #tpu.memory_space<vmem>>, vector<8x2xf32>
    %c0_1 = arith.constant 0 : index
    %c0_2 = arith.constant 0 : index
    %1 = vector.load %arg2[%c0_1, %c0_2] : memref<2x256xf32, #tpu.memory_space<vmem>>, vector<2x256xf32>
    %c0_3 = arith.constant 0 : index
    %c0_4 = arith.constant 0 : index
    %2 = vector.load %arg3[%c0_3, %c0_4] : memref<1x256xf32, #tpu.memory_space<vmem>>, vector<1x256xf32>
    %3 = vector.extract_strided_slice %0 {offsets = [0, 0], sizes = [8, 1], strides = [1, 1]} : vector<8x2xf32> to vector<8x1xf32>
    %4 = vector.extract_strided_slice %1 {offsets = [0, 0], sizes = [1, 256], strides = [1, 1]} : vector<2x256xf32> to vector<1x256xf32>
    %5 = vector.broadcast %3 : vector<8x1xf32> to vector<8x256xf32>
    %6 = vector.broadcast %4 : vector<1x256xf32> to vector<8x256xf32>
    %7 = arith.mulf %5, %6 : vector<8x256xf32>
    %8 = vector.extract_strided_slice %0 {offsets = [0, 1], sizes = [8, 1], strides = [1, 1]} : vector<8x2xf32> to vector<8x1xf32>
    %9 = vector.extract_strided_slice %1 {offsets = [1, 0], sizes = [1, 256], strides = [1, 1]} : vector<2x256xf32> to vector<1x256xf32>
    %10 = vector.broadcast %8 : vector<8x1xf32> to vector<8x256xf32>
    %11 = vector.broadcast %9 : vector<1x256xf32> to vector<8x256xf32>
    %12 = arith.mulf %10, %11 : vector<8x256xf32>
    %13 = arith.addf %7, %12 : vector<8x256xf32>
    %14 = vector.broadcast %2 : vector<1x256xf32> to vector<8x256xf32>
    %15 = arith.addf %13, %14 : vector<8x256xf32>
    %cst = arith.constant 0.000000e+00 : f32
    %16 = vector.broadcast %cst : f32 to vector<8x256xf32>
    %17 = arith.maximumf %15, %16 : vector<8x256xf32>
    %c0_5 = arith.constant 0 : index
    %c0_6 = arith.constant 0 : index
    %18 = vector.load %arg4[%c0_5, %c0_6] : memref<256x384xbf16, #tpu.memory_space<vmem>>, vector<256x384xbf16>
    %c0_7 = arith.constant 0 : index
    %c0_8 = arith.constant 0 : index
    %19 = vector.load %arg5[%c0_7, %c0_8] : memref<1x384xf32, #tpu.memory_space<vmem>>, vector<1x384xf32>
    %20 = arith.truncf %17 : vector<8x256xf32> to vector<8x256xbf16>
    %cst_9 = arith.constant dense<0.000000e+00> : vector<8x384xf32>
    %21 = tpu.matmul %20, %18, %cst_9 {dimension_numbers = #tpu.dot_dimension_numbers<[1], [0], [0], [1], [0, 0, 1, 1], [], []>} : vector<8x256xbf16>, vector<256x384xbf16>, vector<8x384xf32> -> vector<8x384xf32>
    %22 = vector.broadcast %19 : vector<1x384xf32> to vector<8x384xf32>
    %23 = arith.addf %21, %22 : vector<8x384xf32>
    %cst_10 = arith.constant 0.000000e+00 : f32
    %24 = vector.broadcast %cst_10 : f32 to vector<8x384xf32>
    %25 = arith.maximumf %23, %24 : vector<8x384xf32>
    %c0_11 = arith.constant 0 : index
    %c0_12 = arith.constant 0 : index
    %26 = vector.load %arg6[%c0_11, %c0_12] : memref<384x512xbf16, #tpu.memory_space<vmem>>, vector<384x512xbf16>
    %c0_13 = arith.constant 0 : index
    %c0_14 = arith.constant 0 : index
    %27 = vector.load %arg7[%c0_13, %c0_14] : memref<1x512xf32, #tpu.memory_space<vmem>>, vector<1x512xf32>
    %28 = arith.truncf %25 : vector<8x384xf32> to vector<8x384xbf16>
    %cst_15 = arith.constant dense<0.000000e+00> : vector<8x512xf32>
    %29 = tpu.matmul %28, %26, %cst_15 {dimension_numbers = #tpu.dot_dimension_numbers<[1], [0], [0], [1], [0, 0, 1, 1], [], []>} : vector<8x384xbf16>, vector<384x512xbf16>, vector<8x512xf32> -> vector<8x512xf32>
    %30 = vector.broadcast %27 : vector<1x512xf32> to vector<8x512xf32>
    %31 = arith.addf %29, %30 : vector<8x512xf32>
    %cst_16 = arith.constant 0.000000e+00 : f32
    %32 = vector.broadcast %cst_16 : f32 to vector<8x512xf32>
    %33 = arith.maximumf %31, %32 : vector<8x512xf32>
    %c0_17 = arith.constant 0 : index
    %c0_18 = arith.constant 0 : index
    %34 = vector.load %arg8[%c0_17, %c0_18] : memref<512x512xbf16, #tpu.memory_space<vmem>>, vector<512x512xbf16>
    %c0_19 = arith.constant 0 : index
    %c0_20 = arith.constant 0 : index
    %35 = vector.load %arg9[%c0_19, %c0_20] : memref<1x512xf32, #tpu.memory_space<vmem>>, vector<1x512xf32>
    %36 = arith.truncf %33 : vector<8x512xf32> to vector<8x512xbf16>
    %cst_21 = arith.constant dense<0.000000e+00> : vector<8x512xf32>
    %37 = tpu.matmul %36, %34, %cst_21 {dimension_numbers = #tpu.dot_dimension_numbers<[1], [0], [0], [1], [0, 0, 1, 1], [], []>} : vector<8x512xbf16>, vector<512x512xbf16>, vector<8x512xf32> -> vector<8x512xf32>
    %38 = vector.broadcast %35 : vector<1x512xf32> to vector<8x512xf32>
    %39 = arith.addf %37, %38 : vector<8x512xf32>
    %cst_22 = arith.constant 0.000000e+00 : f32
    %40 = vector.broadcast %cst_22 : f32 to vector<8x512xf32>
    %41 = arith.maximumf %39, %40 : vector<8x512xf32>
    %c0_23 = arith.constant 0 : index
    %c0_24 = arith.constant 0 : index
    %42 = vector.load %arg10[%c0_23, %c0_24] : memref<512x384xbf16, #tpu.memory_space<vmem>>, vector<512x384xbf16>
    %c0_25 = arith.constant 0 : index
    %c0_26 = arith.constant 0 : index
    %43 = vector.load %arg11[%c0_25, %c0_26] : memref<1x384xf32, #tpu.memory_space<vmem>>, vector<1x384xf32>
    %44 = arith.truncf %41 : vector<8x512xf32> to vector<8x512xbf16>
    %cst_27 = arith.constant dense<0.000000e+00> : vector<8x384xf32>
    %45 = tpu.matmul %44, %42, %cst_27 {dimension_numbers = #tpu.dot_dimension_numbers<[1], [0], [0], [1], [0, 0, 1, 1], [], []>} : vector<8x512xbf16>, vector<512x384xbf16>, vector<8x384xf32> -> vector<8x384xf32>
    %46 = vector.broadcast %43 : vector<1x384xf32> to vector<8x384xf32>
    %47 = arith.addf %45, %46 : vector<8x384xf32>
    %cst_28 = arith.constant 0.000000e+00 : f32
    %48 = vector.broadcast %cst_28 : f32 to vector<8x384xf32>
    %49 = arith.maximumf %47, %48 : vector<8x384xf32>
    %c0_29 = arith.constant 0 : index
    %c0_30 = arith.constant 0 : index
    %50 = vector.load %arg12[%c0_29, %c0_30] : memref<384x256xbf16, #tpu.memory_space<vmem>>, vector<384x256xbf16>
    %c0_31 = arith.constant 0 : index
    %c0_32 = arith.constant 0 : index
    %51 = vector.load %arg13[%c0_31, %c0_32] : memref<1x256xf32, #tpu.memory_space<vmem>>, vector<1x256xf32>
    %52 = arith.truncf %49 : vector<8x384xf32> to vector<8x384xbf16>
    %cst_33 = arith.constant dense<0.000000e+00> : vector<8x256xf32>
    %53 = tpu.matmul %52, %50, %cst_33 {dimension_numbers = #tpu.dot_dimension_numbers<[1], [0], [0], [1], [0, 0, 1, 1], [], []>} : vector<8x384xbf16>, vector<384x256xbf16>, vector<8x256xf32> -> vector<8x256xf32>
    %54 = vector.broadcast %51 : vector<1x256xf32> to vector<8x256xf32>
    %55 = arith.addf %53, %54 : vector<8x256xf32>
    %cst_34 = arith.constant 0.000000e+00 : f32
    %56 = vector.broadcast %cst_34 : f32 to vector<8x256xf32>
    %57 = arith.maximumf %55, %56 : vector<8x256xf32>
    %c0_35 = arith.constant 0 : index
    %c0_36 = arith.constant 0 : index
    %58 = vector.load %arg14[%c0_35, %c0_36] : memref<256x128xbf16, #tpu.memory_space<vmem>>, vector<256x128xbf16>
    %c0_37 = arith.constant 0 : index
    %c0_38 = arith.constant 0 : index
    %59 = vector.load %arg15[%c0_37, %c0_38] : memref<1x128xf32, #tpu.memory_space<vmem>>, vector<1x128xf32>
    %60 = arith.truncf %57 : vector<8x256xf32> to vector<8x256xbf16>
    %cst_39 = arith.constant dense<0.000000e+00> : vector<8x128xf32>
    %61 = tpu.matmul %60, %58, %cst_39 {dimension_numbers = #tpu.dot_dimension_numbers<[1], [0], [0], [1], [0, 0, 1, 1], [], []>} : vector<8x256xbf16>, vector<256x128xbf16>, vector<8x128xf32> -> vector<8x128xf32>
    %62 = vector.broadcast %59 : vector<1x128xf32> to vector<8x128xf32>
    %63 = arith.addf %61, %62 : vector<8x128xf32>
    %c0_40 = arith.constant 0 : index
    %c0_41 = arith.constant 0 : index
    %64 = vector.load %arg16[%c0_40, %c0_41] : memref<8x128xf32, #tpu.memory_space<vmem>>, vector<8x128xf32>
    tpu.vector_store %arg16[%c0_40, %c0_41], %63 {strides = array<i32>} : memref<8x128xf32, #tpu.memory_space<vmem>>, vector<8x128xf32>,
    return
  }
  func.func @transform_0(%arg0: i32) -> (i32, i32) {
    %c0_i32 = arith.constant 0 : i32
    %c0_i32_0 = arith.constant 0 : i32
    return %arg0, %c0_i32 : i32, i32
  }
  func.func @transform_1(%arg0: i32) -> (i32, i32) {
    %c0_i32 = arith.constant 0 : i32
    %c0_i32_0 = arith.constant 0 : i32
    %c0_i32_1 = arith.constant 0 : i32
    return %c0_i32, %c0_i32_0 : i32, i32
  }
  func.func @transform_2(%arg0: i32) -> (i32, i32) {
    %c0_i32 = arith.constant 0 : i32
    %c0_i32_0 = arith.constant 0 : i32
    %c0_i32_1 = arith.constant 0 : i32
    return %c0_i32, %c0_i32_0 : i32, i32
  }
  func.func @transform_3(%arg0: i32) -> (i32, i32) {
    %c0_i32 = arith.constant 0 : i32
    %c0_i32_0 = arith.constant 0 : i32
    %c0_i32_1 = arith.constant 0 : i32
    return %c0_i32, %c0_i32_0 : i32, i32
  }
  func.func @transform_4(%arg0: i32) -> (i32, i32) {
    %c0_i32 = arith.constant 0 : i32
    %c0_i32_0 = arith.constant 0 : i32
    %c0_i32_1 = arith.constant 0 : i32
    return %c0_i32, %c0_i32_0 : i32, i32
  }
  func.func @transform_5(%arg0: i32) -> (i32, i32) {
    %c0_i32 = arith.constant 0 : i32
    %c0_i32_0 = arith.constant 0 : i32
    %c0_i32_1 = arith.constant 0 : i32
    return %c0_i32, %c0_i32_0 : i32, i32
  }
  func.func @transform_6(%arg0: i32) -> (i32, i32) {
    %c0_i32 = arith.constant 0 : i32
    %c0_i32_0 = arith.constant 0 : i32
    %c0_i32_1 = arith.constant 0 : i32
    return %c0_i32, %c0_i32_0 : i32, i32
  }
  func.func @transform_7(%arg0: i32) -> (i32, i32) {
    %c0_i32 = arith.constant 0 : i32
    %c0_i32_0 = arith.constant 0 : i32
    %c0_i32_1 = arith.constant 0 : i32
    return %c0_i32, %c0_i32_0 : i32, i32
  }
  func.func @transform_8(%arg0: i32) -> (i32, i32) {
    %c0_i32 = arith.constant 0 : i32
    %c0_i32_0 = arith.constant 0 : i32
    %c0_i32_1 = arith.constant 0 : i32
    return %c0_i32, %c0_i32_0 : i32, i32
  }
  func.func @transform_9(%arg0: i32) -> (i32, i32) {
    %c0_i32 = arith.constant 0 : i32
    %c0_i32_0 = arith.constant 0 : i32
    %c0_i32_1 = arith.constant 0 : i32
    return %c0_i32, %c0_i32_0 : i32, i32
  }
  func.func @transform_10(%arg0: i32) -> (i32, i32) {
    %c0_i32 = arith.constant 0 : i32
    %c0_i32_0 = arith.constant 0 : i32
    %c0_i32_1 = arith.constant 0 : i32
    return %c0_i32, %c0_i32_0 : i32, i32
  }
  func.func @transform_11(%arg0: i32) -> (i32, i32) {
    %c0_i32 = arith.constant 0 : i32
    %c0_i32_0 = arith.constant 0 : i32
    %c0_i32_1 = arith.constant 0 : i32
    return %c0_i32, %c0_i32_0 : i32, i32
  }
  func.func @transform_12(%arg0: i32) -> (i32, i32) {
    %c0_i32 = arith.constant 0 : i32
    %c0_i32_0 = arith.constant 0 : i32
    %c0_i32_1 = arith.constant 0 : i32
    return %c0_i32, %c0_i32_0 : i32, i32
  }
  func.func @transform_13(%arg0: i32) -> (i32, i32) {
    %c0_i32 = arith.constant 0 : i32
    %c0_i32_0 = arith.constant 0 : i32
    %c0_i32_1 = arith.constant 0 : i32
    return %c0_i32, %c0_i32_0 : i32, i32
  }
  func.func @transform_14(%arg0: i32) -> (i32, i32) {
    %c0_i32 = arith.constant 0 : i32
    %c0_i32_0 = arith.constant 0 : i32
    %c0_i32_1 = arith.constant 0 : i32
    return %c0_i32, %c0_i32_0 : i32, i32
  }
  func.func @transform_15(%arg0: i32) -> (i32, i32) {
    %c0_i32 = arith.constant 0 : i32
    %c0_i32_0 = arith.constant 0 : i32
    return %arg0, %c0_i32 : i32, i32
  }
}

</mosaic_0001>

<llo_original>
// kernel: _forward_padded.1
$region0: #{_forward_padded.1}
  #allocation0 [shape = 'u32[]', space=smem, size = 0x4, offset = 0x4, fixed_abs, tag = 'smem constant byte address 0x4 - core index']
  #allocation1 [shape = 'u32[144,128]{1,0:T(1,128)}', space=vmem, size = 0x12000, scoped, tag = 'internal scratch']
  %s0 = inlined_call_operand.vmem [shape: f32[8,2], index: 0, kind: input, shape index: {}]
  %s1 = inlined_call_operand.vmem [shape: f32[2,256], index: 1, kind: input, shape index: {}]
  %s2 = inlined_call_operand.hbm [shape: f32[1,256], index: 2, kind: input, shape index: {}]
  %s3 = inlined_call_operand.hbm [shape: bf16[256,384], index: 3, kind: input, shape index: {}]
  %s4 = inlined_call_operand.vmem [shape: f32[1,384], index: 4, kind: input, shape index: {}]
  %s5 = inlined_call_operand.hbm [shape: bf16[384,512], index: 5, kind: input, shape index: {}]
  %s6 = inlined_call_operand.vmem [shape: f32[1,512], index: 6, kind: input, shape index: {}]
  %s7 = inlined_call_operand.hbm [shape: bf16[512,512], index: 7, kind: input, shape index: {}]
  %s8 = inlined_call_operand.vmem [shape: f32[1,512], index: 8, kind: input, shape index: {}]
  %s9 = inlined_call_operand.hbm [shape: bf16[512,384], index: 9, kind: input, shape index: {}]
  %s10 = inlined_call_operand.vmem [shape: f32[1,384], index: 10, kind: input, shape index: {}]
  %s11 = inlined_call_operand.hbm [shape: bf16[384,256], index: 11, kind: input, shape index: {}]
  %s12 = inlined_call_operand.vmem [shape: f32[1,256], index: 12, kind: input, shape index: {}]
  %s13 = inlined_call_operand.hbm [shape: bf16[256,128], index: 13, kind: input, shape index: {}]
  %s14 = inlined_call_operand.vmem [shape: f32[1,128], index: 14, kind: input, shape index: {}]
  %s15 = inlined_call_operand.vmem [shape: f32[8,128], index: 15, kind: output, shape index: {}]
  %s16 = sld [smem:[#allocation0]]
  $region98: #{_forward_padded.1} parent=0
    _
  %s18 = ssub.s32 1, %s16
  %s19 = scalar_select 0, %s18, %s16
  $region1: #{_forward_padded.1} parent=0
    #allocation2 [shape = 'u8[1024]{0}', space=vmem, size = 0x400, scoped, tag = 'input window, operand 2, single buffered']
    #allocation3 [shape = 's32[1]{0}', space=sflag, size = 0x4, scoped, tag = 'scoped memory for _forward_padded.1']
    #allocation4 [shape = 'u8[196608]{0}', space=vmem, size = 0x30000, scoped, tag = 'input window, operand 3, single buffered']
    #allocation5 [shape = 's32[1]{0}', space=sflag, size = 0x4, scoped, tag = 'scoped memory for _forward_padded.1']
    #allocation6 [shape = 'u8[393216]{0}', space=vmem, size = 0x60000, scoped, tag = 'input window, operand 5, single buffered']
    #allocation7 [shape = 'u8[524288]{0}', space=vmem, size = 0x80000, scoped, tag = 'input window, operand 7, single buffered']
    #allocation8 [shape = 's32[1]{0}', space=sflag, size = 0x4, scoped, tag = 'scoped memory for _forward_padded.1']
    #allocation9 [shape = 'u8[393216]{0}', space=vmem, size = 0x60000, scoped, tag = 'input window, operand 9, single buffered']
    #allocation10 [shape = 'u8[196608]{0}', space=vmem, size = 0x30000, scoped, tag = 'input window, operand 11, single buffered']
    #allocation11 [shape = 's32[1]{0}', space=sflag, size = 0x4, scoped, tag = 'scoped memory for _forward_padded.1']
    #allocation12 [shape = 'u8[65536]{0}', space=vmem, size = 0x10000, scoped, tag = 'input window, operand 13, single buffered']
    %20 = vsyncpa [#allocation3], 0
    %21 = vsyncpa [#allocation5], 0
    %22 = vsyncpa [#allocation8], 0
    %23 = vsyncpa [#allocation11], 0
    // Predicated region
    $region2: #{_forward_padded.1} parent=1 // pred_check
      _
    $region3: #{_forward_padded.1} parent=1 // pred_check_branch
      %25 = sbr.rel (0) target = $region5
    $region4: #{_forward_padded.1} parent=1 // pred_region
      _
    $region5: #{_forward_padded.1} parent=1 // pred_fallthru
      _
    // Predicated region
    $region6: #{_forward_padded.1} parent=1 // pred_check
      _
    $region7: #{_forward_padded.1} parent=1 // pred_check_branch
      %27 = sbr.rel (0) target = $region9
    $region8: #{_forward_padded.1} parent=1 // pred_region
      _
    $region9: #{_forward_padded.1} parent=1 // pred_fallthru
      _
    // Predicated region
    $region10: #{_forward_padded.1} parent=1 // pred_check
      _
    $region11: #{_forward_padded.1} parent=1 // pred_check_branch
      %29 = sbr.rel (0) target = $region13
    $region12: #{_forward_padded.1} parent=1 // pred_region
      %s31 = ssub.s32 32, 32
      %32 = vsyncadd [#allocation3], %s31
      %s34 = sshll.u32 [#allocation2], 4
      %s35 = int_to_ptr.vmem [resolvable:$true] %s34
      %37 = dma.hbm_to_vmem [thread:$0]  %s2, 32, %s35, [#allocation3]
    $region13: #{_forward_padded.1} parent=1 // pred_fallthru
      _
    // Predicated region
    $region14: #{_forward_padded.1} parent=1 // pred_check
      _
    $region15: #{_forward_padded.1} parent=1 // pred_check_branch
      %39 = sbr.rel (0) target = $region17
    $region16: #{_forward_padded.1} parent=1 // pred_region
      %s41 = ssub.s32 6144, 6144
      %42 = vsyncadd [#allocation5], %s41
      %s43 = sshll.u32 [#allocation4], 4
      %s44 = int_to_ptr.vmem [resolvable:$true] %s43
      %49 = dma.hbm_to_vmem [thread:$0]  %s3, 6144, %s44, [#allocation5], 192, 192, 12
    $region17: #{_forward_padded.1} parent=1 // pred_fallthru
      _
    // Predicated region
    $region18: #{_forward_padded.1} parent=1 // pred_check
      _
    $region19: #{_forward_padded.1} parent=1 // pred_check_branch
      %51 = sbr.rel (0) target = $region21
    $region20: #{_forward_padded.1} parent=1 // pred_region
      _
    $region21: #{_forward_padded.1} parent=1 // pred_fallthru
      _
    // Predicated region
    $region22: #{_forward_padded.1} parent=1 // pred_check
      _
    $region23: #{_forward_padded.1} parent=1 // pred_check_branch
      %53 = sbr.rel (0) target = $region25
    $region24: #{_forward_padded.1} parent=1 // pred_region
      %s55 = ssub.s32 12288, 12288
      %56 = vsyncadd [#allocation5], %s55
      %s57 = sshll.u32 [#allocation6], 4
      %s58 = int_to_ptr.vmem [resolvable:$true] %s57
      %63 = dma.hbm_to_vmem [thread:$0]  %s5, 12288, %s58, [#allocation5], 256, 256, 16
    $region25: #{_forward_padded.1} parent=1 // pred_fallthru
      _
    // Predicated region
    $region26: #{_forward_padded.1} parent=1 // pred_check
      _
    $region27: #{_forward_padded.1} parent=1 // pred_check_branch
      %65 = sbr.rel (0) target = $region29
    $region28: #{_forward_padded.1} parent=1 // pred_region
      _
    $region29: #{_forward_padded.1} parent=1 // pred_fallthru
      _
    // Predicated region
    $region30: #{_forward_padded.1} parent=1 // pred_check
      _
    $region31: #{_forward_padded.1} parent=1 // pred_check_branch
      %67 = sbr.rel (0) target = $region33
    $region32: #{_forward_padded.1} parent=1 // pred_region
      %s69 = ssub.s32 16384, 16384
      %70 = vsyncadd [#allocation8], %s69
      %s71 = sshll.u32 [#allocation7], 4
      %s72 = int_to_ptr.vmem [resolvable:$true] %s71
      %77 = dma.hbm_to_vmem [thread:$0]  %s7, 16384, %s72, [#allocation8], 256, 256, 16
    $region33: #{_forward_padded.1} parent=1 // pred_fallthru
      _
    // Predicated region
    $region34: #{_forward_padded.1} parent=1 // pred_check
      _
    $region35: #{_forward_padded.1} parent=1 // pred_check_branch
      %79 = sbr.rel (0) target = $region37
    $region36: #{_forward_padded.1} parent=1 // pred_region
      _
    $region37: #{_forward_padded.1} parent=1 // pred_fallthru
      _
    // Predicated region
    $region38: #{_forward_padded.1} parent=1 // pred_check
      _
    $region39: #{_forward_padded.1} parent=1 // pred_check_branch
      %81 = sbr.rel (0) target = $region41
    $region40: #{_forward_padded.1} parent=1 // pred_region
      %s83 = ssub.s32 12288, 12288
      %84 = vsyncadd [#allocation8], %s83
      %s85 = sshll.u32 [#allocation9], 4
      %s86 = int_to_ptr.vmem [resolvable:$true] %s85
      %91 = dma.hbm_to_vmem [thread:$0]  %s9, 12288, %s86, [#allocation8], 192, 192, 12
    $region41: #{_forward_padded.1} parent=1 // pred_fallthru
      _
    // Predicated region
    $region42: #{_forward_padded.1} parent=1 // pred_check
      _
    $region43: #{_forward_padded.1} parent=1 // pred_check_branch
      %93 = sbr.rel (0) target = $region45
    $region44: #{_forward_padded.1} parent=1 // pred_region
      _
    $region45: #{_forward_padded.1} parent=1 // pred_fallthru
      _
    // Predicated region
    $region46: #{_forward_padded.1} parent=1 // pred_check
      _
    $region47: #{_forward_padded.1} parent=1 // pred_check_branch
      %95 = sbr.rel (0) target = $region49
    $region48: #{_forward_padded.1} parent=1 // pred_region
      %s97 = ssub.s32 6144, 6144
      %98 = vsyncadd [#allocation11], %s97
      %s99 = sshll.u32 [#allocation10], 4
      %s100 = int_to_ptr.vmem [resolvable:$true] %s99
      %105 = dma.hbm_to_vmem [thread:$0]  %s11, 6144, %s100, [#allocation11], 128, 128, 8
    $region49: #{_forward_padded.1} parent=1 // pred_fallthru
      _
    // Predicated region
    $region50: #{_forward_padded.1} parent=1 // pred_check
      _
    $region51: #{_forward_padded.1} parent=1 // pred_check_branch
      %107 = sbr.rel (0) target = $region53
    $region52: #{_forward_padded.1} parent=1 // pred_region
      _
    $region53: #{_forward_padded.1} parent=1 // pred_fallthru
      _
    // Predicated region
    $region54: #{_forward_padded.1} parent=1 // pred_check
      _
    $region55: #{_forward_padded.1} parent=1 // pred_check_branch
      %109 = sbr.rel (0) target = $region57
    $region56: #{_forward_padded.1} parent=1 // pred_region
      %s111 = ssub.s32 2048, 2048
      %112 = vsyncadd [#allocation11], %s111
      %s113 = sshll.u32 [#allocation12], 4
      %s114 = int_to_ptr.vmem [resolvable:$true] %s113
      %119 = dma.hbm_to_vmem [thread:$0]  %s13, 2048, %s114, [#allocation11], 64, 64, 4
    $region57: #{_forward_padded.1} parent=1 // pred_fallthru
      _
    // Predicated region
    $region58: #{_forward_padded.1} parent=1 // pred_check
      _
    $region59: #{_forward_padded.1} parent=1 // pred_check_branch
      %121 = sbr.rel (0) target = $region61
    $region60: #{_forward_padded.1} parent=1 // pred_region
      _
    $region61: #{_forward_padded.1} parent=1 // pred_fallthru
      _
    // Predicated region
    $region62: #{_forward_padded.1} parent=1 // pred_check
      _
    $region63: #{_forward_padded.1} parent=1 // pred_check_branch
      %123 = sbr.rel (0) target = $region65
    $region64: #{_forward_padded.1} parent=1 // pred_region
      %124 = dma.done [#allocation3], 32
    $region65: #{_forward_padded.1} parent=1 // pred_fallthru
      _
    // Predicated region
    $region66: #{_forward_padded.1} parent=1 // pred_check
      _
    $region67: #{_forward_padded.1} parent=1 // pred_check_branch
      %126 = sbr.rel (0) target = $region69
    $region68: #{_forward_padded.1} parent=1 // pred_region
      %127 = dma.done [#allocation5], 6144
    $region69: #{_forward_padded.1} parent=1 // pred_fallthru
      _
    // Predicated region
    $region70: #{_forward_padded.1} parent=1 // pred_check
      _
    $region71: #{_forward_padded.1} parent=1 // pred_check_branch
      %129 = sbr.rel (0) target = $region73
    $region72: #{_forward_padded.1} parent=1 // pred_region
      %130 = dma.done [#allocation5], 12288
    $region73: #{_forward_padded.1} parent=1 // pred_fallthru
      _
    // Predicated region
    $region74: #{_forward_padded.1} parent=1 // pred_check
      _
    $region75: #{_forward_padded.1} parent=1 // pred_check_branch
      %132 = sbr.rel (0) target = $region77
    $region76: #{_forward_padded.1} parent=1 // pred_region
      %133 = dma.done [#allocation8], 16384
    $region77: #{_forward_padded.1} parent=1 // pred_fallthru
      _
    // Predicated region
    $region78: #{_forward_padded.1} parent=1 // pred_check
      _
    $region79: #{_forward_padded.1} parent=1 // pred_check_branch
      %135 = sbr.rel (0) target = $region81
    $region80: #{_forward_padded.1} parent=1 // pred_region
      %136 = dma.done [#allocation8], 12288
    $region81: #{_forward_padded.1} parent=1 // pred_fallthru
      _
    // Predicated region
    $region82: #{_forward_padded.1} parent=1 // pred_check
      _
    $region83: #{_forward_padded.1} parent=1 // pred_check_branch
      %138 = sbr.rel (0) target = $region85
    $region84: #{_forward_padded.1} parent=1 // pred_region
      %139 = dma.done [#allocation11], 6144
    $region85: #{_forward_padded.1} parent=1 // pred_fallthru
      _
    // Predicated region
    $region86: #{_forward_padded.1} parent=1 // pred_check
      _
    $region87: #{_forward_padded.1} parent=1 // pred_check_branch
      %141 = sbr.rel (0) target = $region89
    $region88: #{_forward_padded.1} parent=1 // pred_region
      %142 = dma.done [#allocation11], 2048
    $region89: #{_forward_padded.1} parent=1 // pred_fallthru
      _
    %v144 = vld [vmem:[%s0] sm:$0xff]
    %v145 = vld [vmem:[%s1] sm:$0xf]
    %v146 = vld [vmem:[#allocation2] sm:$0x3]
    %148 = vset.pattern.permute.xlu0 0
    %149 = vperm.xlu0 %148, %v144
    %v150 = vpop.permute.xlu0 %149
    %v153 = vlaneseq
    %v154 = vshrl.u32 %v153, 7
    %v155 = vsub.s32 0, %v154
    %v156 = vrot.slane %v145, %v155
    %v157 = vlaneseq
    %v158 = vshrl.u32 %v157, 7
    %v159 = vsub.s32 2, %v158
    %v160 = vrot.slane %v145, %v159
    %v163 = vlaneseq
    %v164 = vshrl.u32 %v163, 7
    %v165 = vsub.s32 0, %v164
    %v166 = vrot.slane %v156, %v165
    %v167 = vlaneseq
    %v168 = vshrl.u32 %v167, 7
    %v169 = vsub.s32 0, %v168
    %v170 = vrot.slane %v160, %v169
    %v171 = vmul.f32 %v150, %v166
    %v172 = vmul.f32 %v150, %v170
    %173 = vset.pattern.permute.xlu0 1
    %174 = vperm.xlu0 %173, %v144
    %v175 = vpop.permute.xlu0 %174
    %v177 = vlaneseq
    %v178 = vshrl.u32 %v177, 7
    %v179 = vsub.s32 1, %v178
    %v180 = vrot.slane %v145, %v179
    %v181 = vlaneseq
    %v182 = vshrl.u32 %v181, 7
    %v183 = vsub.s32 3, %v182
    %v184 = vrot.slane %v145, %v183
    %v187 = vlaneseq
    %v188 = vshrl.u32 %v187, 7
    %v189 = vsub.s32 1, %v188
    %v190 = vrot.slane %v180, %v189
    %v191 = vlaneseq
    %v192 = vshrl.u32 %v191, 7
    %v193 = vsub.s32 1, %v192
    %v194 = vrot.slane %v184, %v193
    %v195 = vmul.f32 %v175, %v190
    %v196 = vmul.f32 %v175, %v194
    %v197 = vadd.f32 %v171, %v195
    %v198 = vadd.f32 %v172, %v196
    %v200 = vlaneseq
    %v201 = vshrl.u32 %v200, 7
    %v202 = vsub.s32 0, %v201
    %v203 = vrot.slane %v146, %v202
    %v204 = vlaneseq
    %v205 = vshrl.u32 %v204, 7
    %v206 = vsub.s32 1, %v205
    %v207 = vrot.slane %v146, %v206
    %v210 = vadd.f32 %v197, %v203
    %v211 = vadd.f32 %v198, %v207
    %v212 = vmax.f32 %v210, 0.0
    %v213 = vmax.f32 %v211, 0.0
    %v214 = vld [vmem:[#allocation4] sm:$0xff]
    %v215 = vld [vmem:[#allocation4 + $0x8] sm:$0xf]
    %v216 = vld [vmem:[#allocation4 + $0xc] sm:$0xff]
    %v217 = vld [vmem:[#allocation4 + $0x14] sm:$0xf]
    %v218 = vld [vmem:[#allocation4 + $0x18] sm:$0xff]
    %v219 = vld [vmem:[#allocation4 + $0x20] sm:$0xf]
    %v220 = vld [vmem:[#allocation4 + $0x24] sm:$0xff]
    %v221 = vld [vmem:[#allocation4 + $0x2c] sm:$0xf]
    %v222 = vld [vmem:[#allocation4 + $0x30] sm:$0xff]
    %v223 = vld [vmem:[#allocation4 + $0x38] sm:$0xf]
    %v224 = vld [vmem:[#allocation4 + $0x3c] sm:$0xff]
    %v225 = vld [vmem:[#allocation4 + $0x44] sm:$0xf]
    %v226 = vld [vmem:[#allocation4 + $0x48] sm:$0xff]
    %v227 = vld [vmem:[#allocation4 + $0x50] sm:$0xf]
    %v228 = vld [vmem:[#allocation4 + $0x54] sm:$0xff]
    %v229 = vld [vmem:[#allocation4 + $0x5c] sm:$0xf]
    %v230 = vld [vmem:[#allocation4 + $0x60] sm:$0xff]
    %v231 = vld [vmem:[#allocation4 + $0x68] sm:$0xf]
    %v232 = vld [vmem:[#allocation4 + $0x6c] sm:$0xff]
    %v233 = vld [vmem:[#allocation4 + $0x74] sm:$0xf]
    %v234 = vld [vmem:[#allocation4 + $0x78] sm:$0xff]
    %v235 = vld [vmem:[#allocation4 + $0x80] sm:$0xf]
    %v236 = vld [vmem:[#allocation4 + $0x84] sm:$0xff]
    %v237 = vld [vmem:[#allocation4 + $0x8c] sm:$0xf]
    %v238 = vld [vmem:[#allocation4 + $0x90] sm:$0xff]
    %v239 = vld [vmem:[#allocation4 + $0x98] sm:$0xf]
    %v240 = vld [vmem:[#allocation4 + $0x9c] sm:$0xff]
    %v241 = vld [vmem:[#allocation4 + $0xa4] sm:$0xf]
    %v242 = vld [vmem:[#allocation4 + $0xa8] sm:$0xff]
    %v243 = vld [vmem:[#allocation4 + $0xb0] sm:$0xf]
    %v244 = vld [vmem:[#allocation4 + $0xb4] sm:$0xff]
    %v245 = vld [vmem:[#allocation4 + $0xbc] sm:$0xf]
    %v246 = vld [vmem:[#allocation4 + $0xc0] sm:$0xff]
    %v247 = vld [vmem:[#allocation4 + $0xc8] sm:$0xf]
    %v248 = vld [vmem:[#allocation4 + $0xcc] sm:$0xff]
    %v249 = vld [vmem:[#allocation4 + $0xd4] sm:$0xf]
    %v250 = vld [vmem:[#allocation4 + $0xd8] sm:$0xff]
    %v251 = vld [vmem:[#allocation4 + $0xe0] sm:$0xf]
    %v252 = vld [vmem:[#allocation4 + $0xe4] sm:$0xff]
    %v253 = vld [vmem:[#allocation4 + $0xec] sm:$0xf]
    %v254 = vld [vmem:[#allocation4 + $0xf0] sm:$0xff]
    %v255 = vld [vmem:[#allocation4 + $0xf8] sm:$0xf]
    %v256 = vld [vmem:[#allocation4 + $0xfc] sm:$0xff]
    %v257 = vld [vmem:[#allocation4 + $0x104] sm:$0xf]
    %v258 = vld [vmem:[#allocation4 + $0x108] sm:$0xff]
    %v259 = vld [vmem:[#allocation4 + $0x110] sm:$0xf]
    %v260 = vld [vmem:[#allocation4 + $0x114] sm:$0xff]
    %v261 = vld [vmem:[#allocation4 + $0x11c] sm:$0xf]
    %v262 = vld [vmem:[#allocation4 + $0x120] sm:$0xff]
    %v263 = vld [vmem:[#allocation4 + $0x128] sm:$0xf]
    %v264 = vld [vmem:[#allocation4 + $0x12c] sm:$0xff]
    %v265 = vld [vmem:[#allocation4 + $0x134] sm:$0xf]
    %v266 = vld [vmem:[#allocation4 + $0x138] sm:$0xff]
    %v267 = vld [vmem:[#allocation4 + $0x140] sm:$0xf]
    %v268 = vld [vmem:[#allocation4 + $0x144] sm:$0xff]
    %v269 = vld [vmem:[#allocation4 + $0x14c] sm:$0xf]
    %v270 = vld [vmem:[#allocation4 + $0x150] sm:$0xff]
    %v271 = vld [vmem:[#allocation4 + $0x158] sm:$0xf]
    %v272 = vld [vmem:[#allocation4 + $0x15c] sm:$0xff]
    %v273 = vld [vmem:[#allocation4 + $0x164] sm:$0xf]
    %v274 = vld [vmem:[#allocation4 + $0x168] sm:$0xff]
    %v275 = vld [vmem:[#allocation4 + $0x170] sm:$0xf]
    %v276 = vld [vmem:[#allocation4 + $0x174] sm:$0xff]
    %v277 = vld [vmem:[#allocation4 + $0x17c] sm:$0xf]
    %v278 = vld [vmem:[%s4] sm:$0x7]
    %v279 = vpack.c.bf16 %v212, %v212
    %v280 = vpack.c.bf16 %v213, %v213
    %v282 = vlaneseq
    %v283 = vshrl.u32 %v282, 7
    %v284 = vsub.s32 0, %v283
    %v285 = vrot.slane %v278, %v284
    %v286 = vlaneseq
    %v287 = vshrl.u32 %v286, 7
    %v288 = vsub.s32 1, %v287
    %v289 = vrot.slane %v278, %v288
    %v290 = vlaneseq
    %v291 = vshrl.u32 %v290, 7
    %v292 = vsub.s32 2, %v291
    %v293 = vrot.slane %v278, %v292
    %v361 = vunpack.c.l.b16 %v214
    %v362 = vunpack.c.h.b16 %v214
    %v363 = vunpack.c.l.b16 %v215
    %v364 = vunpack.c.l.b16 %v216
    %v365 = vunpack.c.h.b16 %v216
    %v366 = vunpack.c.l.b16 %v217
    %v367 = vunpack.c.l.b16 %v218
    %v368 = vunpack.c.h.b16 %v218
    %v369 = vunpack.c.l.b16 %v219
    %v370 = vunpack.c.l.b16 %v220
    %v371 = vunpack.c.h.b16 %v220
    %v372 = vunpack.c.l.b16 %v221
    %v373 = vunpack.c.l.b16 %v222
    %v374 = vunpack.c.h.b16 %v222
    %v375 = vunpack.c.l.b16 %v223
    %v376 = vunpack.c.l.b16 %v224
    %v377 = vunpack.c.h.b16 %v224
    %v378 = vunpack.c.l.b16 %v225
    %v379 = vunpack.c.l.b16 %v226
    %v380 = vunpack.c.h.b16 %v226
    %v381 = vunpack.c.l.b16 %v227
    %v382 = vunpack.c.l.b16 %v228
    %v383 = vunpack.c.h.b16 %v228
    %v384 = vunpack.c.l.b16 %v229
    %v385 = vunpack.c.l.b16 %v230
    %v386 = vunpack.c.h.b16 %v230
    %v387 = vunpack.c.l.b16 %v231
    %v388 = vunpack.c.l.b16 %v232
    %v389 = vunpack.c.h.b16 %v232
    %v390 = vunpack.c.l.b16 %v233
    %v391 = vunpack.c.l.b16 %v234
    %v392 = vunpack.c.h.b16 %v234
    %v393 = vunpack.c.l.b16 %v235
    %v394 = vunpack.c.l.b16 %v236
    %v395 = vunpack.c.h.b16 %v236
    %v396 = vunpack.c.l.b16 %v237
    %v397 = vunpack.c.l.b16 %v238
    %v398 = vunpack.c.h.b16 %v238
    %v399 = vunpack.c.l.b16 %v239
    %v400 = vunpack.c.l.b16 %v240
    %v401 = vunpack.c.h.b16 %v240
    %v402 = vunpack.c.l.b16 %v241
    %v403 = vunpack.c.l.b16 %v242
    %v404 = vunpack.c.h.b16 %v242
    %v405 = vunpack.c.l.b16 %v243
    %v406 = vunpack.c.l.b16 %v244
    %v407 = vunpack.c.h.b16 %v244
    %v408 = vunpack.c.l.b16 %v245
    %v409 = vunpack.c.l.b16 %v246
    %v410 = vunpack.c.h.b16 %v246
    %v411 = vunpack.c.l.b16 %v247
    %v412 = vunpack.c.l.b16 %v248
    %v413 = vunpack.c.h.b16 %v248
    %v414 = vunpack.c.l.b16 %v249
    %v415 = vunpack.c.l.b16 %v250
    %v416 = vunpack.c.h.b16 %v250
    %v417 = vunpack.c.l.b16 %v251
    %v418 = vunpack.c.l.b16 %v252
    %v419 = vunpack.c.h.b16 %v252
    %v420 = vunpack.c.l.b16 %v253
    %v421 = vunpack.c.l.b16 %v254
    %v422 = vunpack.c.h.b16 %v254
    %v423 = vunpack.c.l.b16 %v255
    %v424 = vunpack.c.l.b16 %v256
    %v425 = vunpack.c.h.b16 %v256
    %v426 = vunpack.c.l.b16 %v257
    %v427 = vunpack.c.l.b16 %v258
    %v428 = vunpack.c.h.b16 %v258
    %v429 = vunpack.c.l.b16 %v259
    %v430 = vunpack.c.l.b16 %v260
    %v431 = vunpack.c.h.b16 %v260
    %v432 = vunpack.c.l.b16 %v261
    %v433 = vunpack.c.l.b16 %v262
    %v434 = vunpack.c.h.b16 %v262
    %v435 = vunpack.c.l.b16 %v263
    %v436 = vunpack.c.l.b16 %v264
    %v437 = vunpack.c.h.b16 %v264
    %v438 = vunpack.c.l.b16 %v265
    %v439 = vunpack.c.l.b16 %v266
    %v440 = vunpack.c.h.b16 %v266
    %v441 = vunpack.c.l.b16 %v267
    %v442 = vunpack.c.l.b16 %v268
    %v443 = vunpack.c.h.b16 %v268
    %v444 = vunpack.c.l.b16 %v269
    %v445 = vunpack.c.l.b16 %v270
    %v446 = vunpack.c.h.b16 %v270
    %v447 = vunpack.c.l.b16 %v271
    %v448 = vunpack.c.l.b16 %v272
    %v449 = vunpack.c.h.b16 %v272
    %v450 = vunpack.c.l.b16 %v273
    %v451 = vunpack.c.l.b16 %v274
    %v452 = vunpack.c.h.b16 %v274
    %v453 = vunpack.c.l.b16 %v275
    %v454 = vunpack.c.l.b16 %v276
    %v455 = vunpack.c.h.b16 %v276
    %v456 = vunpack.c.l.b16 %v277
    %v457 = vpack.c.b16 %v364, %v361
    %v458 = vpack.c.b16 %v365, %v362
    %v459 = vpack.c.b16 %v366, %v363
    %v460 = vpack.c.b16 %v370, %v367
    %v461 = vpack.c.b16 %v371, %v368
    %v462 = vpack.c.b16 %v372, %v369
    %v463 = vpack.c.b16 %v376, %v373
    %v464 = vpack.c.b16 %v377, %v374
    %v465 = vpack.c.b16 %v378, %v375
    %v466 = vpack.c.b16 %v382, %v379
    %v467 = vpack.c.b16 %v383, %v380
    %v468 = vpack.c.b16 %v384, %v381
    %v469 = vpack.c.b16 %v388, %v385
    %v470 = vpack.c.b16 %v389, %v386
    %v471 = vpack.c.b16 %v390, %v387
    %v472 = vpack.c.b16 %v394, %v391
    %v473 = vpack.c.b16 %v395, %v392
    %v474 = vpack.c.b16 %v396, %v393
    %v475 = vpack.c.b16 %v400, %v397
    %v476 = vpack.c.b16 %v401, %v398
    %v477 = vpack.c.b16 %v402, %v399
    %v478 = vpack.c.b16 %v406, %v403
    %v479 = vpack.c.b16 %v407, %v404
    %v480 = vpack.c.b16 %v408, %v405
    %v481 = vpack.c.b16 %v412, %v409
    %v482 = vpack.c.b16 %v413, %v410
    %v483 = vpack.c.b16 %v414, %v411
    %v484 = vpack.c.b16 %v418, %v415
    %v485 = vpack.c.b16 %v419, %v416
    %v486 = vpack.c.b16 %v420, %v417
    %v487 = vpack.c.b16 %v424, %v421
    %v488 = vpack.c.b16 %v425, %v422
    %v489 = vpack.c.b16 %v426, %v423
    %v490 = vpack.c.b16 %v430, %v427
    %v491 = vpack.c.b16 %v431, %v428
    %v492 = vpack.c.b16 %v432, %v429
    %v493 = vpack.c.b16 %v436, %v433
    %v494 = vpack.c.b16 %v437, %v434
    %v495 = vpack.c.b16 %v438, %v435
    %v496 = vpack.c.b16 %v442, %v439
    %v497 = vpack.c.b16 %v443, %v440
    %v498 = vpack.c.b16 %v444, %v441
    %v499 = vpack.c.b16 %v448, %v445
    %v500 = vpack.c.b16 %v449, %v446
    %v501 = vpack.c.b16 %v450, %v447
    %v502 = vpack.c.b16 %v454, %v451
    %v503 = vpack.c.b16 %v455, %v452
    %v504 = vpack.c.b16 %v456, %v453
    %553 = vmatprep.subr.bf16.mxu0 %v479
    %554 = vmatpush1.bf16.msra.mxu0 %v478
    %555 = vmatprep.subr.bf16.mxu0 %v476
    %556 = vmatpush1.bf16.msra.mxu0 %v475
    %557 = vmatprep.subr.bf16.mxu0 %v473
    %558 = vmatpush1.bf16.msra.mxu0 %v472
    %559 = vmatprep.subr.bf16.mxu0 %v470
    %560 = vmatpush1.bf16.msra.mxu0 %v469
    %561 = vmatprep.subr.bf16.mxu0 %v467
    %562 = vmatpush1.bf16.msra.mxu0 %v466
    %563 = vmatprep.subr.bf16.mxu0 %v464
    %564 = vmatpush1.bf16.msra.mxu0 %v463
    %565 = vmatprep.subr.bf16.mxu0 %v461
    %566 = vmatpush1.bf16.msra.mxu0 %v460
    %567 = vmatprep.subr.bf16.mxu0 %v458
    %568 = vmatpush1.bf16.msra.mxu0 %v457
    %569 = vmatprep.subr.bf16.mxu0 %v503
    %570 = vmatpush2.bf16.msra.mxu0 %v502
    %571 = vmatprep.subr.bf16.mxu0 %v500
    %572 = vmatpush2.bf16.msra.mxu0 %v499
    %573 = vmatprep.subr.bf16.mxu0 %v497
    %574 = vmatpush2.bf16.msra.mxu0 %v496
    %575 = vmatprep.subr.bf16.mxu0 %v494
    %576 = vmatpush2.bf16.msra.mxu0 %v493
    %577 = vmatprep.subr.bf16.mxu0 %v491
    %578 = vmatpush2.bf16.msra.mxu0 %v490
    %579 = vmatprep.subr.bf16.mxu0 %v488
    %580 = vmatpush2.bf16.msra.mxu0 %v487
    %581 = vmatprep.subr.bf16.mxu0 %v485
    %582 = vmatpush2.bf16.msra.mxu0 %v484
    %583 = vmatprep.subr.bf16.mxu0 %v482
    %584 = vmatpush2.bf16.msra.mxu0 %v481
    %585 = vmatprep.mubr.bf16.mxu0 %v280
    %586 = vmatmul.mubr.bf16.gmra.mxu0 %v279
    %v587 = vpop.f32.mrf.mxu0
    %v588 = vadd.f32 %v285, %v587
    %v589 = vpop.f32.mrf.mxu0
    %v590 = vadd.f32 %v289, %v589
    %v591 = vpop.f32.mrf.mxu0
    %v592 = vpop.f32.mrf.mxu0
    %593 = vdwg.mxu0
    %594 = vmatprep.subr.bf16.mxu0 0
    %595 = vmatpush1.bf16.msra.mxu0 %v480
    %596 = vmatprep.subr.bf16.mxu0 0
    %597 = vmatpush1.bf16.msra.mxu0 %v477
    %598 = vmatprep.subr.bf16.mxu0 0
    %599 = vmatpush1.bf16.msra.mxu0 %v474
    %600 = vmatprep.subr.bf16.mxu0 0
    %601 = vmatpush1.bf16.msra.mxu0 %v471
    %602 = vmatprep.subr.bf16.mxu0 0
    %603 = vmatpush1.bf16.msra.mxu0 %v468
    %604 = vmatprep.subr.bf16.mxu0 0
    %605 = vmatpush1.bf16.msra.mxu0 %v465
    %606 = vmatprep.subr.bf16.mxu0 0
    %607 = vmatpush1.bf16.msra.mxu0 %v462
    %608 = vmatprep.subr.bf16.mxu0 0
    %609 = vmatpush1.bf16.msra.mxu0 %v459
    %610 = vmatprep.subr.bf16.mxu0 0
    %611 = vmatpush2.bf16.msra.mxu0 %v504
    %612 = vmatprep.subr.bf16.mxu0 0
    %613 = vmatpush2.bf16.msra.mxu0 %v501
    %614 = vmatprep.subr.bf16.mxu0 0
    %615 = vmatpush2.bf16.msra.mxu0 %v498
    %616 = vmatprep.subr.bf16.mxu0 0
    %617 = vmatpush2.bf16.msra.mxu0 %v495
    %618 = vmatprep.subr.bf16.mxu0 0
    %619 = vmatpush2.bf16.msra.mxu0 %v492
    %620 = vmatprep.subr.bf16.mxu0 0
    %621 = vmatpush2.bf16.msra.mxu0 %v489
    %622 = vmatprep.subr.bf16.mxu0 0
    %623 = vmatpush2.bf16.msra.mxu0 %v486
    %624 = vmatprep.subr.bf16.mxu0 0
    %625 = vmatpush2.bf16.msra.mxu0 %v483
    %626 = vmatprep.mubr.bf16.mxu0 %v280
    %627 = vmatmul.mubr.bf16.gmra.mxu0 %v279
    %v628 = vpop.f32.mrf.mxu0
    %v629 = vadd.f32 %v293, %v628
    %v630 = vpop.f32.mrf.mxu0
    %v631 = vpop.f32.mrf.mxu0
    %v632 = vpop.f32.mrf.mxu0
    %633 = vdwg.mxu0
    %v634 = vmax.f32 %v588, 0.0
    %v635 = vmax.f32 %v590, 0.0
    %v636 = vmax.f32 %v629, 0.0
    %v637 = vld [vmem:[#allocation6] sm:$0xff]
    %v638 = vld [vmem:[#allocation6 + $0x8] sm:$0xff]
    %v639 = vld [vmem:[#allocation6 + $0x10] sm:$0xff]
    %v640 = vld [vmem:[#allocation6 + $0x18] sm:$0xff]
    %v641 = vld [vmem:[#allocation6 + $0x20] sm:$0xff]
    %v642 = vld [vmem:[#allocation6 + $0x28] sm:$0xff]
    %v643 = vld [vmem:[#allocation6 + $0x30] sm:$0xff]
    %v644 = vld [vmem:[#allocation6 + $0x38] sm:$0xff]
    %v645 = vld [vmem:[#allocation6 + $0x40] sm:$0xff]
    %v646 = vld [vmem:[#allocation6 + $0x48] sm:$0xff]
    %v647 = vld [vmem:[#allocation6 + $0x50] sm:$0xff]
    %v648 = vld [vmem:[#allocation6 + $0x58] sm:$0xff]
    %v649 = vld [vmem:[#allocation6 + $0x60] sm:$0xff]
    %v650 = vld [vmem:[#allocation6 + $0x68] sm:$0xff]
    %v651 = vld [vmem:[#allocation6 + $0x70] sm:$0xff]
    %v652 = vld [vmem:[#allocation6 + $0x78] sm:$0xff]
    %v653 = vld [vmem:[#allocation6 + $0x80] sm:$0xff]
    %v654 = vld [vmem:[#allocation6 + $0x88] sm:$0xff]
    %v655 = vld [vmem:[#allocation6 + $0x90] sm:$0xff]
    %v656 = vld [vmem:[#allocation6 + $0x98] sm:$0xff]
    %v657 = vld [vmem:[#allocation6 + $0xa0] sm:$0xff]
    %v658 = vld [vmem:[#allocation6 + $0xa8] sm:$0xff]
    %v659 = vld [vmem:[#allocation6 + $0xb0] sm:$0xff]
    %v660 = vld [vmem:[#allocation6 + $0xb8] sm:$0xff]
    %v661 = vld [vmem:[#allocation6 + $0xc0] sm:$0xff]
    %v662 = vld [vmem:[#allocation6 + $0xc8] sm:$0xff]
    %v663 = vld [vmem:[#allocation6 + $0xd0] sm:$0xff]
    %v664 = vld [vmem:[#allocation6 + $0xd8] sm:$0xff]
    %v665 = vld [vmem:[#allocation6 + $0xe0] sm:$0xff]
    %v666 = vld [vmem:[#allocation6 + $0xe8] sm:$0xff]
    %v667 = vld [vmem:[#allocation6 + $0xf0] sm:$0xff]
    %v668 = vld [vmem:[#allocation6 + $0xf8] sm:$0xff]
    %v669 = vld [vmem:[#allocation6 + $0x100] sm:$0xff]
    %v670 = vld [vmem:[#allocation6 + $0x108] sm:$0xff]
    %v671 = vld [vmem:[#allocation6 + $0x110] sm:$0xff]
    %v672 = vld [vmem:[#allocation6 + $0x118] sm:$0xff]
    %v673 = vld [vmem:[#allocation6 + $0x120] sm:$0xff]
    %v674 = vld [vmem:[#allocation6 + $0x128] sm:$0xff]
    %v675 = vld [vmem:[#allocation6 + $0x130] sm:$0xff]
    %v676 = vld [vmem:[#allocation6 + $0x138] sm:$0xff]
    %v677 = vld [vmem:[#allocation6 + $0x140] sm:$0xff]
    %v678 = vld [vmem:[#allocation6 + $0x148] sm:$0xff]
    %v679 = vld [vmem:[#allocation6 + $0x150] sm:$0xff]
    %v680 = vld [vmem:[#allocation6 + $0x158] sm:$0xff]
    %v681 = vld [vmem:[#allocation6 + $0x160] sm:$0xff]
    %v682 = vld [vmem:[#allocation6 + $0x168] sm:$0xff]
    %v683 = vld [vmem:[#allocation6 + $0x170] sm:$0xff]
    %v684 = vld [vmem:[#allocation6 + $0x178] sm:$0xff]
    %v685 = vld [vmem:[#allocation6 + $0x180] sm:$0xff]
    %v686 = vld [vmem:[#allocation6 + $0x188] sm:$0xff]
    %v687 = vld [vmem:[#allocation6 + $0x190] sm:$0xff]
    %v688 = vld [vmem:[#allocation6 + $0x198] sm:$0xff]
    %v689 = vld [vmem:[#allocation6 + $0x1a0] sm:$0xff]
    %v690 = vld [vmem:[#allocation6 + $0x1a8] sm:$0xff]
    %v691 = vld [vmem:[#allocation6 + $0x1b0] sm:$0xff]
    %v692 = vld [vmem:[#allocation6 + $0x1b8] sm:$0xff]
    %v693 = vld [vmem:[#allocation6 + $0x1c0] sm:$0xff]
    %v694 = vld [vmem:[#allocation6 + $0x1c8] sm:$0xff]
    %v695 = vld [vmem:[#allocation6 + $0x1d0] sm:$0xff]
    %v696 = vld [vmem:[#allocation6 + $0x1d8] sm:$0xff]
    %v697 = vld [vmem:[#allocation6 + $0x1e0] sm:$0xff]
    %v698 = vld [vmem:[#allocation6 + $0x1e8] sm:$0xff]
    %v699 = vld [vmem:[#allocation6 + $0x1f0] sm:$0xff]
    %v700 = vld [vmem:[#allocation6 + $0x1f8] sm:$0xff]
    %v701 = vld [vmem:[#allocation6 + $0x200] sm:$0xff]
    %v702 = vld [vmem:[#allocation6 + $0x208] sm:$0xff]
    %v703 = vld [vmem:[#allocation6 + $0x210] sm:$0xff]
    %v704 = vld [vmem:[#allocation6 + $0x218] sm:$0xff]
    %v705 = vld [vmem:[#allocation6 + $0x220] sm:$0xff]
    %v706 = vld [vmem:[#allocation6 + $0x228] sm:$0xff]
    %v707 = vld [vmem:[#allocation6 + $0x230] sm:$0xff]
    %v708 = vld [vmem:[#allocation6 + $0x238] sm:$0xff]
    %v709 = vld [vmem:[#allocation6 + $0x240] sm:$0xff]
    %v710 = vld [vmem:[#allocation6 + $0x248] sm:$0xff]
    %v711 = vld [vmem:[#allocation6 + $0x250] sm:$0xff]
    %v712 = vld [vmem:[#allocation6 + $0x258] sm:$0xff]
    %v713 = vld [vmem:[#allocation6 + $0x260] sm:$0xff]
    %v714 = vld [vmem:[#allocation6 + $0x268] sm:$0xff]
    %v715 = vld [vmem:[#allocation6 + $0x270] sm:$0xff]
    %v716 = vld [vmem:[#allocation6 + $0x278] sm:$0xff]
    %v717 = vld [vmem:[#allocation6 + $0x280] sm:$0xff]
    %v718 = vld [vmem:[#allocation6 + $0x288] sm:$0xff]
    %v719 = vld [vmem:[#allocation6 + $0x290] sm:$0xff]
    %v720 = vld [vmem:[#allocation6 + $0x298] sm:$0xff]
    %v721 = vld [vmem:[#allocation6 + $0x2a0] sm:$0xff]
    %v722 = vld [vmem:[#allocation6 + $0x2a8] sm:$0xff]
    %v723 = vld [vmem:[#allocation6 + $0x2b0] sm:$0xff]
    %v724 = vld [vmem:[#allocation6 + $0x2b8] sm:$0xff]
    %v725 = vld [vmem:[#allocation6 + $0x2c0] sm:$0xff]
    %v726 = vld [vmem:[#allocation6 + $0x2c8] sm:$0xff]
    %v727 = vld [vmem:[#allocation6 + $0x2d0] sm:$0xff]
    %v728 = vld [vmem:[#allocation6 + $0x2d8] sm:$0xff]
    %v729 = vld [vmem:[#allocation6 + $0x2e0] sm:$0xff]
    %v730 = vld [vmem:[#allocation6 + $0x2e8] sm:$0xff]
    %v731 = vld [vmem:[#allocation6 + $0x2f0] sm:$0xff]
    %v732 = vld [vmem:[#allocation6 + $0x2f8] sm:$0xff]
    %v733 = vld [vmem:[%s6] sm:$0xf]
    %v734 = vpack.c.bf16 %v634, %v634
    %v735 = vpack.c.bf16 %v635, %v635
    %v736 = vpack.c.bf16 %v636, %v636
    %v738 = vlaneseq
    %v739 = vshrl.u32 %v738, 7
    %v740 = vsub.s32 0, %v739
    %v741 = vrot.slane %v733, %v740
    %v742 = vlaneseq
    %v743 = vshrl.u32 %v742, 7
    %v744 = vsub.s32 1, %v743
    %v745 = vrot.slane %v733, %v744
    %v746 = vlaneseq
    %v747 = vshrl.u32 %v746, 7
    %v748 = vsub.s32 2, %v747
    %v749 = vrot.slane %v733, %v748
    %v750 = vlaneseq
    %v751 = vshrl.u32 %v750, 7
    %v752 = vsub.s32 3, %v751
    %v753 = vrot.slane %v733, %v752
    %v854 = vunpack.c.l.b16 %v637
    %v855 = vunpack.c.h.b16 %v637
    %v856 = vunpack.c.l.b16 %v638
    %v857 = vunpack.c.h.b16 %v638
    %v858 = vunpack.c.l.b16 %v639
    %v859 = vunpack.c.h.b16 %v639
    %v860 = vunpack.c.l.b16 %v640
    %v861 = vunpack.c.h.b16 %v640
    %v862 = vunpack.c.l.b16 %v641
    %v863 = vunpack.c.h.b16 %v641
    %v864 = vunpack.c.l.b16 %v642
    %v865 = vunpack.c.h.b16 %v642
    %v866 = vunpack.c.l.b16 %v643
    %v867 = vunpack.c.h.b16 %v643
    %v868 = vunpack.c.l.b16 %v644
    %v869 = vunpack.c.h.b16 %v644
    %v870 = vunpack.c.l.b16 %v645
    %v871 = vunpack.c.h.b16 %v645
    %v872 = vunpack.c.l.b16 %v646
    %v873 = vunpack.c.h.b16 %v646
    %v874 = vunpack.c.l.b16 %v647
    %v875 = vunpack.c.h.b16 %v647
    %v876 = vunpack.c.l.b16 %v648
    %v877 = vunpack.c.h.b16 %v648
    %v878 = vunpack.c.l.b16 %v649
    %v879 = vunpack.c.h.b16 %v649
    %v880 = vunpack.c.l.b16 %v650
    %v881 = vunpack.c.h.b16 %v650
    %v882 = vunpack.c.l.b16 %v651
    %v883 = vunpack.c.h.b16 %v651
    %v884 = vunpack.c.l.b16 %v652
    %v885 = vunpack.c.h.b16 %v652
    %v886 = vunpack.c.l.b16 %v653
    %v887 = vunpack.c.h.b16 %v653
    %v888 = vunpack.c.l.b16 %v654
    %v889 = vunpack.c.h.b16 %v654
    %v890 = vunpack.c.l.b16 %v655
    %v891 = vunpack.c.h.b16 %v655
    %v892 = vunpack.c.l.b16 %v656
    %v893 = vunpack.c.h.b16 %v656
    %v894 = vunpack.c.l.b16 %v657
    %v895 = vunpack.c.h.b16 %v657
    %v896 = vunpack.c.l.b16 %v658
    %v897 = vunpack.c.h.b16 %v658
    %v898 = vunpack.c.l.b16 %v659
    %v899 = vunpack.c.h.b16 %v659
    %v900 = vunpack.c.l.b16 %v660
    %v901 = vunpack.c.h.b16 %v660
    %v902 = vunpack.c.l.b16 %v661
    %v903 = vunpack.c.h.b16 %v661
    %v904 = vunpack.c.l.b16 %v662
    %v905 = vunpack.c.h.b16 %v662
    %v906 = vunpack.c.l.b16 %v663
    %v907 = vunpack.c.h.b16 %v663
    %v908 = vunpack.c.l.b16 %v664
    %v909 = vunpack.c.h.b16 %v664
    %v910 = vunpack.c.l.b16 %v665
    %v911 = vunpack.c.h.b16 %v665
    %v912 = vunpack.c.l.b16 %v666
    %v913 = vunpack.c.h.b16 %v666
    %v914 = vunpack.c.l.b16 %v667
    %v915 = vunpack.c.h.b16 %v667
    %v916 = vunpack.c.l.b16 %v668
    %v917 = vunpack.c.h.b16 %v668
    %v918 = vunpack.c.l.b16 %v669
    %v919 = vunpack.c.h.b16 %v669
    %v920 = vunpack.c.l.b16 %v670
    %v921 = vunpack.c.h.b16 %v670
    %v922 = vunpack.c.l.b16 %v671
    %v923 = vunpack.c.h.b16 %v671
    %v924 = vunpack.c.l.b16 %v672
    %v925 = vunpack.c.h.b16 %v672
    %v926 = vunpack.c.l.b16 %v673
    %v927 = vunpack.c.h.b16 %v673
    %v928 = vunpack.c.l.b16 %v674
    %v929 = vunpack.c.h.b16 %v674
    %v930 = vunpack.c.l.b16 %v675
    %v931 = vunpack.c.h.b16 %v675
    %v932 = vunpack.c.l.b16 %v676
    %v933 = vunpack.c.h.b16 %v676
    %v934 = vunpack.c.l.b16 %v677
    %v935 = vunpack.c.h.b16 %v677
    %v936 = vunpack.c.l.b16 %v678
    %v937 = vunpack.c.h.b16 %v678
    %v938 = vunpack.c.l.b16 %v679
    %v939 = vunpack.c.h.b16 %v679
    %v940 = vunpack.c.l.b16 %v680
    %v941 = vunpack.c.h.b16 %v680
    %v942 = vunpack.c.l.b16 %v681
    %v943 = vunpack.c.h.b16 %v681
    %v944 = vunpack.c.l.b16 %v682
    %v945 = vunpack.c.h.b16 %v682
    %v946 = vunpack.c.l.b16 %v683
    %v947 = vunpack.c.h.b16 %v683
    %v948 = vunpack.c.l.b16 %v684
    %v949 = vunpack.c.h.b16 %v684
    %v950 = vunpack.c.l.b16 %v685
    %v951 = vunpack.c.h.b16 %v685
    %v952 = vunpack.c.l.b16 %v686
    %v953 = vunpack.c.h.b16 %v686
    %v954 = vunpack.c.l.b16 %v687
    %v955 = vunpack.c.h.b16 %v687
    %v956 = vunpack.c.l.b16 %v688
    %v957 = vunpack.c.h.b16 %v688
    %v958 = vunpack.c.l.b16 %v689
    %v959 = vunpack.c.h.b16 %v689
    %v960 = vunpack.c.l.b16 %v690
    %v961 = vunpack.c.h.b16 %v690
    %v962 = vunpack.c.l.b16 %v691
    %v963 = vunpack.c.h.b16 %v691
    %v964 = vunpack.c.l.b16 %v692
    %v965 = vunpack.c.h.b16 %v692
    %v966 = vunpack.c.l.b16 %v693
    %v967 = vunpack.c.h.b16 %v693
    %v968 = vunpack.c.l.b16 %v694
    %v969 = vunpack.c.h.b16 %v694
    %v970 = vunpack.c.l.b16 %v695
    %v971 = vunpack.c.h.b16 %v695
    %v972 = vunpack.c.l.b16 %v696
    %v973 = vunpack.c.h.b16 %v696
    %v974 = vunpack.c.l.b16 %v697
    %v975 = vunpack.c.h.b16 %v697
    %v976 = vunpack.c.l.b16 %v698
    %v977 = vunpack.c.h.b16 %v698
    %v978 = vunpack.c.l.b16 %v699
    %v979 = vunpack.c.h.b16 %v699
    %v980 = vunpack.c.l.b16 %v700
    %v981 = vunpack.c.h.b16 %v700
    %v982 = vunpack.c.l.b16 %v701
    %v983 = vunpack.c.h.b16 %v701
    %v984 = vunpack.c.l.b16 %v702
    %v985 = vunpack.c.h.b16 %v702
    %v986 = vunpack.c.l.b16 %v703
    %v987 = vunpack.c.h.b16 %v703
    %v988 = vunpack.c.l.b16 %v704
    %v989 = vunpack.c.h.b16 %v704
    %v990 = vunpack.c.l.b16 %v705
    %v991 = vunpack.c.h.b16 %v705
    %v992 = vunpack.c.l.b16 %v706
    %v993 = vunpack.c.h.b16 %v706
    %v994 = vunpack.c.l.b16 %v707
    %v995 = vunpack.c.h.b16 %v707
    %v996 = vunpack.c.l.b16 %v708
    %v997 = vunpack.c.h.b16 %v708
    %v998 = vunpack.c.l.b16 %v709
    %v999 = vunpack.c.h.b16 %v709
    %v1000 = vunpack.c.l.b16 %v710
    %v1001 = vunpack.c.h.b16 %v710
    %v1002 = vunpack.c.l.b16 %v711
    %v1003 = vunpack.c.h.b16 %v711
    %v1004 = vunpack.c.l.b16 %v712
    %v1005 = vunpack.c.h.b16 %v712
    %v1006 = vunpack.c.l.b16 %v713
    %v1007 = vunpack.c.h.b16 %v713
    %v1008 = vunpack.c.l.b16 %v714
    %v1009 = vunpack.c.h.b16 %v714
    %v1010 = vunpack.c.l.b16 %v715
    %v1011 = vunpack.c.h.b16 %v715
    %v1012 = vunpack.c.l.b16 %v716
    %v1013 = vunpack.c.h.b16 %v716
    %v1014 = vunpack.c.l.b16 %v717
    %v1015 = vunpack.c.h.b16 %v717
    %v1016 = vunpack.c.l.b16 %v718
    %v1017 = vunpack.c.h.b16 %v718
    %v1018 = vunpack.c.l.b16 %v719
    %v1019 = vunpack.c.h.b16 %v719
    %v1020 = vunpack.c.l.b16 %v720
    %v1021 = vunpack.c.h.b16 %v720
    %v1022 = vunpack.c.l.b16 %v721
    %v1023 = vunpack.c.h.b16 %v721
    %v1024 = vunpack.c.l.b16 %v722
    %v1025 = vunpack.c.h.b16 %v722
    %v1026 = vunpack.c.l.b16 %v723
    %v1027 = vunpack.c.h.b16 %v723
    %v1028 = vunpack.c.l.b16 %v724
    %v1029 = vunpack.c.h.b16 %v724
    %v1030 = vunpack.c.l.b16 %v725
    %v1031 = vunpack.c.h.b16 %v725
    %v1032 = vunpack.c.l.b16 %v726
    %v1033 = vunpack.c.h.b16 %v726
    %v1034 = vunpack.c.l.b16 %v727
    %v1035 = vunpack.c.h.b16 %v727
    %v1036 = vunpack.c.l.b16 %v728
    %v1037 = vunpack.c.h.b16 %v728
    %v1038 = vunpack.c.l.b16 %v729
    %v1039 = vunpack.c.h.b16 %v729
    %v1040 = vunpack.c.l.b16 %v730
    %v1041 = vunpack.c.h.b16 %v730
    %v1042 = vunpack.c.l.b16 %v731
    %v1043 = vunpack.c.h.b16 %v731
    %v1044 = vunpack.c.l.b16 %v732
    %v1045 = vunpack.c.h.b16 %v732
    %v1046 = vpack.c.b16 %v858, %v854
    %v1047 = vpack.c.b16 %v859, %v855
    %v1048 = vpack.c.b16 %v860, %v856
    %v1049 = vpack.c.b16 %v861, %v857
    %v1050 = vpack.c.b16 %v866, %v862
    %v1051 = vpack.c.b16 %v867, %v863
    %v1052 = vpack.c.b16 %v868, %v864
    %v1053 = vpack.c.b16 %v869, %v865
    %v1054 = vpack.c.b16 %v874, %v870
    %v1055 = vpack.c.b16 %v875, %v871
    %v1056 = vpack.c.b16 %v876, %v872
    %v1057 = vpack.c.b16 %v877, %v873
    %v1058 = vpack.c.b16 %v882, %v878
    %v1059 = vpack.c.b16 %v883, %v879
    %v1060 = vpack.c.b16 %v884, %v880
    %v1061 = vpack.c.b16 %v885, %v881
    %v1062 = vpack.c.b16 %v890, %v886
    %v1063 = vpack.c.b16 %v891, %v887
    %v1064 = vpack.c.b16 %v892, %v888
    %v1065 = vpack.c.b16 %v893, %v889
    %v1066 = vpack.c.b16 %v898, %v894
    %v1067 = vpack.c.b16 %v899, %v895
    %v1068 = vpack.c.b16 %v900, %v896
    %v1069 = vpack.c.b16 %v901, %v897
    %v1070 = vpack.c.b16 %v906, %v902
    %v1071 = vpack.c.b16 %v907, %v903
    %v1072 = vpack.c.b16 %v908, %v904
    %v1073 = vpack.c.b16 %v909, %v905
    %v1074 = vpack.c.b16 %v914, %v910
    %v1075 = vpack.c.b16 %v915, %v911
    %v1076 = vpack.c.b16 %v916, %v912
    %v1077 = vpack.c.b16 %v917, %v913
    %v1078 = vpack.c.b16 %v922, %v918
    %v1079 = vpack.c.b16 %v923, %v919
    %v1080 = vpack.c.b16 %v924, %v920
    %v1081 = vpack.c.b16 %v925, %v921
    %v1082 = vpack.c.b16 %v930, %v926
    %v1083 = vpack.c.b16 %v931, %v927
    %v1084 = vpack.c.b16 %v932, %v928
    %v1085 = vpack.c.b16 %v933, %v929
    %v1086 = vpack.c.b16 %v938, %v934
    %v1087 = vpack.c.b16 %v939, %v935
    %v1088 = vpack.c.b16 %v940, %v936
    %v1089 = vpack.c.b16 %v941, %v937
    %v1090 = vpack.c.b16 %v946, %v942
    %v1091 = vpack.c.b16 %v947, %v943
    %v1092 = vpack.c.b16 %v948, %v944
    %v1093 = vpack.c.b16 %v949, %v945
    %v1094 = vpack.c.b16 %v954, %v950
    %v1095 = vpack.c.b16 %v955, %v951
    %v1096 = vpack.c.b16 %v956, %v952
    %v1097 = vpack.c.b16 %v957, %v953
    %v1098 = vpack.c.b16 %v962, %v958
    %v1099 = vpack.c.b16 %v963, %v959
    %v1100 = vpack.c.b16 %v964, %v960
    %v1101 = vpack.c.b16 %v965, %v961
    %v1102 = vpack.c.b16 %v970, %v966
    %v1103 = vpack.c.b16 %v971, %v967
    %v1104 = vpack.c.b16 %v972, %v968
    %v1105 = vpack.c.b16 %v973, %v969
    %v1106 = vpack.c.b16 %v978, %v974
    %v1107 = vpack.c.b16 %v979, %v975
    %v1108 = vpack.c.b16 %v980, %v976
    %v1109 = vpack.c.b16 %v981, %v977
    %v1110 = vpack.c.b16 %v986, %v982
    %v1111 = vpack.c.b16 %v987, %v983
    %v1112 = vpack.c.b16 %v988, %v984
    %v1113 = vpack.c.b16 %v989, %v985
    %v1114 = vpack.c.b16 %v994, %v990
    %v1115 = vpack.c.b16 %v995, %v991
    %v1116 = vpack.c.b16 %v996, %v992
    %v1117 = vpack.c.b16 %v997, %v993
    %v1118 = vpack.c.b16 %v1002, %v998
    %v1119 = vpack.c.b16 %v1003, %v999
    %v1120 = vpack.c.b16 %v1004, %v1000
    %v1121 = vpack.c.b16 %v1005, %v1001
    %v1122 = vpack.c.b16 %v1010, %v1006
    %v1123 = vpack.c.b16 %v1011, %v1007
    %v1124 = vpack.c.b16 %v1012, %v1008
    %v1125 = vpack.c.b16 %v1013, %v1009
    %v1126 = vpack.c.b16 %v1018, %v1014
    %v1127 = vpack.c.b16 %v1019, %v1015
    %v1128 = vpack.c.b16 %v1020, %v1016
    %v1129 = vpack.c.b16 %v1021, %v1017
    %v1130 = vpack.c.b16 %v1026, %v1022
    %v1131 = vpack.c.b16 %v1027, %v1023
    %v1132 = vpack.c.b16 %v1028, %v1024
    %v1133 = vpack.c.b16 %v1029, %v1025
    %v1134 = vpack.c.b16 %v1034, %v1030
    %v1135 = vpack.c.b16 %v1035, %v1031
    %v1136 = vpack.c.b16 %v1036, %v1032
    %v1137 = vpack.c.b16 %v1037, %v1033
    %v1138 = vpack.c.b16 %v1042, %v1038
    %v1139 = vpack.c.b16 %v1043, %v1039
    %v1140 = vpack.c.b16 %v1044, %v1040
    %v1141 = vpack.c.b16 %v1045, %v1041
    %1238 = vmatprep.subr.bf16.mxu0 %v1075
    %1239 = vmatpush1.bf16.msra.mxu0 %v1074
    %1240 = vmatprep.subr.bf16.mxu0 %v1071
    %1241 = vmatpush1.bf16.msra.mxu0 %v1070
    %1242 = vmatprep.subr.bf16.mxu0 %v1067
    %1243 = vmatpush1.bf16.msra.mxu0 %v1066
    %1244 = vmatprep.subr.bf16.mxu0 %v1063
    %1245 = vmatpush1.bf16.msra.mxu0 %v1062
    %1246 = vmatprep.subr.bf16.mxu0 %v1059
    %1247 = vmatpush1.bf16.msra.mxu0 %v1058
    %1248 = vmatprep.subr.bf16.mxu0 %v1055
    %1249 = vmatpush1.bf16.msra.mxu0 %v1054
    %1250 = vmatprep.subr.bf16.mxu0 %v1051
    %1251 = vmatpush1.bf16.msra.mxu0 %v1050
    %1252 = vmatprep.subr.bf16.mxu0 %v1047
    %1253 = vmatpush1.bf16.msra.mxu0 %v1046
    %1254 = vmatprep.subr.bf16.mxu0 %v1107
    %1255 = vmatpush2.bf16.msra.mxu0 %v1106
    %1256 = vmatprep.subr.bf16.mxu0 %v1103
    %1257 = vmatpush2.bf16.msra.mxu0 %v1102
    %1258 = vmatprep.subr.bf16.mxu0 %v1099
    %1259 = vmatpush2.bf16.msra.mxu0 %v1098
    %1260 = vmatprep.subr.bf16.mxu0 %v1095
    %1261 = vmatpush2.bf16.msra.mxu0 %v1094
    %1262 = vmatprep.subr.bf16.mxu0 %v1091
    %1263 = vmatpush2.bf16.msra.mxu0 %v1090
    %1264 = vmatprep.subr.bf16.mxu0 %v1087
    %1265 = vmatpush2.bf16.msra.mxu0 %v1086
    %1266 = vmatprep.subr.bf16.mxu0 %v1083
    %1267 = vmatpush2.bf16.msra.mxu0 %v1082
    %1268 = vmatprep.subr.bf16.mxu0 %v1079
    %1269 = vmatpush2.bf16.msra.mxu0 %v1078
    %1270 = vmatprep.mubr.bf16.mxu0 %v735
    %1271 = vmatmul.mubr.bf16.gmra.mxu0 %v734
    %v1272 = vpop.f32.mrf.mxu0
    %v1273 = vadd.f32 %v741, %v1272
    %v1274 = vpop.f32.mrf.mxu0
    %v1275 = vadd.f32 %v745, %v1274
    %v1276 = vpop.f32.mrf.mxu0
    %v1277 = vpop.f32.mrf.mxu0
    %1278 = vdwg.mxu0
    %1279 = vmatprep.subr.bf16.mxu0 %v1139
    %1280 = vmatpush1.bf16.msra.mxu0 %v1138
    %1281 = vmatprep.subr.bf16.mxu0 %v1135
    %1282 = vmatpush1.bf16.msra.mxu0 %v1134
    %1283 = vmatprep.subr.bf16.mxu0 %v1131
    %1284 = vmatpush1.bf16.msra.mxu0 %v1130
    %1285 = vmatprep.subr.bf16.mxu0 %v1127
    %1286 = vmatpush1.bf16.msra.mxu0 %v1126
    %1287 = vmatprep.subr.bf16.mxu0 %v1123
    %1288 = vmatpush1.bf16.msra.mxu0 %v1122
    %1289 = vmatprep.subr.bf16.mxu0 %v1119
    %1290 = vmatpush1.bf16.msra.mxu0 %v1118
    %1291 = vmatprep.subr.bf16.mxu0 %v1115
    %1292 = vmatpush1.bf16.msra.mxu0 %v1114
    %1293 = vmatprep.subr.bf16.mxu0 %v1111
    %1294 = vmatpush1.bf16.msra.mxu0 %v1110
    %1295 = vmatprep.subr.bf16.mxu0 0
    %1296 = vmatpush2.bf16.msra.mxu0 0
    %1297 = vmatprep.subr.bf16.mxu0 0
    %1298 = vmatpush2.bf16.msra.mxu0 0
    %1299 = vmatprep.subr.bf16.mxu0 0
    %1300 = vmatpush2.bf16.msra.mxu0 0
    %1301 = vmatprep.subr.bf16.mxu0 0
    %1302 = vmatpush2.bf16.msra.mxu0 0
    %1303 = vmatprep.subr.bf16.mxu0 0
    %1304 = vmatpush2.bf16.msra.mxu0 0
    %1305 = vmatprep.subr.bf16.mxu0 0
    %1306 = vmatpush2.bf16.msra.mxu0 0
    %1307 = vmatprep.subr.bf16.mxu0 0
    %1308 = vmatpush2.bf16.msra.mxu0 0
    %1309 = vmatprep.subr.bf16.mxu0 0
    %1310 = vmatpush2.bf16.msra.mxu0 0
    %1311 = vmatprep.mubr.bf16.mxu0 0
    %1312 = vmatmul.mubr.bf16.gmra.mxu0 %v736
    %v1313 = vpop.f32.mrf.mxu0
    %v1314 = vadd.f32 %v1273, %v1313
    %v1315 = vpop.f32.mrf.mxu0
    %v1316 = vadd.f32 %v1275, %v1315
    %v1317 = vpop.f32.mrf.mxu0
    %v1318 = vpop.f32.mrf.mxu0
    %1319 = vdwg.mxu0
    %1320 = vmatprep.subr.bf16.mxu0 %v1077
    %1321 = vmatpush1.bf16.msra.mxu0 %v1076
    %1322 = vmatprep.subr.bf16.mxu0 %v1073
    %1323 = vmatpush1.bf16.msra.mxu0 %v1072
    %1324 = vmatprep.subr.bf16.mxu0 %v1069
    %1325 = vmatpush1.bf16.msra.mxu0 %v1068
    %1326 = vmatprep.subr.bf16.mxu0 %v1065
    %1327 = vmatpush1.bf16.msra.mxu0 %v1064
    %1328 = vmatprep.subr.bf16.mxu0 %v1061
    %1329 = vmatpush1.bf16.msra.mxu0 %v1060
    %1330 = vmatprep.subr.bf16.mxu0 %v1057
    %1331 = vmatpush1.bf16.msra.mxu0 %v1056
    %1332 = vmatprep.subr.bf16.mxu0 %v1053
    %1333 = vmatpush1.bf16.msra.mxu0 %v1052
    %1334 = vmatprep.subr.bf16.mxu0 %v1049
    %1335 = vmatpush1.bf16.msra.mxu0 %v1048
    %1336 = vmatprep.subr.bf16.mxu0 %v1109
    %1337 = vmatpush2.bf16.msra.mxu0 %v1108
    %1338 = vmatprep.subr.bf16.mxu0 %v1105
    %1339 = vmatpush2.bf16.msra.mxu0 %v1104
    %1340 = vmatprep.subr.bf16.mxu0 %v1101
    %1341 = vmatpush2.bf16.msra.mxu0 %v1100
    %1342 = vmatprep.subr.bf16.mxu0 %v1097
    %1343 = vmatpush2.bf16.msra.mxu0 %v1096
    %1344 = vmatprep.subr.bf16.mxu0 %v1093
    %1345 = vmatpush2.bf16.msra.mxu0 %v1092
    %1346 = vmatprep.subr.bf16.mxu0 %v1089
    %1347 = vmatpush2.bf16.msra.mxu0 %v1088
    %1348 = vmatprep.subr.bf16.mxu0 %v1085
    %1349 = vmatpush2.bf16.msra.mxu0 %v1084
    %1350 = vmatprep.subr.bf16.mxu0 %v1081
    %1351 = vmatpush2.bf16.msra.mxu0 %v1080
    %1352 = vmatprep.mubr.bf16.mxu0 %v735
    %1353 = vmatmul.mubr.bf16.gmra.mxu0 %v734
    %v1354 = vpop.f32.mrf.mxu0
    %v1355 = vadd.f32 %v749, %v1354
    %v1356 = vpop.f32.mrf.mxu0
    %v1357 = vadd.f32 %v753, %v1356
    %v1358 = vpop.f32.mrf.mxu0
    %v1359 = vpop.f32.mrf.mxu0
    %1360 = vdwg.mxu0
    %1361 = vmatprep.subr.bf16.mxu0 %v1141
    %1362 = vmatpush1.bf16.msra.mxu0 %v1140
    %1363 = vmatprep.subr.bf16.mxu0 %v1137
    %1364 = vmatpush1.bf16.msra.mxu0 %v1136
    %1365 = vmatprep.subr.bf16.mxu0 %v1133
    %1366 = vmatpush1.bf16.msra.mxu0 %v1132
    %1367 = vmatprep.subr.bf16.mxu0 %v1129
    %1368 = vmatpush1.bf16.msra.mxu0 %v1128
    %1369 = vmatprep.subr.bf16.mxu0 %v1125
    %1370 = vmatpush1.bf16.msra.mxu0 %v1124
    %1371 = vmatprep.subr.bf16.mxu0 %v1121
    %1372 = vmatpush1.bf16.msra.mxu0 %v1120
    %1373 = vmatprep.subr.bf16.mxu0 %v1117
    %1374 = vmatpush1.bf16.msra.mxu0 %v1116
    %1375 = vmatprep.subr.bf16.mxu0 %v1113
    %1376 = vmatpush1.bf16.msra.mxu0 %v1112
    %1377 = vmatprep.subr.bf16.mxu0 0
    %1378 = vmatpush2.bf16.msra.mxu0 0
    %1379 = vmatprep.subr.bf16.mxu0 0
    %1380 = vmatpush2.bf16.msra.mxu0 0
    %1381 = vmatprep.subr.bf16.mxu0 0
    %1382 = vmatpush2.bf16.msra.mxu0 0
    %1383 = vmatprep.subr.bf16.mxu0 0
    %1384 = vmatpush2.bf16.msra.mxu0 0
    %1385 = vmatprep.subr.bf16.mxu0 0
    %1386 = vmatpush2.bf16.msra.mxu0 0
    %1387 = vmatprep.subr.bf16.mxu0 0
    %1388 = vmatpush2.bf16.msra.mxu0 0
    %1389 = vmatprep.subr.bf16.mxu0 0
    %1390 = vmatpush2.bf16.msra.mxu0 0
    %1391 = vmatprep.subr.bf16.mxu0 0
    %1392 = vmatpush2.bf16.msra.mxu0 0
    %1393 = vmatprep.mubr.bf16.mxu0 0
    %1394 = vmatmul.mubr.bf16.gmra.mxu0 %v736
    %v1395 = vpop.f32.mrf.mxu0
    %v1396 = vadd.f32 %v1355, %v1395
    %v1397 = vpop.f32.mrf.mxu0
    %v1398 = vadd.f32 %v1357, %v1397
    %v1399 = vpop.f32.mrf.mxu0
    %v1400 = vpop.f32.mrf.mxu0
    %1401 = vdwg.mxu0
    %v1402 = vmax.f32 %v1314, 0.0
    %v1403 = vmax.f32 %v1316, 0.0
    %v1404 = vmax.f32 %v1396, 0.0
    %v1405 = vmax.f32 %v1398, 0.0
    %v1406 = vld [vmem:[#allocation7] sm:$0xff]
    %v1407 = vld [vmem:[#allocation7 + $0x8] sm:$0xff]
    %v1408 = vld [vmem:[#allocation7 + $0x10] sm:$0xff]
    %v1409 = vld [vmem:[#allocation7 + $0x18] sm:$0xff]
    %v1410 = vld [vmem:[#allocation7 + $0x20] sm:$0xff]
    %v1411 = vld [vmem:[#allocation7 + $0x28] sm:$0xff]
    %v1412 = vld [vmem:[#allocation7 + $0x30] sm:$0xff]
    %v1413 = vld [vmem:[#allocation7 + $0x38] sm:$0xff]
    %v1414 = vld [vmem:[#allocation7 + $0x40] sm:$0xff]
    %v1415 = vld [vmem:[#allocation7 + $0x48] sm:$0xff]
    %v1416 = vld [vmem:[#allocation7 + $0x50] sm:$0xff]
    %v1417 = vld [vmem:[#allocation7 + $0x58] sm:$0xff]
    %v1418 = vld [vmem:[#allocation7 + $0x60] sm:$0xff]
    %v1419 = vld [vmem:[#allocation7 + $0x68] sm:$0xff]
    %v1420 = vld [vmem:[#allocation7 + $0x70] sm:$0xff]
    %v1421 = vld [vmem:[#allocation7 + $0x78] sm:$0xff]
    %v1422 = vld [vmem:[#allocation7 + $0x80] sm:$0xff]
    %v1423 = vld [vmem:[#allocation7 + $0x88] sm:$0xff]
    %v1424 = vld [vmem:[#allocation7 + $0x90] sm:$0xff]
    %v1425 = vld [vmem:[#allocation7 + $0x98] sm:$0xff]
    %v1426 = vld [vmem:[#allocation7 + $0xa0] sm:$0xff]
    %v1427 = vld [vmem:[#allocation7 + $0xa8] sm:$0xff]
    %v1428 = vld [vmem:[#allocation7 + $0xb0] sm:$0xff]
    %v1429 = vld [vmem:[#allocation7 + $0xb8] sm:$0xff]
    %v1430 = vld [vmem:[#allocation7 + $0xc0] sm:$0xff]
    %v1431 = vld [vmem:[#allocation7 + $0xc8] sm:$0xff]
    %v1432 = vld [vmem:[#allocation7 + $0xd0] sm:$0xff]
    %v1433 = vld [vmem:[#allocation7 + $0xd8] sm:$0xff]
    %v1434 = vld [vmem:[#allocation7 + $0xe0] sm:$0xff]
    %v1435 = vld [vmem:[#allocation7 + $0xe8] sm:$0xff]
    %v1436 = vld [vmem:[#allocation7 + $0xf0] sm:$0xff]
    %v1437 = vld [vmem:[#allocation7 + $0xf8] sm:$0xff]
    %v1438 = vld [vmem:[#allocation7 + $0x100] sm:$0xff]
    %v1439 = vld [vmem:[#allocation7 + $0x108] sm:$0xff]
    %v1440 = vld [vmem:[#allocation7 + $0x110] sm:$0xff]
    %v1441 = vld [vmem:[#allocation7 + $0x118] sm:$0xff]
    %v1442 = vld [vmem:[#allocation7 + $0x120] sm:$0xff]
    %v1443 = vld [vmem:[#allocation7 + $0x128] sm:$0xff]
    %v1444 = vld [vmem:[#allocation7 + $0x130] sm:$0xff]
    %v1445 = vld [vmem:[#allocation7 + $0x138] sm:$0xff]
    %v1446 = vld [vmem:[#allocation7 + $0x140] sm:$0xff]
    %v1447 = vld [vmem:[#allocation7 + $0x148] sm:$0xff]
    %v1448 = vld [vmem:[#allocation7 + $0x150] sm:$0xff]
    %v1449 = vld [vmem:[#allocation7 + $0x158] sm:$0xff]
    %v1450 = vld [vmem:[#allocation7 + $0x160] sm:$0xff]
    %v1451 = vld [vmem:[#allocation7 + $0x168] sm:$0xff]
    %v1452 = vld [vmem:[#allocation7 + $0x170] sm:$0xff]
    %v1453 = vld [vmem:[#allocation7 + $0x178] sm:$0xff]
    %v1454 = vld [vmem:[#allocation7 + $0x180] sm:$0xff]
    %v1455 = vld [vmem:[#allocation7 + $0x188] sm:$0xff]
    %v1456 = vld [vmem:[#allocation7 + $0x190] sm:$0xff]
    %v1457 = vld [vmem:[#allocation7 + $0x198] sm:$0xff]
    %v1458 = vld [vmem:[#allocation7 + $0x1a0] sm:$0xff]
    %v1459 = vld [vmem:[#allocation7 + $0x1a8] sm:$0xff]
    %v1460 = vld [vmem:[#allocation7 + $0x1b0] sm:$0xff]
    %v1461 = vld [vmem:[#allocation7 + $0x1b8] sm:$0xff]
    %v1462 = vld [vmem:[#allocation7 + $0x1c0] sm:$0xff]
    %v1463 = vld [vmem:[#allocation7 + $0x1c8] sm:$0xff]
    %v1464 = vld [vmem:[#allocation7 + $0x1d0] sm:$0xff]
    %v1465 = vld [vmem:[#allocation7 + $0x1d8] sm:$0xff]
    %v1466 = vld [vmem:[#allocation7 + $0x1e0] sm:$0xff]
    %v1467 = vld [vmem:[#allocation7 + $0x1e8] sm:$0xff]
    %v1468 = vld [vmem:[#allocation7 + $0x1f0] sm:$0xff]
    %v1469 = vld [vmem:[#allocation7 + $0x1f8] sm:$0xff]
    %v1470 = vld [vmem:[#allocation7 + $0x200] sm:$0xff]
    %v1471 = vld [vmem:[#allocation7 + $0x208] sm:$0xff]
    %v1472 = vld [vmem:[#allocation7 + $0x210] sm:$0xff]
    %v1473 = vld [vmem:[#allocation7 + $0x218] sm:$0xff]
    %v1474 = vld [vmem:[#allocation7 + $0x220] sm:$0xff]
    %v1475 = vld [vmem:[#allocation7 + $0x228] sm:$0xff]
    %v1476 = vld [vmem:[#allocation7 + $0x230] sm:$0xff]
    %v1477 = vld [vmem:[#allocation7 + $0x238] sm:$0xff]
    %v1478 = vld [vmem:[#allocation7 + $0x240] sm:$0xff]
    %v1479 = vld [vmem:[#allocation7 + $0x248] sm:$0xff]
    %v1480 = vld [vmem:[#allocation7 + $0x250] sm:$0xff]
    %v1481 = vld [vmem:[#allocation7 + $0x258] sm:$0xff]
    %v1482 = vld [vmem:[#allocation7 + $0x260] sm:$0xff]
    %v1483 = vld [vmem:[#allocation7 + $0x268] sm:$0xff]
    %v1484 = vld [vmem:[#allocation7 + $0x270] sm:$0xff]
    %v1485 = vld [vmem:[#allocation7 + $0x278] sm:$0xff]
    %v1486 = vld [vmem:[#allocation7 + $0x280] sm:$0xff]
    %v1487 = vld [vmem:[#allocation7 + $0x288] sm:$0xff]
    %v1488 = vld [vmem:[#allocation7 + $0x290] sm:$0xff]
    %v1489 = vld [vmem:[#allocation7 + $0x298] sm:$0xff]
    %v1490 = vld [vmem:[#allocation7 + $0x2a0] sm:$0xff]
    %v1491 = vld [vmem:[#allocation7 + $0x2a8] sm:$0xff]
    %v1492 = vld [vmem:[#allocation7 + $0x2b0] sm:$0xff]
    %v1493 = vld [vmem:[#allocation7 + $0x2b8] sm:$0xff]
    %v1494 = vld [vmem:[#allocation7 + $0x2c0] sm:$0xff]
    %v1495 = vld [vmem:[#allocation7 + $0x2c8] sm:$0xff]
    %v1496 = vld [vmem:[#allocation7 + $0x2d0] sm:$0xff]
    %v1497 = vld [vmem:[#allocation7 + $0x2d8] sm:$0xff]
    %v1498 = vld [vmem:[#allocation7 + $0x2e0] sm:$0xff]
    %v1499 = vld [vmem:[#allocation7 + $0x2e8] sm:$0xff]
    %v1500 = vld [vmem:[#allocation7 + $0x2f0] sm:$0xff]
    %v1501 = vld [vmem:[#allocation7 + $0x2f8] sm:$0xff]
    %v1502 = vld [vmem:[#allocation7 + $0x300] sm:$0xff]
    %v1503 = vld [vmem:[#allocation7 + $0x308] sm:$0xff]
    %v1504 = vld [vmem:[#allocation7 + $0x310] sm:$0xff]
    %v1505 = vld [vmem:[#allocation7 + $0x318] sm:$0xff]
    %v1506 = vld [vmem:[#allocation7 + $0x320] sm:$0xff]
    %v1507 = vld [vmem:[#allocation7 + $0x328] sm:$0xff]
    %v1508 = vld [vmem:[#allocation7 + $0x330] sm:$0xff]
    %v1509 = vld [vmem:[#allocation7 + $0x338] sm:$0xff]
    %v1510 = vld [vmem:[#allocation7 + $0x340] sm:$0xff]
    %v1511 = vld [vmem:[#allocation7 + $0x348] sm:$0xff]
    %v1512 = vld [vmem:[#allocation7 + $0x350] sm:$0xff]
    %v1513 = vld [vmem:[#allocation7 + $0x358] sm:$0xff]
    %v1514 = vld [vmem:[#allocation7 + $0x360] sm:$0xff]
    %v1515 = vld [vmem:[#allocation7 + $0x368] sm:$0xff]
    %v1516 = vld [vmem:[#allocation7 + $0x370] sm:$0xff]
    %v1517 = vld [vmem:[#allocation7 + $0x378] sm:$0xff]
    %v1518 = vld [vmem:[#allocation7 + $0x380] sm:$0xff]
    %v1519 = vld [vmem:[#allocation7 + $0x388] sm:$0xff]
    %v1520 = vld [vmem:[#allocation7 + $0x390] sm:$0xff]
    %v1521 = vld [vmem:[#allocation7 + $0x398] sm:$0xff]
    %v1522 = vld [vmem:[#allocation7 + $0x3a0] sm:$0xff]
    %v1523 = vld [vmem:[#allocation7 + $0x3a8] sm:$0xff]
    %v1524 = vld [vmem:[#allocation7 + $0x3b0] sm:$0xff]
    %v1525 = vld [vmem:[#allocation7 + $0x3b8] sm:$0xff]
    %v1526 = vld [vmem:[#allocation7 + $0x3c0] sm:$0xff]
    %v1527 = vld [vmem:[#allocation7 + $0x3c8] sm:$0xff]
    %v1528 = vld [vmem:[#allocation7 + $0x3d0] sm:$0xff]
    %v1529 = vld [vmem:[#allocation7 + $0x3d8] sm:$0xff]
    %v1530 = vld [vmem:[#allocation7 + $0x3e0] sm:$0xff]
    %v1531 = vld [vmem:[#allocation7 + $0x3e8] sm:$0xff]
    %v1532 = vld [vmem:[#allocation7 + $0x3f0] sm:$0xff]
    %v1533 = vld [vmem:[#allocation7 + $0x3f8] sm:$0xff]
    %v1534 = vld [vmem:[%s8] sm:$0xf]
    %v1535 = vpack.c.bf16 %v1402, %v1402
    %v1536 = vpack.c.bf16 %v1403, %v1403
    %v1537 = vpack.c.bf16 %v1404, %v1404
    %v1538 = vpack.c.bf16 %v1405, %v1405
    %v1540 = vlaneseq
    %v1541 = vshrl.u32 %v1540, 7
    %v1542 = vsub.s32 0, %v1541
    %v1543 = vrot.slane %v1534, %v1542
    %v1544 = vlaneseq
    %v1545 = vshrl.u32 %v1544, 7
    %v1546 = vsub.s32 1, %v1545
    %v1547 = vrot.slane %v1534, %v1546
    %v1548 = vlaneseq
    %v1549 = vshrl.u32 %v1548, 7
    %v1550 = vsub.s32 2, %v1549
    %v1551 = vrot.slane %v1534, %v1550
    %v1552 = vlaneseq
    %v1553 = vshrl.u32 %v1552, 7
    %v1554 = vsub.s32 3, %v1553
    %v1555 = vrot.slane %v1534, %v1554
    %v1688 = vunpack.c.l.b16 %v1406
    %v1689 = vunpack.c.h.b16 %v1406
    %v1690 = vunpack.c.l.b16 %v1407
    %v1691 = vunpack.c.h.b16 %v1407
    %v1692 = vunpack.c.l.b16 %v1408
    %v1693 = vunpack.c.h.b16 %v1408
    %v1694 = vunpack.c.l.b16 %v1409
    %v1695 = vunpack.c.h.b16 %v1409
    %v1696 = vunpack.c.l.b16 %v1410
    %v1697 = vunpack.c.h.b16 %v1410
    %v1698 = vunpack.c.l.b16 %v1411
    %v1699 = vunpack.c.h.b16 %v1411
    %v1700 = vunpack.c.l.b16 %v1412
    %v1701 = vunpack.c.h.b16 %v1412
    %v1702 = vunpack.c.l.b16 %v1413
    %v1703 = vunpack.c.h.b16 %v1413
    %v1704 = vunpack.c.l.b16 %v1414
    %v1705 = vunpack.c.h.b16 %v1414
    %v1706 = vunpack.c.l.b16 %v1415
    %v1707 = vunpack.c.h.b16 %v1415
    %v1708 = vunpack.c.l.b16 %v1416
    %v1709 = vunpack.c.h.b16 %v1416
    %v1710 = vunpack.c.l.b16 %v1417
    %v1711 = vunpack.c.h.b16 %v1417
    %v1712 = vunpack.c.l.b16 %v1418
    %v1713 = vunpack.c.h.b16 %v1418
    %v1714 = vunpack.c.l.b16 %v1419
    %v1715 = vunpack.c.h.b16 %v1419
    %v1716 = vunpack.c.l.b16 %v1420
    %v1717 = vunpack.c.h.b16 %v1420
    %v1718 = vunpack.c.l.b16 %v1421
    %v1719 = vunpack.c.h.b16 %v1421
    %v1720 = vunpack.c.l.b16 %v1422
    %v1721 = vunpack.c.h.b16 %v1422
    %v1722 = vunpack.c.l.b16 %v1423
    %v1723 = vunpack.c.h.b16 %v1423
    %v1724 = vunpack.c.l.b16 %v1424
    %v1725 = vunpack.c.h.b16 %v1424
    %v1726 = vunpack.c.l.b16 %v1425
    %v1727 = vunpack.c.h.b16 %v1425
    %v1728 = vunpack.c.l.b16 %v1426
    %v1729 = vunpack.c.h.b16 %v1426
    %v1730 = vunpack.c.l.b16 %v1427
    %v1731 = vunpack.c.h.b16 %v1427
    %v1732 = vunpack.c.l.b16 %v1428
    %v1733 = vunpack.c.h.b16 %v1428
    %v1734 = vunpack.c.l.b16 %v1429
    %v1735 = vunpack.c.h.b16 %v1429
    %v1736 = vunpack.c.l.b16 %v1430
    %v1737 = vunpack.c.h.b16 %v1430
    %v1738 = vunpack.c.l.b16 %v1431
    %v1739 = vunpack.c.h.b16 %v1431
    %v1740 = vunpack.c.l.b16 %v1432
    %v1741 = vunpack.c.h.b16 %v1432
    %v1742 = vunpack.c.l.b16 %v1433
    %v1743 = vunpack.c.h.b16 %v1433
    %v1744 = vunpack.c.l.b16 %v1434
    %v1745 = vunpack.c.h.b16 %v1434
    %v1746 = vunpack.c.l.b16 %v1435
    %v1747 = vunpack.c.h.b16 %v1435
    %v1748 = vunpack.c.l.b16 %v1436
    %v1749 = vunpack.c.h.b16 %v1436
    %v1750 = vunpack.c.l.b16 %v1437
    %v1751 = vunpack.c.h.b16 %v1437
    %v1752 = vunpack.c.l.b16 %v1438
    %v1753 = vunpack.c.h.b16 %v1438
    %v1754 = vunpack.c.l.b16 %v1439
    %v1755 = vunpack.c.h.b16 %v1439
    %v1756 = vunpack.c.l.b16 %v1440
    %v1757 = vunpack.c.h.b16 %v1440
    %v1758 = vunpack.c.l.b16 %v1441
    %v1759 = vunpack.c.h.b16 %v1441
    %v1760 = vunpack.c.l.b16 %v1442
    %v1761 = vunpack.c.h.b16 %v1442
    %v1762 = vunpack.c.l.b16 %v1443
    %v1763 = vunpack.c.h.b16 %v1443
    %v1764 = vunpack.c.l.b16 %v1444
    %v1765 = vunpack.c.h.b16 %v1444
    %v1766 = vunpack.c.l.b16 %v1445
    %v1767 = vunpack.c.h.b16 %v1445
    %v1768 = vunpack.c.l.b16 %v1446
    %v1769 = vunpack.c.h.b16 %v1446
    %v1770 = vunpack.c.l.b16 %v1447
    %v1771 = vunpack.c.h.b16 %v1447
    %v1772 = vunpack.c.l.b16 %v1448
    %v1773 = vunpack.c.h.b16 %v1448
    %v1774 = vunpack.c.l.b16 %v1449
    %v1775 = vunpack.c.h.b16 %v1449
    %v1776 = vunpack.c.l.b16 %v1450
    %v1777 = vunpack.c.h.b16 %v1450
    %v1778 = vunpack.c.l.b16 %v1451
    %v1779 = vunpack.c.h.b16 %v1451
    %v1780 = vunpack.c.l.b16 %v1452
    %v1781 = vunpack.c.h.b16 %v1452
    %v1782 = vunpack.c.l.b16 %v1453
    %v1783 = vunpack.c.h.b16 %v1453
    %v1784 = vunpack.c.l.b16 %v1454
    %v1785 = vunpack.c.h.b16 %v1454
    %v1786 = vunpack.c.l.b16 %v1455
    %v1787 = vunpack.c.h.b16 %v1455
    %v1788 = vunpack.c.l.b16 %v1456
    %v1789 = vunpack.c.h.b16 %v1456
    %v1790 = vunpack.c.l.b16 %v1457
    %v1791 = vunpack.c.h.b16 %v1457
    %v1792 = vunpack.c.l.b16 %v1458
    %v1793 = vunpack.c.h.b16 %v1458
    %v1794 = vunpack.c.l.b16 %v1459
    %v1795 = vunpack.c.h.b16 %v1459
    %v1796 = vunpack.c.l.b16 %v1460
    %v1797 = vunpack.c.h.b16 %v1460
    %v1798 = vunpack.c.l.b16 %v1461
    %v1799 = vunpack.c.h.b16 %v1461
    %v1800 = vunpack.c.l.b16 %v1462
    %v1801 = vunpack.c.h.b16 %v1462
    %v1802 = vunpack.c.l.b16 %v1463
    %v1803 = vunpack.c.h.b16 %v1463
    %v1804 = vunpack.c.l.b16 %v1464
    %v1805 = vunpack.c.h.b16 %v1464
    %v1806 = vunpack.c.l.b16 %v1465
    %v1807 = vunpack.c.h.b16 %v1465
    %v1808 = vunpack.c.l.b16 %v1466
    %v1809 = vunpack.c.h.b16 %v1466
    %v1810 = vunpack.c.l.b16 %v1467
    %v1811 = vunpack.c.h.b16 %v1467
    %v1812 = vunpack.c.l.b16 %v1468
    %v1813 = vunpack.c.h.b16 %v1468
    %v1814 = vunpack.c.l.b16 %v1469
    %v1815 = vunpack.c.h.b16 %v1469
    %v1816 = vunpack.c.l.b16 %v1470
    %v1817 = vunpack.c.h.b16 %v1470
    %v1818 = vunpack.c.l.b16 %v1471
    %v1819 = vunpack.c.h.b16 %v1471
    %v1820 = vunpack.c.l.b16 %v1472
    %v1821 = vunpack.c.h.b16 %v1472
    %v1822 = vunpack.c.l.b16 %v1473
    %v1823 = vunpack.c.h.b16 %v1473
    %v1824 = vunpack.c.l.b16 %v1474
    %v1825 = vunpack.c.h.b16 %v1474
    %v1826 = vunpack.c.l.b16 %v1475
    %v1827 = vunpack.c.h.b16 %v1475
    %v1828 = vunpack.c.l.b16 %v1476
    %v1829 = vunpack.c.h.b16 %v1476
    %v1830 = vunpack.c.l.b16 %v1477
    %v1831 = vunpack.c.h.b16 %v1477
    %v1832 = vunpack.c.l.b16 %v1478
    %v1833 = vunpack.c.h.b16 %v1478
    %v1834 = vunpack.c.l.b16 %v1479
    %v1835 = vunpack.c.h.b16 %v1479
    %v1836 = vunpack.c.l.b16 %v1480
    %v1837 = vunpack.c.h.b16 %v1480
    %v1838 = vunpack.c.l.b16 %v1481
    %v1839 = vunpack.c.h.b16 %v1481
    %v1840 = vunpack.c.l.b16 %v1482
    %v1841 = vunpack.c.h.b16 %v1482
    %v1842 = vunpack.c.l.b16 %v1483
    %v1843 = vunpack.c.h.b16 %v1483
    %v1844 = vunpack.c.l.b16 %v1484
    %v1845 = vunpack.c.h.b16 %v1484
    %v1846 = vunpack.c.l.b16 %v1485
    %v1847 = vunpack.c.h.b16 %v1485
    %v1848 = vunpack.c.l.b16 %v1486
    %v1849 = vunpack.c.h.b16 %v1486
    %v1850 = vunpack.c.l.b16 %v1487
    %v1851 = vunpack.c.h.b16 %v1487
    %v1852 = vunpack.c.l.b16 %v1488
    %v1853 = vunpack.c.h.b16 %v1488
    %v1854 = vunpack.c.l.b16 %v1489
    %v1855 = vunpack.c.h.b16 %v1489
    %v1856 = vunpack.c.l.b16 %v1490
    %v1857 = vunpack.c.h.b16 %v1490
    %v1858 = vunpack.c.l.b16 %v1491
    %v1859 = vunpack.c.h.b16 %v1491
    %v1860 = vunpack.c.l.b16 %v1492
    %v1861 = vunpack.c.h.b16 %v1492
    %v1862 = vunpack.c.l.b16 %v1493
    %v1863 = vunpack.c.h.b16 %v1493
    %v1864 = vunpack.c.l.b16 %v1494
    %v1865 = vunpack.c.h.b16 %v1494
    %v1866 = vunpack.c.l.b16 %v1495
    %v1867 = vunpack.c.h.b16 %v1495
    %v1868 = vunpack.c.l.b16 %v1496
    %v1869 = vunpack.c.h.b16 %v1496
    %v1870 = vunpack.c.l.b16 %v1497
    %v1871 = vunpack.c.h.b16 %v1497
    %v1872 = vunpack.c.l.b16 %v1498
    %v1873 = vunpack.c.h.b16 %v1498
    %v1874 = vunpack.c.l.b16 %v1499
    %v1875 = vunpack.c.h.b16 %v1499
    %v1876 = vunpack.c.l.b16 %v1500
    %v1877 = vunpack.c.h.b16 %v1500
    %v1878 = vunpack.c.l.b16 %v1501
    %v1879 = vunpack.c.h.b16 %v1501
    %v1880 = vunpack.c.l.b16 %v1502
    %v1881 = vunpack.c.h.b16 %v1502
    %v1882 = vunpack.c.l.b16 %v1503
    %v1883 = vunpack.c.h.b16 %v1503
    %v1884 = vunpack.c.l.b16 %v1504
    %v1885 = vunpack.c.h.b16 %v1504
    %v1886 = vunpack.c.l.b16 %v1505
    %v1887 = vunpack.c.h.b16 %v1505
    %v1888 = vunpack.c.l.b16 %v1506
    %v1889 = vunpack.c.h.b16 %v1506
    %v1890 = vunpack.c.l.b16 %v1507
    %v1891 = vunpack.c.h.b16 %v1507
    %v1892 = vunpack.c.l.b16 %v1508
    %v1893 = vunpack.c.h.b16 %v1508
    %v1894 = vunpack.c.l.b16 %v1509
    %v1895 = vunpack.c.h.b16 %v1509
    %v1896 = vunpack.c.l.b16 %v1510
    %v1897 = vunpack.c.h.b16 %v1510
    %v1898 = vunpack.c.l.b16 %v1511
    %v1899 = vunpack.c.h.b16 %v1511
    %v1900 = vunpack.c.l.b16 %v1512
    %v1901 = vunpack.c.h.b16 %v1512
    %v1902 = vunpack.c.l.b16 %v1513
    %v1903 = vunpack.c.h.b16 %v1513
    %v1904 = vunpack.c.l.b16 %v1514
    %v1905 = vunpack.c.h.b16 %v1514
    %v1906 = vunpack.c.l.b16 %v1515
    %v1907 = vunpack.c.h.b16 %v1515
    %v1908 = vunpack.c.l.b16 %v1516
    %v1909 = vunpack.c.h.b16 %v1516
    %v1910 = vunpack.c.l.b16 %v1517
    %v1911 = vunpack.c.h.b16 %v1517
    %v1912 = vunpack.c.l.b16 %v1518
    %v1913 = vunpack.c.h.b16 %v1518
    %v1914 = vunpack.c.l.b16 %v1519
    %v1915 = vunpack.c.h.b16 %v1519
    %v1916 = vunpack.c.l.b16 %v1520
    %v1917 = vunpack.c.h.b16 %v1520
    %v1918 = vunpack.c.l.b16 %v1521
    %v1919 = vunpack.c.h.b16 %v1521
    %v1920 = vunpack.c.l.b16 %v1522
    %v1921 = vunpack.c.h.b16 %v1522
    %v1922 = vunpack.c.l.b16 %v1523
    %v1923 = vunpack.c.h.b16 %v1523
    %v1924 = vunpack.c.l.b16 %v1524
    %v1925 = vunpack.c.h.b16 %v1524
    %v1926 = vunpack.c.l.b16 %v1525
    %v1927 = vunpack.c.h.b16 %v1525
    %v1928 = vunpack.c.l.b16 %v1526
    %v1929 = vunpack.c.h.b16 %v1526
    %v1930 = vunpack.c.l.b16 %v1527
    %v1931 = vunpack.c.h.b16 %v1527
    %v1932 = vunpack.c.l.b16 %v1528
    %v1933 = vunpack.c.h.b16 %v1528
    %v1934 = vunpack.c.l.b16 %v1529
    %v1935 = vunpack.c.h.b16 %v1529
    %v1936 = vunpack.c.l.b16 %v1530
    %v1937 = vunpack.c.h.b16 %v1530
    %v1938 = vunpack.c.l.b16 %v1531
    %v1939 = vunpack.c.h.b16 %v1531
    %v1940 = vunpack.c.l.b16 %v1532
    %v1941 = vunpack.c.h.b16 %v1532
    %v1942 = vunpack.c.l.b16 %v1533
    %v1943 = vunpack.c.h.b16 %v1533
    %v1944 = vpack.c.b16 %v1692, %v1688
    %v1945 = vpack.c.b16 %v1693, %v1689
    %v1946 = vpack.c.b16 %v1694, %v1690
    %v1947 = vpack.c.b16 %v1695, %v1691
    %v1948 = vpack.c.b16 %v1700, %v1696
    %v1949 = vpack.c.b16 %v1701, %v1697
    %v1950 = vpack.c.b16 %v1702, %v1698
    %v1951 = vpack.c.b16 %v1703, %v1699
    %v1952 = vpack.c.b16 %v1708, %v1704
    %v1953 = vpack.c.b16 %v1709, %v1705
    %v1954 = vpack.c.b16 %v1710, %v1706
    %v1955 = vpack.c.b16 %v1711, %v1707
    %v1956 = vpack.c.b16 %v1716, %v1712
    %v1957 = vpack.c.b16 %v1717, %v1713
    %v1958 = vpack.c.b16 %v1718, %v1714
    %v1959 = vpack.c.b16 %v1719, %v1715
    %v1960 = vpack.c.b16 %v1724, %v1720
    %v1961 = vpack.c.b16 %v1725, %v1721
    %v1962 = vpack.c.b16 %v1726, %v1722
    %v1963 = vpack.c.b16 %v1727, %v1723
    %v1964 = vpack.c.b16 %v1732, %v1728
    %v1965 = vpack.c.b16 %v1733, %v1729
    %v1966 = vpack.c.b16 %v1734, %v1730
    %v1967 = vpack.c.b16 %v1735, %v1731
    %v1968 = vpack.c.b16 %v1740, %v1736
    %v1969 = vpack.c.b16 %v1741, %v1737
    %v1970 = vpack.c.b16 %v1742, %v1738
    %v1971 = vpack.c.b16 %v1743, %v1739
    %v1972 = vpack.c.b16 %v1748, %v1744
    %v1973 = vpack.c.b16 %v1749, %v1745
    %v1974 = vpack.c.b16 %v1750, %v1746
    %v1975 = vpack.c.b16 %v1751, %v1747
    %v1976 = vpack.c.b16 %v1756, %v1752
    %v1977 = vpack.c.b16 %v1757, %v1753
    %v1978 = vpack.c.b16 %v1758, %v1754
    %v1979 = vpack.c.b16 %v1759, %v1755
    %v1980 = vpack.c.b16 %v1764, %v1760
    %v1981 = vpack.c.b16 %v1765, %v1761
    %v1982 = vpack.c.b16 %v1766, %v1762
    %v1983 = vpack.c.b16 %v1767, %v1763
    %v1984 = vpack.c.b16 %v1772, %v1768
    %v1985 = vpack.c.b16 %v1773, %v1769
    %v1986 = vpack.c.b16 %v1774, %v1770
    %v1987 = vpack.c.b16 %v1775, %v1771
    %v1988 = vpack.c.b16 %v1780, %v1776
    %v1989 = vpack.c.b16 %v1781, %v1777
    %v1990 = vpack.c.b16 %v1782, %v1778
    %v1991 = vpack.c.b16 %v1783, %v1779
    %v1992 = vpack.c.b16 %v1788, %v1784
    %v1993 = vpack.c.b16 %v1789, %v1785
    %v1994 = vpack.c.b16 %v1790, %v1786
    %v1995 = vpack.c.b16 %v1791, %v1787
    %v1996 = vpack.c.b16 %v1796, %v1792
    %v1997 = vpack.c.b16 %v1797, %v1793
    %v1998 = vpack.c.b16 %v1798, %v1794
    %v1999 = vpack.c.b16 %v1799, %v1795
    %v2000 = vpack.c.b16 %v1804, %v1800
    %v2001 = vpack.c.b16 %v1805, %v1801
    %v2002 = vpack.c.b16 %v1806, %v1802
    %v2003 = vpack.c.b16 %v1807, %v1803
    %v2004 = vpack.c.b16 %v1812, %v1808
    %v2005 = vpack.c.b16 %v1813, %v1809
    %v2006 = vpack.c.b16 %v1814, %v1810
    %v2007 = vpack.c.b16 %v1815, %v1811
    %v2008 = vpack.c.b16 %v1820, %v1816
    %v2009 = vpack.c.b16 %v1821, %v1817
    %v2010 = vpack.c.b16 %v1822, %v1818
    %v2011 = vpack.c.b16 %v1823, %v1819
    %v2012 = vpack.c.b16 %v1828, %v1824
    %v2013 = vpack.c.b16 %v1829, %v1825
    %v2014 = vpack.c.b16 %v1830, %v1826
    %v2015 = vpack.c.b16 %v1831, %v1827
    %v2016 = vpack.c.b16 %v1836, %v1832
    %v2017 = vpack.c.b16 %v1837, %v1833
    %v2018 = vpack.c.b16 %v1838, %v1834
    %v2019 = vpack.c.b16 %v1839, %v1835
    %v2020 = vpack.c.b16 %v1844, %v1840
    %v2021 = vpack.c.b16 %v1845, %v1841
    %v2022 = vpack.c.b16 %v1846, %v1842
    %v2023 = vpack.c.b16 %v1847, %v1843
    %v2024 = vpack.c.b16 %v1852, %v1848
    %v2025 = vpack.c.b16 %v1853, %v1849
    %v2026 = vpack.c.b16 %v1854, %v1850
    %v2027 = vpack.c.b16 %v1855, %v1851
    %v2028 = vpack.c.b16 %v1860, %v1856
    %v2029 = vpack.c.b16 %v1861, %v1857
    %v2030 = vpack.c.b16 %v1862, %v1858
    %v2031 = vpack.c.b16 %v1863, %v1859
    %v2032 = vpack.c.b16 %v1868, %v1864
    %v2033 = vpack.c.b16 %v1869, %v1865
    %v2034 = vpack.c.b16 %v1870, %v1866
    %v2035 = vpack.c.b16 %v1871, %v1867
    %v2036 = vpack.c.b16 %v1876, %v1872
    %v2037 = vpack.c.b16 %v1877, %v1873
    %v2038 = vpack.c.b16 %v1878, %v1874
    %v2039 = vpack.c.b16 %v1879, %v1875
    %v2040 = vpack.c.b16 %v1884, %v1880
    %v2041 = vpack.c.b16 %v1885, %v1881
    %v2042 = vpack.c.b16 %v1886, %v1882
    %v2043 = vpack.c.b16 %v1887, %v1883
    %v2044 = vpack.c.b16 %v1892, %v1888
    %v2045 = vpack.c.b16 %v1893, %v1889
    %v2046 = vpack.c.b16 %v1894, %v1890
    %v2047 = vpack.c.b16 %v1895, %v1891
    %v2048 = vpack.c.b16 %v1900, %v1896
    %v2049 = vpack.c.b16 %v1901, %v1897
    %v2050 = vpack.c.b16 %v1902, %v1898
    %v2051 = vpack.c.b16 %v1903, %v1899
    %v2052 = vpack.c.b16 %v1908, %v1904
    %v2053 = vpack.c.b16 %v1909, %v1905
    %v2054 = vpack.c.b16 %v1910, %v1906
    %v2055 = vpack.c.b16 %v1911, %v1907
    %v2056 = vpack.c.b16 %v1916, %v1912
    %v2057 = vpack.c.b16 %v1917, %v1913
    %v2058 = vpack.c.b16 %v1918, %v1914
    %v2059 = vpack.c.b16 %v1919, %v1915
    %v2060 = vpack.c.b16 %v1924, %v1920
    %v2061 = vpack.c.b16 %v1925, %v1921
    %v2062 = vpack.c.b16 %v1926, %v1922
    %v2063 = vpack.c.b16 %v1927, %v1923
    %v2064 = vpack.c.b16 %v1932, %v1928
    %v2065 = vpack.c.b16 %v1933, %v1929
    %v2066 = vpack.c.b16 %v1934, %v1930
    %v2067 = vpack.c.b16 %v1935, %v1931
    %v2068 = vpack.c.b16 %v1940, %v1936
    %v2069 = vpack.c.b16 %v1941, %v1937
    %v2070 = vpack.c.b16 %v1942, %v1938
    %v2071 = vpack.c.b16 %v1943, %v1939
    %2200 = vmatprep.subr.bf16.mxu0 %v1973
    %2201 = vmatpush1.bf16.msra.mxu0 %v1972
    %2202 = vmatprep.subr.bf16.mxu0 %v1969
    %2203 = vmatpush1.bf16.msra.mxu0 %v1968
    %2204 = vmatprep.subr.bf16.mxu0 %v1965
    %2205 = vmatpush1.bf16.msra.mxu0 %v1964
    %2206 = vmatprep.subr.bf16.mxu0 %v1961
    %2207 = vmatpush1.bf16.msra.mxu0 %v1960
    %2208 = vmatprep.subr.bf16.mxu0 %v1957
    %2209 = vmatpush1.bf16.msra.mxu0 %v1956
    %2210 = vmatprep.subr.bf16.mxu0 %v1953
    %2211 = vmatpush1.bf16.msra.mxu0 %v1952
    %2212 = vmatprep.subr.bf16.mxu0 %v1949
    %2213 = vmatpush1.bf16.msra.mxu0 %v1948
    %2214 = vmatprep.subr.bf16.mxu0 %v1945
    %2215 = vmatpush1.bf16.msra.mxu0 %v1944
    %2216 = vmatprep.subr.bf16.mxu0 %v2005
    %2217 = vmatpush2.bf16.msra.mxu0 %v2004
    %2218 = vmatprep.subr.bf16.mxu0 %v2001
    %2219 = vmatpush2.bf16.msra.mxu0 %v2000
    %2220 = vmatprep.subr.bf16.mxu0 %v1997
    %2221 = vmatpush2.bf16.msra.mxu0 %v1996
    %2222 = vmatprep.subr.bf16.mxu0 %v1993
    %2223 = vmatpush2.bf16.msra.mxu0 %v1992
    %2224 = vmatprep.subr.bf16.mxu0 %v1989
    %2225 = vmatpush2.bf16.msra.mxu0 %v1988
    %2226 = vmatprep.subr.bf16.mxu0 %v1985
    %2227 = vmatpush2.bf16.msra.mxu0 %v1984
    %2228 = vmatprep.subr.bf16.mxu0 %v1981
    %2229 = vmatpush2.bf16.msra.mxu0 %v1980
    %2230 = vmatprep.subr.bf16.mxu0 %v1977
    %2231 = vmatpush2.bf16.msra.mxu0 %v1976
    %2232 = vmatprep.mubr.bf16.mxu0 %v1536
    %2233 = vmatmul.mubr.bf16.gmra.mxu0 %v1535
    %v2234 = vpop.f32.mrf.mxu0
    %v2235 = vadd.f32 %v1543, %v2234
    %v2236 = vpop.f32.mrf.mxu0
    %v2237 = vadd.f32 %v1547, %v2236
    %v2238 = vpop.f32.mrf.mxu0
    %v2239 = vpop.f32.mrf.mxu0
    %2240 = vdwg.mxu0
    %2241 = vmatprep.subr.bf16.mxu0 %v2037
    %2242 = vmatpush1.bf16.msra.mxu0 %v2036
    %2243 = vmatprep.subr.bf16.mxu0 %v2033
    %2244 = vmatpush1.bf16.msra.mxu0 %v2032
    %2245 = vmatprep.subr.bf16.mxu0 %v2029
    %2246 = vmatpush1.bf16.msra.mxu0 %v2028
    %2247 = vmatprep.subr.bf16.mxu0 %v2025
    %2248 = vmatpush1.bf16.msra.mxu0 %v2024
    %2249 = vmatprep.subr.bf16.mxu0 %v2021
    %2250 = vmatpush1.bf16.msra.mxu0 %v2020
    %2251 = vmatprep.subr.bf16.mxu0 %v2017
    %2252 = vmatpush1.bf16.msra.mxu0 %v2016
    %2253 = vmatprep.subr.bf16.mxu0 %v2013
    %2254 = vmatpush1.bf16.msra.mxu0 %v2012
    %2255 = vmatprep.subr.bf16.mxu0 %v2009
    %2256 = vmatpush1.bf16.msra.mxu0 %v2008
    %2257 = vmatprep.subr.bf16.mxu0 %v2069
    %2258 = vmatpush2.bf16.msra.mxu0 %v2068
    %2259 = vmatprep.subr.bf16.mxu0 %v2065
    %2260 = vmatpush2.bf16.msra.mxu0 %v2064
    %2261 = vmatprep.subr.bf16.mxu0 %v2061
    %2262 = vmatpush2.bf16.msra.mxu0 %v2060
    %2263 = vmatprep.subr.bf16.mxu0 %v2057
    %2264 = vmatpush2.bf16.msra.mxu0 %v2056
    %2265 = vmatprep.subr.bf16.mxu0 %v2053
    %2266 = vmatpush2.bf16.msra.mxu0 %v2052
    %2267 = vmatprep.subr.bf16.mxu0 %v2049
    %2268 = vmatpush2.bf16.msra.mxu0 %v2048
    %2269 = vmatprep.subr.bf16.mxu0 %v2045
    %2270 = vmatpush2.bf16.msra.mxu0 %v2044
    %2271 = vmatprep.subr.bf16.mxu0 %v2041
    %2272 = vmatpush2.bf16.msra.mxu0 %v2040
    %2273 = vmatprep.mubr.bf16.mxu0 %v1538
    %2274 = vmatmul.mubr.bf16.gmra.mxu0 %v1537
    %v2275 = vpop.f32.mrf.mxu0
    %v2276 = vadd.f32 %v2235, %v2275
    %v2277 = vpop.f32.mrf.mxu0
    %v2278 = vadd.f32 %v2237, %v2277
    %v2279 = vpop.f32.mrf.mxu0
    %v2280 = vpop.f32.mrf.mxu0
    %2281 = vdwg.mxu0
    %2282 = vmatprep.subr.bf16.mxu0 %v1975
    %2283 = vmatpush1.bf16.msra.mxu0 %v1974
    %2284 = vmatprep.subr.bf16.mxu0 %v1971
    %2285 = vmatpush1.bf16.msra.mxu0 %v1970
    %2286 = vmatprep.subr.bf16.mxu0 %v1967
    %2287 = vmatpush1.bf16.msra.mxu0 %v1966
    %2288 = vmatprep.subr.bf16.mxu0 %v1963
    %2289 = vmatpush1.bf16.msra.mxu0 %v1962
    %2290 = vmatprep.subr.bf16.mxu0 %v1959
    %2291 = vmatpush1.bf16.msra.mxu0 %v1958
    %2292 = vmatprep.subr.bf16.mxu0 %v1955
    %2293 = vmatpush1.bf16.msra.mxu0 %v1954
    %2294 = vmatprep.subr.bf16.mxu0 %v1951
    %2295 = vmatpush1.bf16.msra.mxu0 %v1950
    %2296 = vmatprep.subr.bf16.mxu0 %v1947
    %2297 = vmatpush1.bf16.msra.mxu0 %v1946
    %2298 = vmatprep.subr.bf16.mxu0 %v2007
    %2299 = vmatpush2.bf16.msra.mxu0 %v2006
    %2300 = vmatprep.subr.bf16.mxu0 %v2003
    %2301 = vmatpush2.bf16.msra.mxu0 %v2002
    %2302 = vmatprep.subr.bf16.mxu0 %v1999
    %2303 = vmatpush2.bf16.msra.mxu0 %v1998
    %2304 = vmatprep.subr.bf16.mxu0 %v1995
    %2305 = vmatpush2.bf16.msra.mxu0 %v1994
    %2306 = vmatprep.subr.bf16.mxu0 %v1991
    %2307 = vmatpush2.bf16.msra.mxu0 %v1990
    %2308 = vmatprep.subr.bf16.mxu0 %v1987
    %2309 = vmatpush2.bf16.msra.mxu0 %v1986
    %2310 = vmatprep.subr.bf16.mxu0 %v1983
    %2311 = vmatpush2.bf16.msra.mxu0 %v1982
    %2312 = vmatprep.subr.bf16.mxu0 %v1979
    %2313 = vmatpush2.bf16.msra.mxu0 %v1978
    %2314 = vmatprep.mubr.bf16.mxu0 %v1536
    %2315 = vmatmul.mubr.bf16.gmra.mxu0 %v1535
    %v2316 = vpop.f32.mrf.mxu0
    %v2317 = vadd.f32 %v1551, %v2316
    %v2318 = vpop.f32.mrf.mxu0
    %v2319 = vadd.f32 %v1555, %v2318
    %v2320 = vpop.f32.mrf.mxu0
    %v2321 = vpop.f32.mrf.mxu0
    %2322 = vdwg.mxu0
    %2323 = vmatprep.subr.bf16.mxu0 %v2039
    %2324 = vmatpush1.bf16.msra.mxu0 %v2038
    %2325 = vmatprep.subr.bf16.mxu0 %v2035
    %2326 = vmatpush1.bf16.msra.mxu0 %v2034
    %2327 = vmatprep.subr.bf16.mxu0 %v2031
    %2328 = vmatpush1.bf16.msra.mxu0 %v2030
    %2329 = vmatprep.subr.bf16.mxu0 %v2027
    %2330 = vmatpush1.bf16.msra.mxu0 %v2026
    %2331 = vmatprep.subr.bf16.mxu0 %v2023
    %2332 = vmatpush1.bf16.msra.mxu0 %v2022
    %2333 = vmatprep.subr.bf16.mxu0 %v2019
    %2334 = vmatpush1.bf16.msra.mxu0 %v2018
    %2335 = vmatprep.subr.bf16.mxu0 %v2015
    %2336 = vmatpush1.bf16.msra.mxu0 %v2014
    %2337 = vmatprep.subr.bf16.mxu0 %v2011
    %2338 = vmatpush1.bf16.msra.mxu0 %v2010
    %2339 = vmatprep.subr.bf16.mxu0 %v2071
    %2340 = vmatpush2.bf16.msra.mxu0 %v2070
    %2341 = vmatprep.subr.bf16.mxu0 %v2067
    %2342 = vmatpush2.bf16.msra.mxu0 %v2066
    %2343 = vmatprep.subr.bf16.mxu0 %v2063
    %2344 = vmatpush2.bf16.msra.mxu0 %v2062
    %2345 = vmatprep.subr.bf16.mxu0 %v2059
    %2346 = vmatpush2.bf16.msra.mxu0 %v2058
    %2347 = vmatprep.subr.bf16.mxu0 %v2055
    %2348 = vmatpush2.bf16.msra.mxu0 %v2054
    %2349 = vmatprep.subr.bf16.mxu0 %v2051
    %2350 = vmatpush2.bf16.msra.mxu0 %v2050
    %2351 = vmatprep.subr.bf16.mxu0 %v2047
    %2352 = vmatpush2.bf16.msra.mxu0 %v2046
    %2353 = vmatprep.subr.bf16.mxu0 %v2043
    %2354 = vmatpush2.bf16.msra.mxu0 %v2042
    %2355 = vmatprep.mubr.bf16.mxu0 %v1538
    %2356 = vmatmul.mubr.bf16.gmra.mxu0 %v1537
    %v2357 = vpop.f32.mrf.mxu0
    %v2358 = vadd.f32 %v2317, %v2357
    %v2359 = vpop.f32.mrf.mxu0
    %v2360 = vadd.f32 %v2319, %v2359
    %v2361 = vpop.f32.mrf.mxu0
    %v2362 = vpop.f32.mrf.mxu0
    %2363 = vdwg.mxu0
    %v2364 = vmax.f32 %v2276, 0.0
    %v2365 = vmax.f32 %v2278, 0.0
    %v2366 = vmax.f32 %v2358, 0.0
    %v2367 = vmax.f32 %v2360, 0.0
    %v2368 = vld [vmem:[#allocation9] sm:$0xff]
    %v2369 = vld [vmem:[#allocation9 + $0x8] sm:$0xf]
    %v2370 = vld [vmem:[#allocation9 + $0xc] sm:$0xff]
    %v2371 = vld [vmem:[#allocation9 + $0x14] sm:$0xf]
    %v2372 = vld [vmem:[#allocation9 + $0x18] sm:$0xff]
    %v2373 = vld [vmem:[#allocation9 + $0x20] sm:$0xf]
    %v2374 = vld [vmem:[#allocation9 + $0x24] sm:$0xff]
    %v2375 = vld [vmem:[#allocation9 + $0x2c] sm:$0xf]
    %v2376 = vld [vmem:[#allocation9 + $0x30] sm:$0xff]
    %v2377 = vld [vmem:[#allocation9 + $0x38] sm:$0xf]
    %v2378 = vld [vmem:[#allocation9 + $0x3c] sm:$0xff]
    %v2379 = vld [vmem:[#allocation9 + $0x44] sm:$0xf]
    %v2380 = vld [vmem:[#allocation9 + $0x48] sm:$0xff]
    %v2381 = vld [vmem:[#allocation9 + $0x50] sm:$0xf]
    %v2382 = vld [vmem:[#allocation9 + $0x54] sm:$0xff]
    %v2383 = vld [vmem:[#allocation9 + $0x5c] sm:$0xf]
    %v2384 = vld [vmem:[#allocation9 + $0x60] sm:$0xff]
    %v2385 = vld [vmem:[#allocation9 + $0x68] sm:$0xf]
    %v2386 = vld [vmem:[#allocation9 + $0x6c] sm:$0xff]
    %v2387 = vld [vmem:[#allocation9 + $0x74] sm:$0xf]
    %v2388 = vld [vmem:[#allocation9 + $0x78] sm:$0xff]
    %v2389 = vld [vmem:[#allocation9 + $0x80] sm:$0xf]
    %v2390 = vld [vmem:[#allocation9 + $0x84] sm:$0xff]
    %v2391 = vld [vmem:[#allocation9 + $0x8c] sm:$0xf]
    %v2392 = vld [vmem:[#allocation9 + $0x90] sm:$0xff]
    %v2393 = vld [vmem:[#allocation9 + $0x98] sm:$0xf]
    %v2394 = vld [vmem:[#allocation9 + $0x9c] sm:$0xff]
    %v2395 = vld [vmem:[#allocation9 + $0xa4] sm:$0xf]
    %v2396 = vld [vmem:[#allocation9 + $0xa8] sm:$0xff]
    %v2397 = vld [vmem:[#allocation9 + $0xb0] sm:$0xf]
    %v2398 = vld [vmem:[#allocation9 + $0xb4] sm:$0xff]
    %v2399 = vld [vmem:[#allocation9 + $0xbc] sm:$0xf]
    %v2400 = vld [vmem:[#allocation9 + $0xc0] sm:$0xff]
    %v2401 = vld [vmem:[#allocation9 + $0xc8] sm:$0xf]
    %v2402 = vld [vmem:[#allocation9 + $0xcc] sm:$0xff]
    %v2403 = vld [vmem:[#allocation9 + $0xd4] sm:$0xf]
    %v2404 = vld [vmem:[#allocation9 + $0xd8] sm:$0xff]
    %v2405 = vld [vmem:[#allocation9 + $0xe0] sm:$0xf]
    %v2406 = vld [vmem:[#allocation9 + $0xe4] sm:$0xff]
    %v2407 = vld [vmem:[#allocation9 + $0xec] sm:$0xf]
    %v2408 = vld [vmem:[#allocation9 + $0xf0] sm:$0xff]
    %v2409 = vld [vmem:[#allocation9 + $0xf8] sm:$0xf]
    %v2410 = vld [vmem:[#allocation9 + $0xfc] sm:$0xff]
    %v2411 = vld [vmem:[#allocation9 + $0x104] sm:$0xf]
    %v2412 = vld [vmem:[#allocation9 + $0x108] sm:$0xff]
    %v2413 = vld [vmem:[#allocation9 + $0x110] sm:$0xf]
    %v2414 = vld [vmem:[#allocation9 + $0x114] sm:$0xff]
    %v2415 = vld [vmem:[#allocation9 + $0x11c] sm:$0xf]
    %v2416 = vld [vmem:[#allocation9 + $0x120] sm:$0xff]
    %v2417 = vld [vmem:[#allocation9 + $0x128] sm:$0xf]
    %v2418 = vld [vmem:[#allocation9 + $0x12c] sm:$0xff]
    %v2419 = vld [vmem:[#allocation9 + $0x134] sm:$0xf]
    %v2420 = vld [vmem:[#allocation9 + $0x138] sm:$0xff]
    %v2421 = vld [vmem:[#allocation9 + $0x140] sm:$0xf]
    %v2422 = vld [vmem:[#allocation9 + $0x144] sm:$0xff]
    %v2423 = vld [vmem:[#allocation9 + $0x14c] sm:$0xf]
    %v2424 = vld [vmem:[#allocation9 + $0x150] sm:$0xff]
    %v2425 = vld [vmem:[#allocation9 + $0x158] sm:$0xf]
    %v2426 = vld [vmem:[#allocation9 + $0x15c] sm:$0xff]
    %v2427 = vld [vmem:[#allocation9 + $0x164] sm:$0xf]
    %v2428 = vld [vmem:[#allocation9 + $0x168] sm:$0xff]
    %v2429 = vld [vmem:[#allocation9 + $0x170] sm:$0xf]
    %v2430 = vld [vmem:[#allocation9 + $0x174] sm:$0xff]
    %v2431 = vld [vmem:[#allocation9 + $0x17c] sm:$0xf]
    %v2432 = vld [vmem:[#allocation9 + $0x180] sm:$0xff]
    %v2433 = vld [vmem:[#allocation9 + $0x188] sm:$0xf]
    %v2434 = vld [vmem:[#allocation9 + $0x18c] sm:$0xff]
    %v2435 = vld [vmem:[#allocation9 + $0x194] sm:$0xf]
    %v2436 = vld [vmem:[#allocation9 + $0x198] sm:$0xff]
    %v2437 = vld [vmem:[#allocation9 + $0x1a0] sm:$0xf]
    %v2438 = vld [vmem:[#allocation9 + $0x1a4] sm:$0xff]
    %v2439 = vld [vmem:[#allocation9 + $0x1ac] sm:$0xf]
    %v2440 = vld [vmem:[#allocation9 + $0x1b0] sm:$0xff]
    %v2441 = vld [vmem:[#allocation9 + $0x1b8] sm:$0xf]
    %v2442 = vld [vmem:[#allocation9 + $0x1bc] sm:$0xff]
    %v2443 = vld [vmem:[#allocation9 + $0x1c4] sm:$0xf]
    %v2444 = vld [vmem:[#allocation9 + $0x1c8] sm:$0xff]
    %v2445 = vld [vmem:[#allocation9 + $0x1d0] sm:$0xf]
    %v2446 = vld [vmem:[#allocation9 + $0x1d4] sm:$0xff]
    %v2447 = vld [vmem:[#allocation9 + $0x1dc] sm:$0xf]
    %v2448 = vld [vmem:[#allocation9 + $0x1e0] sm:$0xff]
    %v2449 = vld [vmem:[#allocation9 + $0x1e8] sm:$0xf]
    %v2450 = vld [vmem:[#allocation9 + $0x1ec] sm:$0xff]
    %v2451 = vld [vmem:[#allocation9 + $0x1f4] sm:$0xf]
    %v2452 = vld [vmem:[#allocation9 + $0x1f8] sm:$0xff]
    %v2453 = vld [vmem:[#allocation9 + $0x200] sm:$0xf]
    %v2454 = vld [vmem:[#allocation9 + $0x204] sm:$0xff]
    %v2455 = vld [vmem:[#allocation9 + $0x20c] sm:$0xf]
    %v2456 = vld [vmem:[#allocation9 + $0x210] sm:$0xff]
    %v2457 = vld [vmem:[#allocation9 + $0x218] sm:$0xf]
    %v2458 = vld [vmem:[#allocation9 + $0x21c] sm:$0xff]
    %v2459 = vld [vmem:[#allocation9 + $0x224] sm:$0xf]
    %v2460 = vld [vmem:[#allocation9 + $0x228] sm:$0xff]
    %v2461 = vld [vmem:[#allocation9 + $0x230] sm:$0xf]
    %v2462 = vld [vmem:[#allocation9 + $0x234] sm:$0xff]
    %v2463 = vld [vmem:[#allocation9 + $0x23c] sm:$0xf]
    %v2464 = vld [vmem:[#allocation9 + $0x240] sm:$0xff]
    %v2465 = vld [vmem:[#allocation9 + $0x248] sm:$0xf]
    %v2466 = vld [vmem:[#allocation9 + $0x24c] sm:$0xff]
    %v2467 = vld [vmem:[#allocation9 + $0x254] sm:$0xf]
    %v2468 = vld [vmem:[#allocation9 + $0x258] sm:$0xff]
    %v2469 = vld [vmem:[#allocation9 + $0x260] sm:$0xf]
    %v2470 = vld [vmem:[#allocation9 + $0x264] sm:$0xff]
    %v2471 = vld [vmem:[#allocation9 + $0x26c] sm:$0xf]
    %v2472 = vld [vmem:[#allocation9 + $0x270] sm:$0xff]
    %v2473 = vld [vmem:[#allocation9 + $0x278] sm:$0xf]
    %v2474 = vld [vmem:[#allocation9 + $0x27c] sm:$0xff]
    %v2475 = vld [vmem:[#allocation9 + $0x284] sm:$0xf]
    %v2476 = vld [vmem:[#allocation9 + $0x288] sm:$0xff]
    %v2477 = vld [vmem:[#allocation9 + $0x290] sm:$0xf]
    %v2478 = vld [vmem:[#allocation9 + $0x294] sm:$0xff]
    %v2479 = vld [vmem:[#allocation9 + $0x29c] sm:$0xf]
    %v2480 = vld [vmem:[#allocation9 + $0x2a0] sm:$0xff]
    %v2481 = vld [vmem:[#allocation9 + $0x2a8] sm:$0xf]
    %v2482 = vld [vmem:[#allocation9 + $0x2ac] sm:$0xff]
    %v2483 = vld [vmem:[#allocation9 + $0x2b4] sm:$0xf]
    %v2484 = vld [vmem:[#allocation9 + $0x2b8] sm:$0xff]
    %v2485 = vld [vmem:[#allocation9 + $0x2c0] sm:$0xf]
    %v2486 = vld [vmem:[#allocation9 + $0x2c4] sm:$0xff]
    %v2487 = vld [vmem:[#allocation9 + $0x2cc] sm:$0xf]
    %v2488 = vld [vmem:[#allocation9 + $0x2d0] sm:$0xff]
    %v2489 = vld [vmem:[#allocation9 + $0x2d8] sm:$0xf]
    %v2490 = vld [vmem:[#allocation9 + $0x2dc] sm:$0xff]
    %v2491 = vld [vmem:[#allocation9 + $0x2e4] sm:$0xf]
    %v2492 = vld [vmem:[#allocation9 + $0x2e8] sm:$0xff]
    %v2493 = vld [vmem:[#allocation9 + $0x2f0] sm:$0xf]
    %v2494 = vld [vmem:[#allocation9 + $0x2f4] sm:$0xff]
    %v2495 = vld [vmem:[#allocation9 + $0x2fc] sm:$0xf]
    %v2496 = vld [vmem:[%s10] sm:$0x7]
    %v2497 = vpack.c.bf16 %v2364, %v2364
    %v2498 = vpack.c.bf16 %v2365, %v2365
    %v2499 = vpack.c.bf16 %v2366, %v2366
    %v2500 = vpack.c.bf16 %v2367, %v2367
    %v2502 = vlaneseq
    %v2503 = vshrl.u32 %v2502, 7
    %v2504 = vsub.s32 0, %v2503
    %v2505 = vrot.slane %v2496, %v2504
    %v2506 = vlaneseq
    %v2507 = vshrl.u32 %v2506, 7
    %v2508 = vsub.s32 1, %v2507
    %v2509 = vrot.slane %v2496, %v2508
    %v2510 = vlaneseq
    %v2511 = vshrl.u32 %v2510, 7
    %v2512 = vsub.s32 2, %v2511
    %v2513 = vrot.slane %v2496, %v2512
    %v2645 = vunpack.c.l.b16 %v2368
    %v2646 = vunpack.c.h.b16 %v2368
    %v2647 = vunpack.c.l.b16 %v2369
    %v2648 = vunpack.c.l.b16 %v2370
    %v2649 = vunpack.c.h.b16 %v2370
    %v2650 = vunpack.c.l.b16 %v2371
    %v2651 = vunpack.c.l.b16 %v2372
    %v2652 = vunpack.c.h.b16 %v2372
    %v2653 = vunpack.c.l.b16 %v2373
    %v2654 = vunpack.c.l.b16 %v2374
    %v2655 = vunpack.c.h.b16 %v2374
    %v2656 = vunpack.c.l.b16 %v2375
    %v2657 = vunpack.c.l.b16 %v2376
    %v2658 = vunpack.c.h.b16 %v2376
    %v2659 = vunpack.c.l.b16 %v2377
    %v2660 = vunpack.c.l.b16 %v2378
    %v2661 = vunpack.c.h.b16 %v2378
    %v2662 = vunpack.c.l.b16 %v2379
    %v2663 = vunpack.c.l.b16 %v2380
    %v2664 = vunpack.c.h.b16 %v2380
    %v2665 = vunpack.c.l.b16 %v2381
    %v2666 = vunpack.c.l.b16 %v2382
    %v2667 = vunpack.c.h.b16 %v2382
    %v2668 = vunpack.c.l.b16 %v2383
    %v2669 = vunpack.c.l.b16 %v2384
    %v2670 = vunpack.c.h.b16 %v2384
    %v2671 = vunpack.c.l.b16 %v2385
    %v2672 = vunpack.c.l.b16 %v2386
    %v2673 = vunpack.c.h.b16 %v2386
    %v2674 = vunpack.c.l.b16 %v2387
    %v2675 = vunpack.c.l.b16 %v2388
    %v2676 = vunpack.c.h.b16 %v2388
    %v2677 = vunpack.c.l.b16 %v2389
    %v2678 = vunpack.c.l.b16 %v2390
    %v2679 = vunpack.c.h.b16 %v2390
    %v2680 = vunpack.c.l.b16 %v2391
    %v2681 = vunpack.c.l.b16 %v2392
    %v2682 = vunpack.c.h.b16 %v2392
    %v2683 = vunpack.c.l.b16 %v2393
    %v2684 = vunpack.c.l.b16 %v2394
    %v2685 = vunpack.c.h.b16 %v2394
    %v2686 = vunpack.c.l.b16 %v2395
    %v2687 = vunpack.c.l.b16 %v2396
    %v2688 = vunpack.c.h.b16 %v2396
    %v2689 = vunpack.c.l.b16 %v2397
    %v2690 = vunpack.c.l.b16 %v2398
    %v2691 = vunpack.c.h.b16 %v2398
    %v2692 = vunpack.c.l.b16 %v2399
    %v2693 = vunpack.c.l.b16 %v2400
    %v2694 = vunpack.c.h.b16 %v2400
    %v2695 = vunpack.c.l.b16 %v2401
    %v2696 = vunpack.c.l.b16 %v2402
    %v2697 = vunpack.c.h.b16 %v2402
    %v2698 = vunpack.c.l.b16 %v2403
    %v2699 = vunpack.c.l.b16 %v2404
    %v2700 = vunpack.c.h.b16 %v2404
    %v2701 = vunpack.c.l.b16 %v2405
    %v2702 = vunpack.c.l.b16 %v2406
    %v2703 = vunpack.c.h.b16 %v2406
    %v2704 = vunpack.c.l.b16 %v2407
    %v2705 = vunpack.c.l.b16 %v2408
    %v2706 = vunpack.c.h.b16 %v2408
    %v2707 = vunpack.c.l.b16 %v2409
    %v2708 = vunpack.c.l.b16 %v2410
    %v2709 = vunpack.c.h.b16 %v2410
    %v2710 = vunpack.c.l.b16 %v2411
    %v2711 = vunpack.c.l.b16 %v2412
    %v2712 = vunpack.c.h.b16 %v2412
    %v2713 = vunpack.c.l.b16 %v2413
    %v2714 = vunpack.c.l.b16 %v2414
    %v2715 = vunpack.c.h.b16 %v2414
    %v2716 = vunpack.c.l.b16 %v2415
    %v2717 = vunpack.c.l.b16 %v2416
    %v2718 = vunpack.c.h.b16 %v2416
    %v2719 = vunpack.c.l.b16 %v2417
    %v2720 = vunpack.c.l.b16 %v2418
    %v2721 = vunpack.c.h.b16 %v2418
    %v2722 = vunpack.c.l.b16 %v2419
    %v2723 = vunpack.c.l.b16 %v2420
    %v2724 = vunpack.c.h.b16 %v2420
    %v2725 = vunpack.c.l.b16 %v2421
    %v2726 = vunpack.c.l.b16 %v2422
    %v2727 = vunpack.c.h.b16 %v2422
    %v2728 = vunpack.c.l.b16 %v2423
    %v2729 = vunpack.c.l.b16 %v2424
    %v2730 = vunpack.c.h.b16 %v2424
    %v2731 = vunpack.c.l.b16 %v2425
    %v2732 = vunpack.c.l.b16 %v2426
    %v2733 = vunpack.c.h.b16 %v2426
    %v2734 = vunpack.c.l.b16 %v2427
    %v2735 = vunpack.c.l.b16 %v2428
    %v2736 = vunpack.c.h.b16 %v2428
    %v2737 = vunpack.c.l.b16 %v2429
    %v2738 = vunpack.c.l.b16 %v2430
    %v2739 = vunpack.c.h.b16 %v2430
    %v2740 = vunpack.c.l.b16 %v2431
    %v2741 = vunpack.c.l.b16 %v2432
    %v2742 = vunpack.c.h.b16 %v2432
    %v2743 = vunpack.c.l.b16 %v2433
    %v2744 = vunpack.c.l.b16 %v2434
    %v2745 = vunpack.c.h.b16 %v2434
    %v2746 = vunpack.c.l.b16 %v2435
    %v2747 = vunpack.c.l.b16 %v2436
    %v2748 = vunpack.c.h.b16 %v2436
    %v2749 = vunpack.c.l.b16 %v2437
    %v2750 = vunpack.c.l.b16 %v2438
    %v2751 = vunpack.c.h.b16 %v2438
    %v2752 = vunpack.c.l.b16 %v2439
    %v2753 = vunpack.c.l.b16 %v2440
    %v2754 = vunpack.c.h.b16 %v2440
    %v2755 = vunpack.c.l.b16 %v2441
    %v2756 = vunpack.c.l.b16 %v2442
    %v2757 = vunpack.c.h.b16 %v2442
    %v2758 = vunpack.c.l.b16 %v2443
    %v2759 = vunpack.c.l.b16 %v2444
    %v2760 = vunpack.c.h.b16 %v2444
    %v2761 = vunpack.c.l.b16 %v2445
    %v2762 = vunpack.c.l.b16 %v2446
    %v2763 = vunpack.c.h.b16 %v2446
    %v2764 = vunpack.c.l.b16 %v2447
    %v2765 = vunpack.c.l.b16 %v2448
    %v2766 = vunpack.c.h.b16 %v2448
    %v2767 = vunpack.c.l.b16 %v2449
    %v2768 = vunpack.c.l.b16 %v2450
    %v2769 = vunpack.c.h.b16 %v2450
    %v2770 = vunpack.c.l.b16 %v2451
    %v2771 = vunpack.c.l.b16 %v2452
    %v2772 = vunpack.c.h.b16 %v2452
    %v2773 = vunpack.c.l.b16 %v2453
    %v2774 = vunpack.c.l.b16 %v2454
    %v2775 = vunpack.c.h.b16 %v2454
    %v2776 = vunpack.c.l.b16 %v2455
    %v2777 = vunpack.c.l.b16 %v2456
    %v2778 = vunpack.c.h.b16 %v2456
    %v2779 = vunpack.c.l.b16 %v2457
    %v2780 = vunpack.c.l.b16 %v2458
    %v2781 = vunpack.c.h.b16 %v2458
    %v2782 = vunpack.c.l.b16 %v2459
    %v2783 = vunpack.c.l.b16 %v2460
    %v2784 = vunpack.c.h.b16 %v2460
    %v2785 = vunpack.c.l.b16 %v2461
    %v2786 = vunpack.c.l.b16 %v2462
    %v2787 = vunpack.c.h.b16 %v2462
    %v2788 = vunpack.c.l.b16 %v2463
    %v2789 = vunpack.c.l.b16 %v2464
    %v2790 = vunpack.c.h.b16 %v2464
    %v2791 = vunpack.c.l.b16 %v2465
    %v2792 = vunpack.c.l.b16 %v2466
    %v2793 = vunpack.c.h.b16 %v2466
    %v2794 = vunpack.c.l.b16 %v2467
    %v2795 = vunpack.c.l.b16 %v2468
    %v2796 = vunpack.c.h.b16 %v2468
    %v2797 = vunpack.c.l.b16 %v2469
    %v2798 = vunpack.c.l.b16 %v2470
    %v2799 = vunpack.c.h.b16 %v2470
    %v2800 = vunpack.c.l.b16 %v2471
    %v2801 = vunpack.c.l.b16 %v2472
    %v2802 = vunpack.c.h.b16 %v2472
    %v2803 = vunpack.c.l.b16 %v2473
    %v2804 = vunpack.c.l.b16 %v2474
    %v2805 = vunpack.c.h.b16 %v2474
    %v2806 = vunpack.c.l.b16 %v2475
    %v2807 = vunpack.c.l.b16 %v2476
    %v2808 = vunpack.c.h.b16 %v2476
    %v2809 = vunpack.c.l.b16 %v2477
    %v2810 = vunpack.c.l.b16 %v2478
    %v2811 = vunpack.c.h.b16 %v2478
    %v2812 = vunpack.c.l.b16 %v2479
    %v2813 = vunpack.c.l.b16 %v2480
    %v2814 = vunpack.c.h.b16 %v2480
    %v2815 = vunpack.c.l.b16 %v2481
    %v2816 = vunpack.c.l.b16 %v2482
    %v2817 = vunpack.c.h.b16 %v2482
    %v2818 = vunpack.c.l.b16 %v2483
    %v2819 = vunpack.c.l.b16 %v2484
    %v2820 = vunpack.c.h.b16 %v2484
    %v2821 = vunpack.c.l.b16 %v2485
    %v2822 = vunpack.c.l.b16 %v2486
    %v2823 = vunpack.c.h.b16 %v2486
    %v2824 = vunpack.c.l.b16 %v2487
    %v2825 = vunpack.c.l.b16 %v2488
    %v2826 = vunpack.c.h.b16 %v2488
    %v2827 = vunpack.c.l.b16 %v2489
    %v2828 = vunpack.c.l.b16 %v2490
    %v2829 = vunpack.c.h.b16 %v2490
    %v2830 = vunpack.c.l.b16 %v2491
    %v2831 = vunpack.c.l.b16 %v2492
    %v2832 = vunpack.c.h.b16 %v2492
    %v2833 = vunpack.c.l.b16 %v2493
    %v2834 = vunpack.c.l.b16 %v2494
    %v2835 = vunpack.c.h.b16 %v2494
    %v2836 = vunpack.c.l.b16 %v2495
    %v2837 = vpack.c.b16 %v2648, %v2645
    %v2838 = vpack.c.b16 %v2649, %v2646
    %v2839 = vpack.c.b16 %v2650, %v2647
    %v2840 = vpack.c.b16 %v2654, %v2651
    %v2841 = vpack.c.b16 %v2655, %v2652
    %v2842 = vpack.c.b16 %v2656, %v2653
    %v2843 = vpack.c.b16 %v2660, %v2657
    %v2844 = vpack.c.b16 %v2661, %v2658
    %v2845 = vpack.c.b16 %v2662, %v2659
    %v2846 = vpack.c.b16 %v2666, %v2663
    %v2847 = vpack.c.b16 %v2667, %v2664
    %v2848 = vpack.c.b16 %v2668, %v2665
    %v2849 = vpack.c.b16 %v2672, %v2669
    %v2850 = vpack.c.b16 %v2673, %v2670
    %v2851 = vpack.c.b16 %v2674, %v2671
    %v2852 = vpack.c.b16 %v2678, %v2675
    %v2853 = vpack.c.b16 %v2679, %v2676
    %v2854 = vpack.c.b16 %v2680, %v2677
    %v2855 = vpack.c.b16 %v2684, %v2681
    %v2856 = vpack.c.b16 %v2685, %v2682
    %v2857 = vpack.c.b16 %v2686, %v2683
    %v2858 = vpack.c.b16 %v2690, %v2687
    %v2859 = vpack.c.b16 %v2691, %v2688
    %v2860 = vpack.c.b16 %v2692, %v2689
    %v2861 = vpack.c.b16 %v2696, %v2693
    %v2862 = vpack.c.b16 %v2697, %v2694
    %v2863 = vpack.c.b16 %v2698, %v2695
    %v2864 = vpack.c.b16 %v2702, %v2699
    %v2865 = vpack.c.b16 %v2703, %v2700
    %v2866 = vpack.c.b16 %v2704, %v2701
    %v2867 = vpack.c.b16 %v2708, %v2705
    %v2868 = vpack.c.b16 %v2709, %v2706
    %v2869 = vpack.c.b16 %v2710, %v2707
    %v2870 = vpack.c.b16 %v2714, %v2711
    %v2871 = vpack.c.b16 %v2715, %v2712
    %v2872 = vpack.c.b16 %v2716, %v2713
    %v2873 = vpack.c.b16 %v2720, %v2717
    %v2874 = vpack.c.b16 %v2721, %v2718
    %v2875 = vpack.c.b16 %v2722, %v2719
    %v2876 = vpack.c.b16 %v2726, %v2723
    %v2877 = vpack.c.b16 %v2727, %v2724
    %v2878 = vpack.c.b16 %v2728, %v2725
    %v2879 = vpack.c.b16 %v2732, %v2729
    %v2880 = vpack.c.b16 %v2733, %v2730
    %v2881 = vpack.c.b16 %v2734, %v2731
    %v2882 = vpack.c.b16 %v2738, %v2735
    %v2883 = vpack.c.b16 %v2739, %v2736
    %v2884 = vpack.c.b16 %v2740, %v2737
    %v2885 = vpack.c.b16 %v2744, %v2741
    %v2886 = vpack.c.b16 %v2745, %v2742
    %v2887 = vpack.c.b16 %v2746, %v2743
    %v2888 = vpack.c.b16 %v2750, %v2747
    %v2889 = vpack.c.b16 %v2751, %v2748
    %v2890 = vpack.c.b16 %v2752, %v2749
    %v2891 = vpack.c.b16 %v2756, %v2753
    %v2892 = vpack.c.b16 %v2757, %v2754
    %v2893 = vpack.c.b16 %v2758, %v2755
    %v2894 = vpack.c.b16 %v2762, %v2759
    %v2895 = vpack.c.b16 %v2763, %v2760
    %v2896 = vpack.c.b16 %v2764, %v2761
    %v2897 = vpack.c.b16 %v2768, %v2765
    %v2898 = vpack.c.b16 %v2769, %v2766
    %v2899 = vpack.c.b16 %v2770, %v2767
    %v2900 = vpack.c.b16 %v2774, %v2771
    %v2901 = vpack.c.b16 %v2775, %v2772
    %v2902 = vpack.c.b16 %v2776, %v2773
    %v2903 = vpack.c.b16 %v2780, %v2777
    %v2904 = vpack.c.b16 %v2781, %v2778
    %v2905 = vpack.c.b16 %v2782, %v2779
    %v2906 = vpack.c.b16 %v2786, %v2783
    %v2907 = vpack.c.b16 %v2787, %v2784
    %v2908 = vpack.c.b16 %v2788, %v2785
    %v2909 = vpack.c.b16 %v2792, %v2789
    %v2910 = vpack.c.b16 %v2793, %v2790
    %v2911 = vpack.c.b16 %v2794, %v2791
    %v2912 = vpack.c.b16 %v2798, %v2795
    %v2913 = vpack.c.b16 %v2799, %v2796
    %v2914 = vpack.c.b16 %v2800, %v2797
    %v2915 = vpack.c.b16 %v2804, %v2801
    %v2916 = vpack.c.b16 %v2805, %v2802
    %v2917 = vpack.c.b16 %v2806, %v2803
    %v2918 = vpack.c.b16 %v2810, %v2807
    %v2919 = vpack.c.b16 %v2811, %v2808
    %v2920 = vpack.c.b16 %v2812, %v2809
    %v2921 = vpack.c.b16 %v2816, %v2813
    %v2922 = vpack.c.b16 %v2817, %v2814
    %v2923 = vpack.c.b16 %v2818, %v2815
    %v2924 = vpack.c.b16 %v2822, %v2819
    %v2925 = vpack.c.b16 %v2823, %v2820
    %v2926 = vpack.c.b16 %v2824, %v2821
    %v2927 = vpack.c.b16 %v2828, %v2825
    %v2928 = vpack.c.b16 %v2829, %v2826
    %v2929 = vpack.c.b16 %v2830, %v2827
    %v2930 = vpack.c.b16 %v2834, %v2831
    %v2931 = vpack.c.b16 %v2835, %v2832
    %v2932 = vpack.c.b16 %v2836, %v2833
    %3029 = vmatprep.subr.bf16.mxu0 %v2859
    %3030 = vmatpush1.bf16.msra.mxu0 %v2858
    %3031 = vmatprep.subr.bf16.mxu0 %v2856
    %3032 = vmatpush1.bf16.msra.mxu0 %v2855
    %3033 = vmatprep.subr.bf16.mxu0 %v2853
    %3034 = vmatpush1.bf16.msra.mxu0 %v2852
    %3035 = vmatprep.subr.bf16.mxu0 %v2850
    %3036 = vmatpush1.bf16.msra.mxu0 %v2849
    %3037 = vmatprep.subr.bf16.mxu0 %v2847
    %3038 = vmatpush1.bf16.msra.mxu0 %v2846
    %3039 = vmatprep.subr.bf16.mxu0 %v2844
    %3040 = vmatpush1.bf16.msra.mxu0 %v2843
    %3041 = vmatprep.subr.bf16.mxu0 %v2841
    %3042 = vmatpush1.bf16.msra.mxu0 %v2840
    %3043 = vmatprep.subr.bf16.mxu0 %v2838
    %3044 = vmatpush1.bf16.msra.mxu0 %v2837
    %3045 = vmatprep.subr.bf16.mxu0 %v2883
    %3046 = vmatpush2.bf16.msra.mxu0 %v2882
    %3047 = vmatprep.subr.bf16.mxu0 %v2880
    %3048 = vmatpush2.bf16.msra.mxu0 %v2879
    %3049 = vmatprep.subr.bf16.mxu0 %v2877
    %3050 = vmatpush2.bf16.msra.mxu0 %v2876
    %3051 = vmatprep.subr.bf16.mxu0 %v2874
    %3052 = vmatpush2.bf16.msra.mxu0 %v2873
    %3053 = vmatprep.subr.bf16.mxu0 %v2871
    %3054 = vmatpush2.bf16.msra.mxu0 %v2870
    %3055 = vmatprep.subr.bf16.mxu0 %v2868
    %3056 = vmatpush2.bf16.msra.mxu0 %v2867
    %3057 = vmatprep.subr.bf16.mxu0 %v2865
    %3058 = vmatpush2.bf16.msra.mxu0 %v2864
    %3059 = vmatprep.subr.bf16.mxu0 %v2862
    %3060 = vmatpush2.bf16.msra.mxu0 %v2861
    %3061 = vmatprep.mubr.bf16.mxu0 %v2498
    %3062 = vmatmul.mubr.bf16.gmra.mxu0 %v2497
    %v3063 = vpop.f32.mrf.mxu0
    %v3064 = vadd.f32 %v2505, %v3063
    %v3065 = vpop.f32.mrf.mxu0
    %v3066 = vadd.f32 %v2509, %v3065
    %v3067 = vpop.f32.mrf.mxu0
    %v3068 = vpop.f32.mrf.mxu0
    %3069 = vdwg.mxu0
    %3070 = vmatprep.subr.bf16.mxu0 %v2907
    %3071 = vmatpush1.bf16.msra.mxu0 %v2906
    %3072 = vmatprep.subr.bf16.mxu0 %v2904
    %3073 = vmatpush1.bf16.msra.mxu0 %v2903
    %3074 = vmatprep.subr.bf16.mxu0 %v2901
    %3075 = vmatpush1.bf16.msra.mxu0 %v2900
    %3076 = vmatprep.subr.bf16.mxu0 %v2898
    %3077 = vmatpush1.bf16.msra.mxu0 %v2897
    %3078 = vmatprep.subr.bf16.mxu0 %v2895
    %3079 = vmatpush1.bf16.msra.mxu0 %v2894
    %3080 = vmatprep.subr.bf16.mxu0 %v2892
    %3081 = vmatpush1.bf16.msra.mxu0 %v2891
    %3082 = vmatprep.subr.bf16.mxu0 %v2889
    %3083 = vmatpush1.bf16.msra.mxu0 %v2888
    %3084 = vmatprep.subr.bf16.mxu0 %v2886
    %3085 = vmatpush1.bf16.msra.mxu0 %v2885
    %3086 = vmatprep.subr.bf16.mxu0 %v2931
    %3087 = vmatpush2.bf16.msra.mxu0 %v2930
    %3088 = vmatprep.subr.bf16.mxu0 %v2928
    %3089 = vmatpush2.bf16.msra.mxu0 %v2927
    %3090 = vmatprep.subr.bf16.mxu0 %v2925
    %3091 = vmatpush2.bf16.msra.mxu0 %v2924
    %3092 = vmatprep.subr.bf16.mxu0 %v2922
    %3093 = vmatpush2.bf16.msra.mxu0 %v2921
    %3094 = vmatprep.subr.bf16.mxu0 %v2919
    %3095 = vmatpush2.bf16.msra.mxu0 %v2918
    %3096 = vmatprep.subr.bf16.mxu0 %v2916
    %3097 = vmatpush2.bf16.msra.mxu0 %v2915
    %3098 = vmatprep.subr.bf16.mxu0 %v2913
    %3099 = vmatpush2.bf16.msra.mxu0 %v2912
    %3100 = vmatprep.subr.bf16.mxu0 %v2910
    %3101 = vmatpush2.bf16.msra.mxu0 %v2909
    %3102 = vmatprep.mubr.bf16.mxu0 %v2500
    %3103 = vmatmul.mubr.bf16.gmra.mxu0 %v2499
    %v3104 = vpop.f32.mrf.mxu0
    %v3105 = vadd.f32 %v3064, %v3104
    %v3106 = vpop.f32.mrf.mxu0
    %v3107 = vadd.f32 %v3066, %v3106
    %v3108 = vpop.f32.mrf.mxu0
    %v3109 = vpop.f32.mrf.mxu0
    %3110 = vdwg.mxu0
    %3111 = vmatprep.subr.bf16.mxu0 0
    %3112 = vmatpush1.bf16.msra.mxu0 %v2860
    %3113 = vmatprep.subr.bf16.mxu0 0
    %3114 = vmatpush1.bf16.msra.mxu0 %v2857
    %3115 = vmatprep.subr.bf16.mxu0 0
    %3116 = vmatpush1.bf16.msra.mxu0 %v2854
    %3117 = vmatprep.subr.bf16.mxu0 0
    %3118 = vmatpush1.bf16.msra.mxu0 %v2851
    %3119 = vmatprep.subr.bf16.mxu0 0
    %3120 = vmatpush1.bf16.msra.mxu0 %v2848
    %3121 = vmatprep.subr.bf16.mxu0 0
    %3122 = vmatpush1.bf16.msra.mxu0 %v2845
    %3123 = vmatprep.subr.bf16.mxu0 0
    %3124 = vmatpush1.bf16.msra.mxu0 %v2842
    %3125 = vmatprep.subr.bf16.mxu0 0
    %3126 = vmatpush1.bf16.msra.mxu0 %v2839
    %3127 = vmatprep.subr.bf16.mxu0 0
    %3128 = vmatpush2.bf16.msra.mxu0 %v2884
    %3129 = vmatprep.subr.bf16.mxu0 0
    %3130 = vmatpush2.bf16.msra.mxu0 %v2881
    %3131 = vmatprep.subr.bf16.mxu0 0
    %3132 = vmatpush2.bf16.msra.mxu0 %v2878
    %3133 = vmatprep.subr.bf16.mxu0 0
    %3134 = vmatpush2.bf16.msra.mxu0 %v2875
    %3135 = vmatprep.subr.bf16.mxu0 0
    %3136 = vmatpush2.bf16.msra.mxu0 %v2872
    %3137 = vmatprep.subr.bf16.mxu0 0
    %3138 = vmatpush2.bf16.msra.mxu0 %v2869
    %3139 = vmatprep.subr.bf16.mxu0 0
    %3140 = vmatpush2.bf16.msra.mxu0 %v2866
    %3141 = vmatprep.subr.bf16.mxu0 0
    %3142 = vmatpush2.bf16.msra.mxu0 %v2863
    %3143 = vmatprep.mubr.bf16.mxu0 %v2498
    %3144 = vmatmul.mubr.bf16.gmra.mxu0 %v2497
    %v3145 = vpop.f32.mrf.mxu0
    %v3146 = vadd.f32 %v2513, %v3145
    %v3147 = vpop.f32.mrf.mxu0
    %v3148 = vpop.f32.mrf.mxu0
    %v3149 = vpop.f32.mrf.mxu0
    %3150 = vdwg.mxu0
    %3151 = vmatprep.subr.bf16.mxu0 0
    %3152 = vmatpush1.bf16.msra.mxu0 %v2908
    %3153 = vmatprep.subr.bf16.mxu0 0
    %3154 = vmatpush1.bf16.msra.mxu0 %v2905
    %3155 = vmatprep.subr.bf16.mxu0 0
    %3156 = vmatpush1.bf16.msra.mxu0 %v2902
    %3157 = vmatprep.subr.bf16.mxu0 0
    %3158 = vmatpush1.bf16.msra.mxu0 %v2899
    %3159 = vmatprep.subr.bf16.mxu0 0
    %3160 = vmatpush1.bf16.msra.mxu0 %v2896
    %3161 = vmatprep.subr.bf16.mxu0 0
    %3162 = vmatpush1.bf16.msra.mxu0 %v2893
    %3163 = vmatprep.subr.bf16.mxu0 0
    %3164 = vmatpush1.bf16.msra.mxu0 %v2890
    %3165 = vmatprep.subr.bf16.mxu0 0
    %3166 = vmatpush1.bf16.msra.mxu0 %v2887
    %3167 = vmatprep.subr.bf16.mxu0 0
    %3168 = vmatpush2.bf16.msra.mxu0 %v2932
    %3169 = vmatprep.subr.bf16.mxu0 0
    %3170 = vmatpush2.bf16.msra.mxu0 %v2929
    %3171 = vmatprep.subr.bf16.mxu0 0
    %3172 = vmatpush2.bf16.msra.mxu0 %v2926
    %3173 = vmatprep.subr.bf16.mxu0 0
    %3174 = vmatpush2.bf16.msra.mxu0 %v2923
    %3175 = vmatprep.subr.bf16.mxu0 0
    %3176 = vmatpush2.bf16.msra.mxu0 %v2920
    %3177 = vmatprep.subr.bf16.mxu0 0
    %3178 = vmatpush2.bf16.msra.mxu0 %v2917
    %3179 = vmatprep.subr.bf16.mxu0 0
    %3180 = vmatpush2.bf16.msra.mxu0 %v2914
    %3181 = vmatprep.subr.bf16.mxu0 0
    %3182 = vmatpush2.bf16.msra.mxu0 %v2911
    %3183 = vmatprep.mubr.bf16.mxu0 %v2500
    %3184 = vmatmul.mubr.bf16.gmra.mxu0 %v2499
    %v3185 = vpop.f32.mrf.mxu0
    %v3186 = vadd.f32 %v3146, %v3185
    %v3187 = vpop.f32.mrf.mxu0
    %v3188 = vpop.f32.mrf.mxu0
    %v3189 = vpop.f32.mrf.mxu0
    %3190 = vdwg.mxu0
    %v3191 = vmax.f32 %v3105, 0.0
    %v3192 = vmax.f32 %v3107, 0.0
    %v3193 = vmax.f32 %v3186, 0.0
    %v3194 = vld [vmem:[#allocation10] sm:$0xff]
    %v3195 = vld [vmem:[#allocation10 + $0x8] sm:$0xff]
    %v3196 = vld [vmem:[#allocation10 + $0x10] sm:$0xff]
    %v3197 = vld [vmem:[#allocation10 + $0x18] sm:$0xff]
    %v3198 = vld [vmem:[#allocation10 + $0x20] sm:$0xff]
    %v3199 = vld [vmem:[#allocation10 + $0x28] sm:$0xff]
    %v3200 = vld [vmem:[#allocation10 + $0x30] sm:$0xff]
    %v3201 = vld [vmem:[#allocation10 + $0x38] sm:$0xff]
    %v3202 = vld [vmem:[#allocation10 + $0x40] sm:$0xff]
    %v3203 = vld [vmem:[#allocation10 + $0x48] sm:$0xff]
    %v3204 = vld [vmem:[#allocation10 + $0x50] sm:$0xff]
    %v3205 = vld [vmem:[#allocation10 + $0x58] sm:$0xff]
    %v3206 = vld [vmem:[#allocation10 + $0x60] sm:$0xff]
    %v3207 = vld [vmem:[#allocation10 + $0x68] sm:$0xff]
    %v3208 = vld [vmem:[#allocation10 + $0x70] sm:$0xff]
    %v3209 = vld [vmem:[#allocation10 + $0x78] sm:$0xff]
    %v3210 = vld [vmem:[#allocation10 + $0x80] sm:$0xff]
    %v3211 = vld [vmem:[#allocation10 + $0x88] sm:$0xff]
    %v3212 = vld [vmem:[#allocation10 + $0x90] sm:$0xff]
    %v3213 = vld [vmem:[#allocation10 + $0x98] sm:$0xff]
    %v3214 = vld [vmem:[#allocation10 + $0xa0] sm:$0xff]
    %v3215 = vld [vmem:[#allocation10 + $0xa8] sm:$0xff]
    %v3216 = vld [vmem:[#allocation10 + $0xb0] sm:$0xff]
    %v3217 = vld [vmem:[#allocation10 + $0xb8] sm:$0xff]
    %v3218 = vld [vmem:[#allocation10 + $0xc0] sm:$0xff]
    %v3219 = vld [vmem:[#allocation10 + $0xc8] sm:$0xff]
    %v3220 = vld [vmem:[#allocation10 + $0xd0] sm:$0xff]
    %v3221 = vld [vmem:[#allocation10 + $0xd8] sm:$0xff]
    %v3222 = vld [vmem:[#allocation10 + $0xe0] sm:$0xff]
    %v3223 = vld [vmem:[#allocation10 + $0xe8] sm:$0xff]
    %v3224 = vld [vmem:[#allocation10 + $0xf0] sm:$0xff]
    %v3225 = vld [vmem:[#allocation10 + $0xf8] sm:$0xff]
    %v3226 = vld [vmem:[#allocation10 + $0x100] sm:$0xff]
    %v3227 = vld [vmem:[#allocation10 + $0x108] sm:$0xff]
    %v3228 = vld [vmem:[#allocation10 + $0x110] sm:$0xff]
    %v3229 = vld [vmem:[#allocation10 + $0x118] sm:$0xff]
    %v3230 = vld [vmem:[#allocation10 + $0x120] sm:$0xff]
    %v3231 = vld [vmem:[#allocation10 + $0x128] sm:$0xff]
    %v3232 = vld [vmem:[#allocation10 + $0x130] sm:$0xff]
    %v3233 = vld [vmem:[#allocation10 + $0x138] sm:$0xff]
    %v3234 = vld [vmem:[#allocation10 + $0x140] sm:$0xff]
    %v3235 = vld [vmem:[#allocation10 + $0x148] sm:$0xff]
    %v3236 = vld [vmem:[#allocation10 + $0x150] sm:$0xff]
    %v3237 = vld [vmem:[#allocation10 + $0x158] sm:$0xff]
    %v3238 = vld [vmem:[#allocation10 + $0x160] sm:$0xff]
    %v3239 = vld [vmem:[#allocation10 + $0x168] sm:$0xff]
    %v3240 = vld [vmem:[#allocation10 + $0x170] sm:$0xff]
    %v3241 = vld [vmem:[#allocation10 + $0x178] sm:$0xff]
    %v3242 = vld [vmem:[%s12] sm:$0x3]
    %v3243 = vpack.c.bf16 %v3191, %v3191
    %v3244 = vpack.c.bf16 %v3192, %v3192
    %v3245 = vpack.c.bf16 %v3193, %v3193
    %v3247 = vlaneseq
    %v3248 = vshrl.u32 %v3247, 7
    %v3249 = vsub.s32 0, %v3248
    %v3250 = vrot.slane %v3242, %v3249
    %v3251 = vlaneseq
    %v3252 = vshrl.u32 %v3251, 7
    %v3253 = vsub.s32 1, %v3252
    %v3254 = vrot.slane %v3242, %v3253
    %v3305 = vunpack.c.l.b16 %v3194
    %v3306 = vunpack.c.h.b16 %v3194
    %v3307 = vunpack.c.l.b16 %v3195
    %v3308 = vunpack.c.h.b16 %v3195
    %v3309 = vunpack.c.l.b16 %v3196
    %v3310 = vunpack.c.h.b16 %v3196
    %v3311 = vunpack.c.l.b16 %v3197
    %v3312 = vunpack.c.h.b16 %v3197
    %v3313 = vunpack.c.l.b16 %v3198
    %v3314 = vunpack.c.h.b16 %v3198
    %v3315 = vunpack.c.l.b16 %v3199
    %v3316 = vunpack.c.h.b16 %v3199
    %v3317 = vunpack.c.l.b16 %v3200
    %v3318 = vunpack.c.h.b16 %v3200
    %v3319 = vunpack.c.l.b16 %v3201
    %v3320 = vunpack.c.h.b16 %v3201
    %v3321 = vunpack.c.l.b16 %v3202
    %v3322 = vunpack.c.h.b16 %v3202
    %v3323 = vunpack.c.l.b16 %v3203
    %v3324 = vunpack.c.h.b16 %v3203
    %v3325 = vunpack.c.l.b16 %v3204
    %v3326 = vunpack.c.h.b16 %v3204
    %v3327 = vunpack.c.l.b16 %v3205
    %v3328 = vunpack.c.h.b16 %v3205
    %v3329 = vunpack.c.l.b16 %v3206
    %v3330 = vunpack.c.h.b16 %v3206
    %v3331 = vunpack.c.l.b16 %v3207
    %v3332 = vunpack.c.h.b16 %v3207
    %v3333 = vunpack.c.l.b16 %v3208
    %v3334 = vunpack.c.h.b16 %v3208
    %v3335 = vunpack.c.l.b16 %v3209
    %v3336 = vunpack.c.h.b16 %v3209
    %v3337 = vunpack.c.l.b16 %v3210
    %v3338 = vunpack.c.h.b16 %v3210
    %v3339 = vunpack.c.l.b16 %v3211
    %v3340 = vunpack.c.h.b16 %v3211
    %v3341 = vunpack.c.l.b16 %v3212
    %v3342 = vunpack.c.h.b16 %v3212
    %v3343 = vunpack.c.l.b16 %v3213
    %v3344 = vunpack.c.h.b16 %v3213
    %v3345 = vunpack.c.l.b16 %v3214
    %v3346 = vunpack.c.h.b16 %v3214
    %v3347 = vunpack.c.l.b16 %v3215
    %v3348 = vunpack.c.h.b16 %v3215
    %v3349 = vunpack.c.l.b16 %v3216
    %v3350 = vunpack.c.h.b16 %v3216
    %v3351 = vunpack.c.l.b16 %v3217
    %v3352 = vunpack.c.h.b16 %v3217
    %v3353 = vunpack.c.l.b16 %v3218
    %v3354 = vunpack.c.h.b16 %v3218
    %v3355 = vunpack.c.l.b16 %v3219
    %v3356 = vunpack.c.h.b16 %v3219
    %v3357 = vunpack.c.l.b16 %v3220
    %v3358 = vunpack.c.h.b16 %v3220
    %v3359 = vunpack.c.l.b16 %v3221
    %v3360 = vunpack.c.h.b16 %v3221
    %v3361 = vunpack.c.l.b16 %v3222
    %v3362 = vunpack.c.h.b16 %v3222
    %v3363 = vunpack.c.l.b16 %v3223
    %v3364 = vunpack.c.h.b16 %v3223
    %v3365 = vunpack.c.l.b16 %v3224
    %v3366 = vunpack.c.h.b16 %v3224
    %v3367 = vunpack.c.l.b16 %v3225
    %v3368 = vunpack.c.h.b16 %v3225
    %v3369 = vunpack.c.l.b16 %v3226
    %v3370 = vunpack.c.h.b16 %v3226
    %v3371 = vunpack.c.l.b16 %v3227
    %v3372 = vunpack.c.h.b16 %v3227
    %v3373 = vunpack.c.l.b16 %v3228
    %v3374 = vunpack.c.h.b16 %v3228
    %v3375 = vunpack.c.l.b16 %v3229
    %v3376 = vunpack.c.h.b16 %v3229
    %v3377 = vunpack.c.l.b16 %v3230
    %v3378 = vunpack.c.h.b16 %v3230
    %v3379 = vunpack.c.l.b16 %v3231
    %v3380 = vunpack.c.h.b16 %v3231
    %v3381 = vunpack.c.l.b16 %v3232
    %v3382 = vunpack.c.h.b16 %v3232
    %v3383 = vunpack.c.l.b16 %v3233
    %v3384 = vunpack.c.h.b16 %v3233
    %v3385 = vunpack.c.l.b16 %v3234
    %v3386 = vunpack.c.h.b16 %v3234
    %v3387 = vunpack.c.l.b16 %v3235
    %v3388 = vunpack.c.h.b16 %v3235
    %v3389 = vunpack.c.l.b16 %v3236
    %v3390 = vunpack.c.h.b16 %v3236
    %v3391 = vunpack.c.l.b16 %v3237
    %v3392 = vunpack.c.h.b16 %v3237
    %v3393 = vunpack.c.l.b16 %v3238
    %v3394 = vunpack.c.h.b16 %v3238
    %v3395 = vunpack.c.l.b16 %v3239
    %v3396 = vunpack.c.h.b16 %v3239
    %v3397 = vunpack.c.l.b16 %v3240
    %v3398 = vunpack.c.h.b16 %v3240
    %v3399 = vunpack.c.l.b16 %v3241
    %v3400 = vunpack.c.h.b16 %v3241
    %v3401 = vpack.c.b16 %v3307, %v3305
    %v3402 = vpack.c.b16 %v3308, %v3306
    %v3403 = vpack.c.b16 %v3311, %v3309
    %v3404 = vpack.c.b16 %v3312, %v3310
    %v3405 = vpack.c.b16 %v3315, %v3313
    %v3406 = vpack.c.b16 %v3316, %v3314
    %v3407 = vpack.c.b16 %v3319, %v3317
    %v3408 = vpack.c.b16 %v3320, %v3318
    %v3409 = vpack.c.b16 %v3323, %v3321
    %v3410 = vpack.c.b16 %v3324, %v3322
    %v3411 = vpack.c.b16 %v3327, %v3325
    %v3412 = vpack.c.b16 %v3328, %v3326
    %v3413 = vpack.c.b16 %v3331, %v3329
    %v3414 = vpack.c.b16 %v3332, %v3330
    %v3415 = vpack.c.b16 %v3335, %v3333
    %v3416 = vpack.c.b16 %v3336, %v3334
    %v3417 = vpack.c.b16 %v3339, %v3337
    %v3418 = vpack.c.b16 %v3340, %v3338
    %v3419 = vpack.c.b16 %v3343, %v3341
    %v3420 = vpack.c.b16 %v3344, %v3342
    %v3421 = vpack.c.b16 %v3347, %v3345
    %v3422 = vpack.c.b16 %v3348, %v3346
    %v3423 = vpack.c.b16 %v3351, %v3349
    %v3424 = vpack.c.b16 %v3352, %v3350
    %v3425 = vpack.c.b16 %v3355, %v3353
    %v3426 = vpack.c.b16 %v3356, %v3354
    %v3427 = vpack.c.b16 %v3359, %v3357
    %v3428 = vpack.c.b16 %v3360, %v3358
    %v3429 = vpack.c.b16 %v3363, %v3361
    %v3430 = vpack.c.b16 %v3364, %v3362
    %v3431 = vpack.c.b16 %v3367, %v3365
    %v3432 = vpack.c.b16 %v3368, %v3366
    %v3433 = vpack.c.b16 %v3371, %v3369
    %v3434 = vpack.c.b16 %v3372, %v3370
    %v3435 = vpack.c.b16 %v3375, %v3373
    %v3436 = vpack.c.b16 %v3376, %v3374
    %v3437 = vpack.c.b16 %v3379, %v3377
    %v3438 = vpack.c.b16 %v3380, %v3378
    %v3439 = vpack.c.b16 %v3383, %v3381
    %v3440 = vpack.c.b16 %v3384, %v3382
    %v3441 = vpack.c.b16 %v3387, %v3385
    %v3442 = vpack.c.b16 %v3388, %v3386
    %v3443 = vpack.c.b16 %v3391, %v3389
    %v3444 = vpack.c.b16 %v3392, %v3390
    %v3445 = vpack.c.b16 %v3395, %v3393
    %v3446 = vpack.c.b16 %v3396, %v3394
    %v3447 = vpack.c.b16 %v3399, %v3397
    %v3448 = vpack.c.b16 %v3400, %v3398
    %3497 = vmatprep.subr.bf16.mxu0 %v3416
    %3498 = vmatpush1.bf16.msra.mxu0 %v3415
    %3499 = vmatprep.subr.bf16.mxu0 %v3414
    %3500 = vmatpush1.bf16.msra.mxu0 %v3413
    %3501 = vmatprep.subr.bf16.mxu0 %v3412
    %3502 = vmatpush1.bf16.msra.mxu0 %v3411
    %3503 = vmatprep.subr.bf16.mxu0 %v3410
    %3504 = vmatpush1.bf16.msra.mxu0 %v3409
    %3505 = vmatprep.subr.bf16.mxu0 %v3408
    %3506 = vmatpush1.bf16.msra.mxu0 %v3407
    %3507 = vmatprep.subr.bf16.mxu0 %v3406
    %3508 = vmatpush1.bf16.msra.mxu0 %v3405
    %3509 = vmatprep.subr.bf16.mxu0 %v3404
    %3510 = vmatpush1.bf16.msra.mxu0 %v3403
    %3511 = vmatprep.subr.bf16.mxu0 %v3402
    %3512 = vmatpush1.bf16.msra.mxu0 %v3401
    %3513 = vmatprep.subr.bf16.mxu0 %v3432
    %3514 = vmatpush2.bf16.msra.mxu0 %v3431
    %3515 = vmatprep.subr.bf16.mxu0 %v3430
    %3516 = vmatpush2.bf16.msra.mxu0 %v3429
    %3517 = vmatprep.subr.bf16.mxu0 %v3428
    %3518 = vmatpush2.bf16.msra.mxu0 %v3427
    %3519 = vmatprep.subr.bf16.mxu0 %v3426
    %3520 = vmatpush2.bf16.msra.mxu0 %v3425
    %3521 = vmatprep.subr.bf16.mxu0 %v3424
    %3522 = vmatpush2.bf16.msra.mxu0 %v3423
    %3523 = vmatprep.subr.bf16.mxu0 %v3422
    %3524 = vmatpush2.bf16.msra.mxu0 %v3421
    %3525 = vmatprep.subr.bf16.mxu0 %v3420
    %3526 = vmatpush2.bf16.msra.mxu0 %v3419
    %3527 = vmatprep.subr.bf16.mxu0 %v3418
    %3528 = vmatpush2.bf16.msra.mxu0 %v3417
    %3529 = vmatprep.mubr.bf16.mxu0 %v3244
    %3530 = vmatmul.mubr.bf16.gmra.mxu0 %v3243
    %v3531 = vpop.f32.mrf.mxu0
    %v3532 = vadd.f32 %v3250, %v3531
    %v3533 = vpop.f32.mrf.mxu0
    %v3534 = vadd.f32 %v3254, %v3533
    %v3535 = vpop.f32.mrf.mxu0
    %v3536 = vpop.f32.mrf.mxu0
    %3537 = vdwg.mxu0
    %3538 = vmatprep.subr.bf16.mxu0 %v3448
    %3539 = vmatpush1.bf16.msra.mxu0 %v3447
    %3540 = vmatprep.subr.bf16.mxu0 %v3446
    %3541 = vmatpush1.bf16.msra.mxu0 %v3445
    %3542 = vmatprep.subr.bf16.mxu0 %v3444
    %3543 = vmatpush1.bf16.msra.mxu0 %v3443
    %3544 = vmatprep.subr.bf16.mxu0 %v3442
    %3545 = vmatpush1.bf16.msra.mxu0 %v3441
    %3546 = vmatprep.subr.bf16.mxu0 %v3440
    %3547 = vmatpush1.bf16.msra.mxu0 %v3439
    %3548 = vmatprep.subr.bf16.mxu0 %v3438
    %3549 = vmatpush1.bf16.msra.mxu0 %v3437
    %3550 = vmatprep.subr.bf16.mxu0 %v3436
    %3551 = vmatpush1.bf16.msra.mxu0 %v3435
    %3552 = vmatprep.subr.bf16.mxu0 %v3434
    %3553 = vmatpush1.bf16.msra.mxu0 %v3433
    %3554 = vmatprep.subr.bf16.mxu0 0
    %3555 = vmatpush2.bf16.msra.mxu0 0
    %3556 = vmatprep.subr.bf16.mxu0 0
    %3557 = vmatpush2.bf16.msra.mxu0 0
    %3558 = vmatprep.subr.bf16.mxu0 0
    %3559 = vmatpush2.bf16.msra.mxu0 0
    %3560 = vmatprep.subr.bf16.mxu0 0
    %3561 = vmatpush2.bf16.msra.mxu0 0
    %3562 = vmatprep.subr.bf16.mxu0 0
    %3563 = vmatpush2.bf16.msra.mxu0 0
    %3564 = vmatprep.subr.bf16.mxu0 0
    %3565 = vmatpush2.bf16.msra.mxu0 0
    %3566 = vmatprep.subr.bf16.mxu0 0
    %3567 = vmatpush2.bf16.msra.mxu0 0
    %3568 = vmatprep.subr.bf16.mxu0 0
    %3569 = vmatpush2.bf16.msra.mxu0 0
    %3570 = vmatprep.mubr.bf16.mxu0 0
    %3571 = vmatmul.mubr.bf16.gmra.mxu0 %v3245
    %v3572 = vpop.f32.mrf.mxu0
    %v3573 = vadd.f32 %v3532, %v3572
    %v3574 = vpop.f32.mrf.mxu0
    %v3575 = vadd.f32 %v3534, %v3574
    %v3576 = vpop.f32.mrf.mxu0
    %v3577 = vpop.f32.mrf.mxu0
    %3578 = vdwg.mxu0
    %v3579 = vmax.f32 %v3573, 0.0
    %v3580 = vmax.f32 %v3575, 0.0
    %v3581 = vld [vmem:[#allocation12] sm:$0xf]
    %v3582 = vld [vmem:[#allocation12 + $0x4] sm:$0xf]
    %v3583 = vld [vmem:[#allocation12 + $0x8] sm:$0xf]
    %v3584 = vld [vmem:[#allocation12 + $0xc] sm:$0xf]
    %v3585 = vld [vmem:[#allocation12 + $0x10] sm:$0xf]
    %v3586 = vld [vmem:[#allocation12 + $0x14] sm:$0xf]
    %v3587 = vld [vmem:[#allocation12 + $0x18] sm:$0xf]
    %v3588 = vld [vmem:[#allocation12 + $0x1c] sm:$0xf]
    %v3589 = vld [vmem:[#allocation12 + $0x20] sm:$0xf]
    %v3590 = vld [vmem:[#allocation12 + $0x24] sm:$0xf]
    %v3591 = vld [vmem:[#allocation12 + $0x28] sm:$0xf]
    %v3592 = vld [vmem:[#allocation12 + $0x2c] sm:$0xf]
    %v3593 = vld [vmem:[#allocation12 + $0x30] sm:$0xf]
    %v3594 = vld [vmem:[#allocation12 + $0x34] sm:$0xf]
    %v3595 = vld [vmem:[#allocation12 + $0x38] sm:$0xf]
    %v3596 = vld [vmem:[#allocation12 + $0x3c] sm:$0xf]
    %v3597 = vld [vmem:[#allocation12 + $0x40] sm:$0xf]
    %v3598 = vld [vmem:[#allocation12 + $0x44] sm:$0xf]
    %v3599 = vld [vmem:[#allocation12 + $0x48] sm:$0xf]
    %v3600 = vld [vmem:[#allocation12 + $0x4c] sm:$0xf]
    %v3601 = vld [vmem:[#allocation12 + $0x50] sm:$0xf]
    %v3602 = vld [vmem:[#allocation12 + $0x54] sm:$0xf]
    %v3603 = vld [vmem:[#allocation12 + $0x58] sm:$0xf]
    %v3604 = vld [vmem:[#allocation12 + $0x5c] sm:$0xf]
    %v3605 = vld [vmem:[#allocation12 + $0x60] sm:$0xf]
    %v3606 = vld [vmem:[#allocation12 + $0x64] sm:$0xf]
    %v3607 = vld [vmem:[#allocation12 + $0x68] sm:$0xf]
    %v3608 = vld [vmem:[#allocation12 + $0x6c] sm:$0xf]
    %v3609 = vld [vmem:[#allocation12 + $0x70] sm:$0xf]
    %v3610 = vld [vmem:[#allocation12 + $0x74] sm:$0xf]
    %v3611 = vld [vmem:[#allocation12 + $0x78] sm:$0xf]
    %v3612 = vld [vmem:[#allocation12 + $0x7c] sm:$0xf]
    %v3613 = vld [vmem:[%s14] sm:$0x1]
    %v3614 = vpack.c.bf16 %v3579, %v3579
    %v3615 = vpack.c.bf16 %v3580, %v3580
    %v3617 = vlaneseq
    %v3618 = vshrl.u32 %v3617, 7
    %v3619 = vsub.s32 0, %v3618
    %v3620 = vrot.slane %v3613, %v3619
    %v3654 = vunpack.c.l.b16 %v3581
    %v3655 = vunpack.c.l.b16 %v3582
    %v3656 = vunpack.c.l.b16 %v3583
    %v3657 = vunpack.c.l.b16 %v3584
    %v3658 = vunpack.c.l.b16 %v3585
    %v3659 = vunpack.c.l.b16 %v3586
    %v3660 = vunpack.c.l.b16 %v3587
    %v3661 = vunpack.c.l.b16 %v3588
    %v3662 = vunpack.c.l.b16 %v3589
    %v3663 = vunpack.c.l.b16 %v3590
    %v3664 = vunpack.c.l.b16 %v3591
    %v3665 = vunpack.c.l.b16 %v3592
    %v3666 = vunpack.c.l.b16 %v3593
    %v3667 = vunpack.c.l.b16 %v3594
    %v3668 = vunpack.c.l.b16 %v3595
    %v3669 = vunpack.c.l.b16 %v3596
    %v3670 = vunpack.c.l.b16 %v3597
    %v3671 = vunpack.c.l.b16 %v3598
    %v3672 = vunpack.c.l.b16 %v3599
    %v3673 = vunpack.c.l.b16 %v3600
    %v3674 = vunpack.c.l.b16 %v3601
    %v3675 = vunpack.c.l.b16 %v3602
    %v3676 = vunpack.c.l.b16 %v3603
    %v3677 = vunpack.c.l.b16 %v3604
    %v3678 = vunpack.c.l.b16 %v3605
    %v3679 = vunpack.c.l.b16 %v3606
    %v3680 = vunpack.c.l.b16 %v3607
    %v3681 = vunpack.c.l.b16 %v3608
    %v3682 = vunpack.c.l.b16 %v3609
    %v3683 = vunpack.c.l.b16 %v3610
    %v3684 = vunpack.c.l.b16 %v3611
    %v3685 = vunpack.c.l.b16 %v3612
    %v3686 = vpack.c.b16 %v3655, %v3654
    %v3687 = vpack.c.b16 %v3657, %v3656
    %v3688 = vpack.c.b16 %v3659, %v3658
    %v3689 = vpack.c.b16 %v3661, %v3660
    %v3690 = vpack.c.b16 %v3663, %v3662
    %v3691 = vpack.c.b16 %v3665, %v3664
    %v3692 = vpack.c.b16 %v3667, %v3666
    %v3693 = vpack.c.b16 %v3669, %v3668
    %v3694 = vpack.c.b16 %v3671, %v3670
    %v3695 = vpack.c.b16 %v3673, %v3672
    %v3696 = vpack.c.b16 %v3675, %v3674
    %v3697 = vpack.c.b16 %v3677, %v3676
    %v3698 = vpack.c.b16 %v3679, %v3678
    %v3699 = vpack.c.b16 %v3681, %v3680
    %v3700 = vpack.c.b16 %v3683, %v3682
    %v3701 = vpack.c.b16 %v3685, %v3684
    %3718 = vmatprep.subr.bf16.mxu0 0
    %3719 = vmatpush1.bf16.msra.mxu0 %v3693
    %3720 = vmatprep.subr.bf16.mxu0 0
    %3721 = vmatpush1.bf16.msra.mxu0 %v3692
    %3722 = vmatprep.subr.bf16.mxu0 0
    %3723 = vmatpush1.bf16.msra.mxu0 %v3691
    %3724 = vmatprep.subr.bf16.mxu0 0
    %3725 = vmatpush1.bf16.msra.mxu0 %v3690
    %3726 = vmatprep.subr.bf16.mxu0 0
    %3727 = vmatpush1.bf16.msra.mxu0 %v3689
    %3728 = vmatprep.subr.bf16.mxu0 0
    %3729 = vmatpush1.bf16.msra.mxu0 %v3688
    %3730 = vmatprep.subr.bf16.mxu0 0
    %3731 = vmatpush1.bf16.msra.mxu0 %v3687
    %3732 = vmatprep.subr.bf16.mxu0 0
    %3733 = vmatpush1.bf16.msra.mxu0 %v3686
    %3734 = vmatprep.subr.bf16.mxu0 0
    %3735 = vmatpush2.bf16.msra.mxu0 %v3701
    %3736 = vmatprep.subr.bf16.mxu0 0
    %3737 = vmatpush2.bf16.msra.mxu0 %v3700
    %3738 = vmatprep.subr.bf16.mxu0 0
    %3739 = vmatpush2.bf16.msra.mxu0 %v3699
    %3740 = vmatprep.subr.bf16.mxu0 0
    %3741 = vmatpush2.bf16.msra.mxu0 %v3698
    %3742 = vmatprep.subr.bf16.mxu0 0
    %3743 = vmatpush2.bf16.msra.mxu0 %v3697
    %3744 = vmatprep.subr.bf16.mxu0 0
    %3745 = vmatpush2.bf16.msra.mxu0 %v3696
    %3746 = vmatprep.subr.bf16.mxu0 0
    %3747 = vmatpush2.bf16.msra.mxu0 %v3695
    %3748 = vmatprep.subr.bf16.mxu0 0
    %3749 = vmatpush2.bf16.msra.mxu0 %v3694
    %3750 = vmatprep.mubr.bf16.mxu0 %v3615
    %3751 = vmatmul.mubr.bf16.gmra.mxu0 %v3614
    %v3752 = vpop.f32.mrf.mxu0
    %v3753 = vadd.f32 %v3620, %v3752
    %v3754 = vpop.f32.mrf.mxu0
    %v3755 = vpop.f32.mrf.mxu0
    %v3756 = vpop.f32.mrf.mxu0
    %3757 = vdwg.mxu0
    %3758 = vst [vmem:[%s15] sm:$0xff] %v3753
    // Predicated region
    $region90: #{_forward_padded.1} parent=1 // pred_check
      _
    $region91: #{_forward_padded.1} parent=1 // pred_check_branch
      %3760 = sbr.rel (0) target = $region93
    $region92: #{_forward_padded.1} parent=1 // pred_region
      _
    $region93: #{_forward_padded.1} parent=1 // pred_fallthru
      _
    // Predicated region
    $region94: #{_forward_padded.1} parent=1 // pred_check
      _
    $region95: #{_forward_padded.1} parent=1 // pred_check_branch
      %3762 = sbr.rel (0) target = $region97
    $region96: #{_forward_padded.1} parent=1 // pred_region
      _
    $region97: #{_forward_padded.1} parent=1 // pred_fallthru
      _
    %3763 = vsyncpa [#allocation3], 1
    %3764 = vsyncpa [#allocation5], 1
    %3765 = vsyncpa [#allocation8], 1
    %3766 = vsyncpa [#allocation11], 1

</llo_original>
